<compile_context>
chip_gen: v7x
topology: tpu7x:2x2x1
jax: 0.10.0
libtpu: 0.0.40
codegen_flags: <defaults>
</compile_context>

<pallas_src>
import functools

import numpy as np
import jax
import jax.numpy as jnp
from jax import lax
from jax.experimental import pallas as pl
from jax.experimental.pallas import tpu as pltpu


def bilstm_attention_kernel(
    x_ref,        # (S, Bt, E)   embedded input, time-major, compute dtype
    mask_ref,     # (S, Bt)      attention mask (strictly 0/1 floats), f32
    tw_ref,       # (S, Bt)      token weights, f32
    wih_f_ref,    # (E, 4Hp)     forward  W_ih^T (gate-padded), compute dtype
    wih_b_ref,    # (E, 4Hp)     backward W_ih^T (gate-padded), compute dtype
    whh_ref,      # (2Hp, 8Hp) block-diag  OR  (2, Hp, 4Hp) stacked, compute dtype
    b_f_ref,      # (1, 4Hp)     forward  bias, f32
    b_b_ref,      # (1, 4Hp)     backward bias, f32
    attn_wf_ref,  # (1, Hp)      attention weight, forward half, f32
    attn_wb_ref,  # (1, Hp)      attention weight, backward half, f32
    attn_b_ref,   # (1, 1)       attention bias, f32
    fc_w_ref,     # (2Hp, Cp)    fc weight [fwd; bwd], lane-padded, f32
    fc_b_ref,     # (1, Cp)      fc bias, lane-padded, f32
    out_ref,      # (Bt, Cp)     logits, f32
    proj_f_ref,   # scratch (S, Bt, 4Hp)  x@W_ih + b, forward, compute dtype
    proj_b_ref,   # scratch (S, Bt, 4Hp)  x@W_ih + b, backward, compute dtype
    hs_f_ref,     # scratch (S, Bt, Hp)   forward hidden states, compute dtype
    hs_b_ref,     # scratch (S, Bt, Hp)   backward hidden states, compute dtype
    *,
    use_blockdiag,
    s_chunk,
    unroll,
):
    S, Bt, E = x_ref.shape
    Hp = hs_f_ref.shape[-1]
    G = 4 * Hp
    cdt = x_ref.dtype
    f32 = jnp.float32
    TS = min(S, s_chunk)

    # ---- hoisted input->hidden projections, chunked over S ------------------
    # Two dots per chunk written straight into the per-direction scratches
    # (no (S*Bt, 8Hp) transient).  Row scaling by token_weights commutes with
    # the right-matmul, so semantics match PyTorch.
    wih_f = wih_f_ref[...]
    wih_b = wih_b_ref[...]
    b_f = b_f_ref[...]
    b_b = b_b_ref[...]
    for c0 in range(0, S, TS):
        c1 = min(S, c0 + TS)
        tc = c1 - c0
        xs = x_ref[c0:c1] * tw_ref[c0:c1].astype(cdt)[:, :, None]      # (tc,Bt,E)
        xs2d = xs.reshape(tc * Bt, E)
        proj_f_ref[c0:c1] = (
            jnp.dot(xs2d, wih_f, preferred_element_type=f32) + b_f
        ).reshape(tc, Bt, G).astype(proj_f_ref.dtype)
        proj_b_ref[c0:c1] = (
            jnp.dot(xs2d, wih_b, preferred_element_type=f32) + b_b
        ).reshape(tc, Bt, G).astype(proj_b_ref.dtype)

    # ---- fused forward + backward recurrence ---------------------------------
    def _cell(gates, c):
        # Gate nonlinearities run in the compute dtype (bf16 EUP on v6e/v7x
        # when compute_dtype=bf16); the cell state stays f32.
        g = gates.astype(cdt)
        i = jax.nn.sigmoid(g[:, 0 * Hp:1 * Hp])
        f = jax.nn.sigmoid(g[:, 1 * Hp:2 * Hp])
        gg = jnp.tanh(g[:, 2 * Hp:3 * Hp])
        o = jax.nn.sigmoid(g[:, 3 * Hp:4 * Hp])
        c_new = f.astype(f32) * c + (i * gg).astype(f32)
        h_new = o * jnp.tanh(c_new.astype(cdt))       # h stays in compute dtype
        return h_new, c_new

    if use_blockdiag:
        whh = whh_ref[...]                            # (2Hp, 8Hp)
    else:
        whh_f = whh_ref[0]                            # (Hp, 4Hp)
        whh_b = whh_ref[1]

    def step(s, carry):
        h_f, c_f, h_b, c_b = carry
        sb = S - 1 - s
        if use_blockdiag:
            # One K=2Hp matmul per step: the fwd cell (time s) and bwd cell
            # (time S-1-s) are independent, so they share a single MXU issue.
            h_cat = jnp.concatenate([h_f, h_b], axis=-1)   # free: 128-aligned
            g_all = jnp.dot(h_cat, whh, preferred_element_type=f32)
            gate_f, gate_b = g_all[:, :G], g_all[:, G:]
        else:
            gate_f = jnp.dot(h_f, whh_f, preferred_element_type=f32)
            gate_b = jnp.dot(h_b, whh_b, preferred_element_type=f32)
        h_f, c_f = _cell(gate_f + proj_f_ref[s], c_f)
        h_b, c_b = _cell(gate_b + proj_b_ref[sb], c_b)
        hs_f_ref[s] = h_f
        hs_b_ref[sb] = h_b
        return h_f, c_f, h_b, c_b

    zeros_h = jnp.zeros((Bt, Hp), cdt)
    zeros_c = jnp.zeros((Bt, Hp), f32)
    lax.fori_loop(0, S, step, (zeros_h, zeros_c, zeros_h, zeros_c),
                  unroll=min(S, unroll))

    # ---- attention scores (chunked; no full (S,Bt,Hp) broadcast temps) ------
    # Linear(2H, 1) == <fwd half> + <bwd half> + bias (concat never built).
    attn_wf = attn_wf_ref[...]
    attn_wb = attn_wb_ref[...]
    sc_chunks = []
    for c0 in range(0, S, TS):
        c1 = min(S, c0 + TS)
        sc = (jnp.sum(hs_f_ref[c0:c1] * attn_wf[None, :, :], axis=-1)
              + jnp.sum(hs_b_ref[c0:c1] * attn_wb[None, :, :], axis=-1))
        sc_chunks.append(sc)
    scores = sc_chunks[0] if len(sc_chunks) == 1 else jnp.concatenate(sc_chunks, 0)
    scores = scores + attn_b_ref[...]                                   # (S, Bt)

    # masked_fill(mask == 0, -1e9) THEN * token_weights (PyTorch order).
    # Exact 0.0 compare assumes a strictly-{0,1} mask (as in the spec).
    scores = jnp.where(mask_ref[...] == 0.0, -1000000000.0, scores)
    scores = scores * tw_ref[...]

    # softmax over the sequence axis (axis 0 in time-major layout)
    m = jnp.max(scores, axis=0, keepdims=True)
    e = jnp.exp(scores - m)
    attn = e / jnp.sum(e, axis=0, keepdims=True)                        # (S, Bt)

    # ---- context: chunked streaming reduction over the hs scratches ---------
    ctx_f = jnp.zeros((Bt, Hp), f32)
    ctx_b = jnp.zeros((Bt, Hp), f32)
    for c0 in range(0, S, TS):
        c1 = min(S, c0 + TS)
        a = attn[c0:c1][:, :, None]                                     # (tc,Bt,1)
        ctx_f = ctx_f + jnp.sum(hs_f_ref[c0:c1] * a, axis=0)
        ctx_b = ctx_b + jnp.sum(hs_b_ref[c0:c1] * a, axis=0)

    # dropout(0.5): identity (eval mode); final FC as ONE K=2Hp matmul.
    ctx = jnp.concatenate([ctx_f, ctx_b], axis=-1)                      # (Bt, 2Hp)
    out_ref[...] = (
        jnp.dot(ctx, fc_w_ref[...], preferred_element_type=f32) + fc_b_ref[...]
    )


def _pad_gate_cols(w, H, Hp):
    """Zero-pad each of the 4 gate blocks along the last axis from H to Hp."""
    if Hp == H:
        return w
    pad = [(0, 0)] * (w.ndim - 1) + [(0, Hp - H)]
    return jnp.concatenate(
        [jnp.pad(w[..., k * H:(k + 1) * H], pad) for k in range(4)], axis=-1)


def bilstm_attention_forward(emb_table, input_ids, attention_mask,
                             token_weights, params, *,
                             compute_dtype=jnp.float32, b_tile=None):
    f32 = jnp.float32
    B, S = input_ids.shape
    E = emb_table.shape[1]
    H = params["whh_f"].shape[0]
    C = params["fc_w"].shape[1]
    Hp = ((H + 127) // 128) * 128      # lane-aligned hidden (free gate slices)
    Cp = ((C + 127) // 128) * 128      # lane-dense output store
    cdt = np.dtype(compute_dtype)

    # ---- one-time weight folding / padding / casting (tiny, XLA-side) -------
    wih_f = _pad_gate_cols(params["wih_f"].astype(f32), H, Hp).astype(cdt)
    wih_b = _pad_gate_cols(params["wih_b"].astype(f32), H, Hp).astype(cdt)
    b_f = _pad_gate_cols(params["b_f"].astype(f32), H, Hp)
    b_b = _pad_gate_cols(params["b_b"].astype(f32), H, Hp)
    whh_f = jnp.pad(_pad_gate_cols(params["whh_f"].astype(f32), H, Hp),
                    ((0, Hp - H), (0, 0)))
    whh_b = jnp.pad(_pad_gate_cols(params["whh_b"].astype(f32), H, Hp),
                    ((0, Hp - H), (0, 0)))
    # For Hp == 128: pack both directions block-diagonally so each recurrence
    # step is one K=2Hp matmul (fills the 256-deep MXU on v6e/v7x).  For
    # Hp >= 256 the zero blocks would double MXU work, so keep them separate.
    use_blockdiag = (Hp == 128)
    if use_blockdiag:
        whh = jnp.zeros((2 * Hp, 8 * Hp), f32)
        whh = whh.at[:Hp, :4 * Hp].set(whh_f).at[Hp:, 4 * Hp:].set(whh_b)
    else:
        whh = jnp.stack([whh_f, whh_b], axis=0)
    whh = whh.astype(cdt)

    attn_wf = jnp.pad(params["attn_w"][:, :H].astype(f32), ((0, 0), (0, Hp - H)))
    attn_wb = jnp.pad(params["attn_w"][:, H:].astype(f32), ((0, 0), (0, Hp - H)))
    attn_b = params["attn_b"].astype(f32)
    fc_w = jnp.concatenate(
        [jnp.pad(params["fc_w"][:H].astype(f32), ((0, Hp - H), (0, Cp - C))),
         jnp.pad(params["fc_w"][H:].astype(f32), ((0, Hp - H), (0, Cp - C)))],
        axis=0)                                                          # (2Hp, Cp)
    fc_b = jnp.pad(params["fc_b"].astype(f32), ((0, 0), (0, Cp - C)))

    # Embedding gathered directly into time-major layout and pre-cast to the
    # compute dtype (halves the dominant HBM->VMEM DMA on the bf16 path).
    xt = emb_table[input_ids.T].astype(cdt)                              # (S,B,E)
    mt = attention_mask.astype(f32).T                                    # (S,B)
    twt = token_weights.astype(f32).T                                    # (S,B)

    # ---- VMEM-budget-driven batch tile + vmem limit --------------------------
    try:
        vmem_cap = int(pltpu.get_tpu_info().vmem_capacity_bytes)
    except Exception:
        vmem_cap = 64 * 1024 * 1024          # conservative default (v7x)
    vmem_limit = int(vmem_cap * 0.85)        # ~54 MiB on v7x, ~109 MiB v5e/v6e

    itm = cdt.itemsize
    weight_bytes = int((wih_f.size + wih_b.size + whh.size) * itm
                       + (b_f.size + b_b.size + attn_wf.size + attn_wb.size
                          + attn_b.size + fc_w.size + fc_b.size) * 4)
    # per batch-element VMEM in one tile: proj(8Hp)+hs(2Hp) scratch,
    # double-buffered x, small mask/tw/out buffers.
    per_b = int(S * 10 * Hp * itm + 2 * S * E * itm + 4 * S * 4 + 2 * Cp * 4)

    if b_tile is None:
        budget = max(1, int((vmem_limit - weight_bytes) * 0.75))
        bt_fit = max(1, budget // per_b)
        if bt_fit >= B:
            if B >= 256:
                # Split into >=2 tiles (each >=128: BlockSpec lane constraint on
                # the (S, b_tile) mask/tw blocks) so dimension_semantics=
                # ("parallel",) can shard tiles across both TensorCores.
                b_tile = min(B, max(128, (((B + 1) // 2 + 127) // 128) * 128))
            else:
                b_tile = B
        else:
            b_tile = min(B, max(128, (bt_fit // 128) * 128))
    if b_tile >= B:
        b_tile = B
    elif b_tile % 128 != 0:
        b_tile = min(B, ((b_tile + 127) // 128) * 128)

    pad_b = (-B) % b_tile
    if pad_b:
        xt = jnp.pad(xt, ((0, 0), (0, pad_b), (0, 0)))
        mt = jnp.pad(mt, ((0, 0), (0, pad_b)), constant_values=1.0)
        twt = jnp.pad(twt, ((0, 0), (0, pad_b)), constant_values=1.0)
    Bp = B + pad_b
    grid = (Bp // b_tile,)

    def full(a):  # whole-array block, fetched once (constant index map)
        n = a.ndim
        return pl.BlockSpec(a.shape, lambda b, _n=n: (0,) * _n)

    in_specs = [
        pl.BlockSpec((S, b_tile, E), lambda b: (0, b, 0)),
        pl.BlockSpec((S, b_tile), lambda b: (0, b)),
        pl.BlockSpec((S, b_tile), lambda b: (0, b)),
        full(wih_f), full(wih_b), full(whh), full(b_f), full(b_b),
        full(attn_wf), full(attn_wb), full(attn_b), full(fc_w), full(fc_b),
    ]

    kernel = functools.partial(
        bilstm_attention_kernel,
        use_blockdiag=use_blockdiag, s_chunk=16, unroll=8)

    out = pl.pallas_call(
        kernel,
        out_shape=jax.ShapeDtypeStruct((Bp, Cp), jnp.float32),
        grid=grid,
        in_specs=in_specs,
        out_specs=pl.BlockSpec((b_tile, Cp), lambda b: (b, 0)),
        scratch_shapes=[
            pltpu.VMEM((S, b_tile, 4 * Hp), cdt),   # proj fwd
            pltpu.VMEM((S, b_tile, 4 * Hp), cdt),   # proj bwd
            pltpu.VMEM((S, b_tile, Hp), cdt),       # hs fwd
            pltpu.VMEM((S, b_tile, Hp), cdt),       # hs bwd
        ],
        compiler_params=pltpu.CompilerParams(
            dimension_semantics=("parallel",),
            vmem_limit_bytes=vmem_limit,
        ),
    )(xt, mt, twt, wih_f, wih_b, whh, b_f, b_b,
      attn_wf, attn_wb, attn_b, fc_w, fc_b)

    return out[:B, :C]


def reference_forward(emb_table, input_ids, attention_mask, token_weights, params):
    """Pure-JAX replica of the PyTorch forward (eval mode), batch-major."""
    x = emb_table[input_ids].astype(jnp.float32)                        # (B,S,E)
    x = x * token_weights[..., None]
    B, S, _ = x.shape
    H = params["whh_f"].shape[0]

    def run_dir(wih, whh, b, reverse):
        h = jnp.zeros((B, H), jnp.float32)
        c = jnp.zeros((B, H), jnp.float32)
        outs = [None] * S
        order = range(S - 1, -1, -1) if reverse else range(S)
        for t in order:
            gates = x[:, t, :] @ wih + h @ whh + b
            i = jax.nn.sigmoid(gates[:, 0 * H:1 * H])
            f = jax.nn.sigmoid(gates[:, 1 * H:2 * H])
            g = jnp.tanh(gates[:, 2 * H:3 * H])
            o = jax.nn.sigmoid(gates[:, 3 * H:4 * H])
            c = f * c + i * g
            h = o * jnp.tanh(c)
            outs[t] = h
        return jnp.stack(outs, axis=1)                                  # (B,S,H)

    hf = run_dir(params["wih_f"], params["whh_f"], params["b_f"], False)
    hb = run_dir(params["wih_b"], params["whh_b"], params["b_b"], True)
    lstm_out = jnp.concatenate([hf, hb], axis=-1)                       # (B,S,2H)

    scores = jnp.einsum("bsh,h->bs", lstm_out, params["attn_w"][0]) \
        + params["attn_b"][0, 0]
    scores = jnp.where(attention_mask == 0, -1000000000.0, scores)
    scores = scores * token_weights
    w = jax.nn.softmax(scores, axis=1)[..., None]
    context = jnp.sum(lstm_out * w, axis=1)
    return context @ params["fc_w"] + params["fc_b"]


if __name__ == "__main__":
    vocab_size, embed_dim, hidden_dim, num_classes = 32, 16, 32, 4
    B, S = 2, 8

    key = jax.random.PRNGKey(0)
    ks = jax.random.split(key, 14)
    scale = 0.1

    emb_table = (jax.random.normal(ks[0], (vocab_size, embed_dim)) * scale
                 ).astype(jnp.float32)
    params = {
        "wih_f": (jax.random.normal(ks[1], (embed_dim, 4 * hidden_dim)) * scale).astype(jnp.float32),
        "whh_f": (jax.random.normal(ks[2], (hidden_dim, 4 * hidden_dim)) * scale).astype(jnp.float32),
        "b_f":   (jax.random.normal(ks[3], (1, 4 * hidden_dim)) * scale).astype(jnp.float32),
        "wih_b": (jax.random.normal(ks[4], (embed_dim, 4 * hidden_dim)) * scale).astype(jnp.float32),
        "whh_b": (jax.random.normal(ks[5], (hidden_dim, 4 * hidden_dim)) * scale).astype(jnp.float32),
        "b_b":   (jax.random.normal(ks[6], (1, 4 * hidden_dim)) * scale).astype(jnp.float32),
        "attn_w": (jax.random.normal(ks[7], (1, 2 * hidden_dim)) * scale).astype(jnp.float32),
        "attn_b": (jax.random.normal(ks[8], (1, 1)) * scale).astype(jnp.float32),
        "fc_w":  (jax.random.normal(ks[9], (2 * hidden_dim, num_classes)) * scale).astype(jnp.float32),
        "fc_b":  (jax.random.normal(ks[10], (1, num_classes)) * scale).astype(jnp.float32),
    }

    input_ids = jax.random.randint(ks[11], (B, S), 0, vocab_size)
    attention_mask = jnp.ones((B, S), jnp.float32).at[1, 6:].set(0.0)
    token_weights = (0.5 + jax.random.uniform(ks[12], (B, S))).astype(jnp.float32)

    ref = reference_forward(emb_table, input_ids, attention_mask,
                            token_weights, params)

    # f32 matmul path (matches the reference closely)
    out = bilstm_attention_forward(emb_table, input_ids, attention_mask,
                                   token_weights, params)
    out = jax.block_until_ready(out)
    assert out.shape == (B, num_classes)
    assert jnp.allclose(out, ref, rtol=1e-4, atol=1e-5), (out, ref)

    # bf16 matmul/gate path (f32 accumulation, f32 cell state) for v6e/v7x
    out_bf16 = bilstm_attention_forward(emb_table, input_ids, attention_mask,
                                        token_weights, params,
                                        compute_dtype=jnp.bfloat16)
    out_bf16 = jax.block_until_ready(out_bf16)
    assert jnp.allclose(out_bf16, ref, rtol=5e-2, atol=5e-2), (out_bf16, ref)

    print("KERNEL_OK")
</pallas_src>

<mosaic_0001>
module attributes {stable_mosaic.version = 11 : i64} {
  func.func @bilstm_attention_kernel(%arg0: i32, %arg1: memref<8x2x16xf32, #tpu.memory_space<vmem>>, %arg2: memref<8x2xf32, #tpu.memory_space<vmem>>, %arg3: memref<8x2xf32, #tpu.memory_space<vmem>>, %arg4: memref<16x512xf32, #tpu.memory_space<vmem>>, %arg5: memref<16x512xf32, #tpu.memory_space<vmem>>, %arg6: memref<256x1024xf32, #tpu.memory_space<vmem>>, %arg7: memref<1x512xf32, #tpu.memory_space<vmem>>, %arg8: memref<1x512xf32, #tpu.memory_space<vmem>>, %arg9: memref<1x128xf32, #tpu.memory_space<vmem>>, %arg10: memref<1x128xf32, #tpu.memory_space<vmem>>, %arg11: memref<1x1xf32, #tpu.memory_space<vmem>>, %arg12: memref<256x128xf32, #tpu.memory_space<vmem>>, %arg13: memref<1x128xf32, #tpu.memory_space<vmem>>, %arg14: memref<2x128xf32, #tpu.memory_space<vmem>>, %arg15: memref<8x2x512xf32, #tpu.memory_space<vmem>>, %arg16: memref<8x2x512xf32, #tpu.memory_space<vmem>>, %arg17: memref<8x2x128xf32, #tpu.memory_space<vmem>>, %arg18: memref<8x2x128xf32, #tpu.memory_space<vmem>>) attributes {dimension_semantics = [#tpu.dimension_semantics<parallel>], iteration_bounds = array<i64: 1>, scalar_prefetch = 0 : i64, scratch_operands = 4 : i64, tpu.core_type = #tpu.core_type<tc>, window_params = [{transform_indices = @transform_0, window_bounds = array<i64: 8, 2, 16>}, {transform_indices = @transform_1, window_bounds = array<i64: 8, 2>}, {transform_indices = @transform_2, window_bounds = array<i64: 8, 2>}, {pipeline_mode = #tpu.pipeline_mode<synchronous>, transform_indices = @transform_3, window_bounds = array<i64: 16, 512>}, {pipeline_mode = #tpu.pipeline_mode<synchronous>, transform_indices = @transform_4, window_bounds = array<i64: 16, 512>}, {pipeline_mode = #tpu.pipeline_mode<synchronous>, transform_indices = @transform_5, window_bounds = array<i64: 256, 1024>}, {pipeline_mode = #tpu.pipeline_mode<synchronous>, transform_indices = @transform_6, window_bounds = array<i64: 1, 512>}, {pipeline_mode = #tpu.pipeline_mode<synchronous>, transform_indices = @transform_7, window_bounds = array<i64: 1, 512>}, {pipeline_mode = #tpu.pipeline_mode<synchronous>, transform_indices = @transform_8, window_bounds = array<i64: 1, 128>}, {pipeline_mode = #tpu.pipeline_mode<synchronous>, transform_indices = @transform_9, window_bounds = array<i64: 1, 128>}, {pipeline_mode = #tpu.pipeline_mode<synchronous>, transform_indices = @transform_10, window_bounds = array<i64: 1, 1>}, {pipeline_mode = #tpu.pipeline_mode<synchronous>, transform_indices = @transform_11, window_bounds = array<i64: 256, 128>}, {pipeline_mode = #tpu.pipeline_mode<synchronous>, transform_indices = @transform_12, window_bounds = array<i64: 1, 128>}, {transform_indices = @transform_13, window_bounds = array<i64: 2, 128>}]} {
    %c0 = arith.constant 0 : index
    %c0_0 = arith.constant 0 : index
    %0 = vector.load %arg4[%c0, %c0_0] : memref<16x512xf32, #tpu.memory_space<vmem>>, vector<16x512xf32>
    %c0_1 = arith.constant 0 : index
    %c0_2 = arith.constant 0 : index
    %1 = vector.load %arg5[%c0_1, %c0_2] : memref<16x512xf32, #tpu.memory_space<vmem>>, vector<16x512xf32>
    %c0_3 = arith.constant 0 : index
    %c0_4 = arith.constant 0 : index
    %2 = vector.load %arg7[%c0_3, %c0_4] : memref<1x512xf32, #tpu.memory_space<vmem>>, vector<1x512xf32>
    %c0_5 = arith.constant 0 : index
    %c0_6 = arith.constant 0 : index
    %3 = vector.load %arg8[%c0_5, %c0_6] : memref<1x512xf32, #tpu.memory_space<vmem>>, vector<1x512xf32>
    %c0_7 = arith.constant 0 : index
    %c0_8 = arith.constant 0 : index
    %c0_9 = arith.constant 0 : index
    %4 = vector.load %arg1[%c0_7, %c0_8, %c0_9] : memref<8x2x16xf32, #tpu.memory_space<vmem>>, vector<8x2x16xf32>
    %c0_10 = arith.constant 0 : index
    %c0_11 = arith.constant 0 : index
    %5 = vector.load %arg3[%c0_10, %c0_11] : memref<8x2xf32, #tpu.memory_space<vmem>>, vector<8x2xf32>
    %6 = vector.shape_cast %5 : vector<8x2xf32> to vector<8x2x1xf32>
    %7 = vector.broadcast %6 : vector<8x2x1xf32> to vector<8x2x16xf32>
    %8 = arith.mulf %4, %7 : vector<8x2x16xf32>
    %9 = vector.shape_cast %8 : vector<8x2x16xf32> to vector<16x16xf32>
    %cst = arith.constant dense<0.000000e+00> : vector<16x512xf32>
    %10 = tpu.matmul %9, %0, %cst {dimension_numbers = #tpu.dot_dimension_numbers<[1], [0], [0], [1], [0, 0, 1, 1], [], []>} : vector<16x16xf32>, vector<16x512xf32>, vector<16x512xf32> -> vector<16x512xf32>
    %11 = vector.broadcast %2 : vector<1x512xf32> to vector<16x512xf32>
    %12 = arith.addf %10, %11 : vector<16x512xf32>
    %13 = vector.shape_cast %12 : vector<16x512xf32> to vector<8x2x512xf32>
    %c0_12 = arith.constant 0 : index
    %c0_13 = arith.constant 0 : index
    %c0_14 = arith.constant 0 : index
    %14 = vector.load %arg15[%c0_12, %c0_13, %c0_14] : memref<8x2x512xf32, #tpu.memory_space<vmem>>, vector<8x2x512xf32>
    tpu.vector_store %arg15[%c0_12, %c0_13, %c0_14], %13 {strides = array<i32>} : memref<8x2x512xf32, #tpu.memory_space<vmem>>, vector<8x2x512xf32>,
    %cst_15 = arith.constant dense<0.000000e+00> : vector<16x512xf32>
    %15 = tpu.matmul %9, %1, %cst_15 {dimension_numbers = #tpu.dot_dimension_numbers<[1], [0], [0], [1], [0, 0, 1, 1], [], []>} : vector<16x16xf32>, vector<16x512xf32>, vector<16x512xf32> -> vector<16x512xf32>
    %16 = vector.broadcast %3 : vector<1x512xf32> to vector<16x512xf32>
    %17 = arith.addf %15, %16 : vector<16x512xf32>
    %18 = vector.shape_cast %17 : vector<16x512xf32> to vector<8x2x512xf32>
    %c0_16 = arith.constant 0 : index
    %c0_17 = arith.constant 0 : index
    %c0_18 = arith.constant 0 : index
    %19 = vector.load %arg16[%c0_16, %c0_17, %c0_18] : memref<8x2x512xf32, #tpu.memory_space<vmem>>, vector<8x2x512xf32>
    tpu.vector_store %arg16[%c0_16, %c0_17, %c0_18], %18 {strides = array<i32>} : memref<8x2x512xf32, #tpu.memory_space<vmem>>, vector<8x2x512xf32>,
    %c0_19 = arith.constant 0 : index
    %c0_20 = arith.constant 0 : index
    %20 = vector.load %arg6[%c0_19, %c0_20] : memref<256x1024xf32, #tpu.memory_space<vmem>>, vector<256x1024xf32>
    %cst_21 = arith.constant 0.000000e+00 : f32
    %21 = vector.broadcast %cst_21 : f32 to vector<2x128xf32>
    %cst_22 = arith.constant 0.000000e+00 : f32
    %22 = vector.broadcast %cst_22 : f32 to vector<2x128xf32>
    %c0_i32 = arith.constant 0 : i32
    %c7_i32 = arith.constant 7 : i32
    %23 = arith.subi %c7_i32, %c0_i32 : i32
    %24 = tpu.concatenate %21, %21 in 1 : vector<2x128xf32>, vector<2x128xf32> -> vector<2x256xf32>
    %cst_23 = arith.constant dense<0.000000e+00> : vector<2x1024xf32>
    %25 = tpu.matmul %24, %20, %cst_23 {dimension_numbers = #tpu.dot_dimension_numbers<[1], [0], [0], [1], [0, 0, 1, 1], [], []>} : vector<2x256xf32>, vector<256x1024xf32>, vector<2x1024xf32> -> vector<2x1024xf32>
    %26 = vector.extract_strided_slice %25 {offsets = [0, 0], sizes = [2, 512], strides = [1, 1]} : vector<2x1024xf32> to vector<2x512xf32>
    %27 = vector.extract_strided_slice %25 {offsets = [0, 512], sizes = [2, 512], strides = [1, 1]} : vector<2x1024xf32> to vector<2x512xf32>
    %28 = arith.index_cast %c0_i32 : i32 to index
    %c0_24 = arith.constant 0 : index
    %c0_25 = arith.constant 0 : index
    %29 = vector.load %arg15[%28, %c0_24, %c0_25] : memref<8x2x512xf32, #tpu.memory_space<vmem>>, vector<1x2x512xf32>
    %30 = vector.shape_cast %29 : vector<1x2x512xf32> to vector<2x512xf32>
    %31 = arith.addf %26, %30 : vector<2x512xf32>
    %32 = vector.extract_strided_slice %31 {offsets = [0, 0], sizes = [2, 128], strides = [1, 1]} : vector<2x512xf32> to vector<2x128xf32>
    %33 = arith.negf %32 : vector<2x128xf32>
    %34 = math.exp %33 : vector<2x128xf32>
    %cst_26 = arith.constant 1.000000e+00 : f32
    %35 = vector.broadcast %cst_26 : f32 to vector<2x128xf32>
    %36 = arith.addf %35, %34 : vector<2x128xf32>
    %37 = arith.divf %35, %36 : vector<2x128xf32>
    %38 = vector.extract_strided_slice %31 {offsets = [0, 128], sizes = [2, 128], strides = [1, 1]} : vector<2x512xf32> to vector<2x128xf32>
    %39 = arith.negf %38 : vector<2x128xf32>
    %40 = math.exp %39 : vector<2x128xf32>
    %cst_27 = arith.constant 1.000000e+00 : f32
    %41 = vector.broadcast %cst_27 : f32 to vector<2x128xf32>
    %42 = arith.addf %41, %40 : vector<2x128xf32>
    %43 = arith.divf %41, %42 : vector<2x128xf32>
    %44 = vector.extract_strided_slice %31 {offsets = [0, 256], sizes = [2, 128], strides = [1, 1]} : vector<2x512xf32> to vector<2x128xf32>
    %45 = math.tanh %44 : vector<2x128xf32>
    %46 = vector.extract_strided_slice %31 {offsets = [0, 384], sizes = [2, 128], strides = [1, 1]} : vector<2x512xf32> to vector<2x128xf32>
    %47 = arith.negf %46 : vector<2x128xf32>
    %48 = math.exp %47 : vector<2x128xf32>
    %cst_28 = arith.constant 1.000000e+00 : f32
    %49 = vector.broadcast %cst_28 : f32 to vector<2x128xf32>
    %50 = arith.addf %49, %48 : vector<2x128xf32>
    %51 = arith.divf %49, %50 : vector<2x128xf32>
    %52 = arith.mulf %43, %22 : vector<2x128xf32>
    %53 = arith.mulf %37, %45 : vector<2x128xf32>
    %54 = arith.addf %52, %53 : vector<2x128xf32>
    %55 = math.tanh %54 : vector<2x128xf32>
    %56 = arith.mulf %51, %55 : vector<2x128xf32>
    %57 = arith.index_cast %23 : i32 to index
    %c0_29 = arith.constant 0 : index
    %c0_30 = arith.constant 0 : index
    %58 = vector.load %arg16[%57, %c0_29, %c0_30] : memref<8x2x512xf32, #tpu.memory_space<vmem>>, vector<1x2x512xf32>
    %59 = vector.shape_cast %58 : vector<1x2x512xf32> to vector<2x512xf32>
    %60 = arith.addf %27, %59 : vector<2x512xf32>
    %61 = vector.extract_strided_slice %60 {offsets = [0, 0], sizes = [2, 128], strides = [1, 1]} : vector<2x512xf32> to vector<2x128xf32>
    %62 = arith.negf %61 : vector<2x128xf32>
    %63 = math.exp %62 : vector<2x128xf32>
    %cst_31 = arith.constant 1.000000e+00 : f32
    %64 = vector.broadcast %cst_31 : f32 to vector<2x128xf32>
    %65 = arith.addf %64, %63 : vector<2x128xf32>
    %66 = arith.divf %64, %65 : vector<2x128xf32>
    %67 = vector.extract_strided_slice %60 {offsets = [0, 128], sizes = [2, 128], strides = [1, 1]} : vector<2x512xf32> to vector<2x128xf32>
    %68 = arith.negf %67 : vector<2x128xf32>
    %69 = math.exp %68 : vector<2x128xf32>
    %cst_32 = arith.constant 1.000000e+00 : f32
    %70 = vector.broadcast %cst_32 : f32 to vector<2x128xf32>
    %71 = arith.addf %70, %69 : vector<2x128xf32>
    %72 = arith.divf %70, %71 : vector<2x128xf32>
    %73 = vector.extract_strided_slice %60 {offsets = [0, 256], sizes = [2, 128], strides = [1, 1]} : vector<2x512xf32> to vector<2x128xf32>
    %74 = math.tanh %73 : vector<2x128xf32>
    %75 = vector.extract_strided_slice %60 {offsets = [0, 384], sizes = [2, 128], strides = [1, 1]} : vector<2x512xf32> to vector<2x128xf32>
    %76 = arith.negf %75 : vector<2x128xf32>
    %77 = math.exp %76 : vector<2x128xf32>
    %cst_33 = arith.constant 1.000000e+00 : f32
    %78 = vector.broadcast %cst_33 : f32 to vector<2x128xf32>
    %79 = arith.addf %78, %77 : vector<2x128xf32>
    %80 = arith.divf %78, %79 : vector<2x128xf32>
    %81 = arith.mulf %72, %22 : vector<2x128xf32>
    %82 = arith.mulf %66, %74 : vector<2x128xf32>
    %83 = arith.addf %81, %82 : vector<2x128xf32>
    %84 = math.tanh %83 : vector<2x128xf32>
    %85 = arith.mulf %80, %84 : vector<2x128xf32>
    %86 = arith.index_cast %c0_i32 : i32 to index
    %c0_34 = arith.constant 0 : index
    %c0_35 = arith.constant 0 : index
    %87 = vector.load %arg17[%86, %c0_34, %c0_35] : memref<8x2x128xf32, #tpu.memory_space<vmem>>, vector<1x2x128xf32>
    %88 = vector.shape_cast %87 : vector<1x2x128xf32> to vector<2x128xf32>
    %89 = vector.shape_cast %56 : vector<2x128xf32> to vector<1x2x128xf32>
    tpu.vector_store %arg17[%86, %c0_34, %c0_35], %89 {strides = array<i32>} : memref<8x2x128xf32, #tpu.memory_space<vmem>>, vector<1x2x128xf32>,
    %90 = arith.index_cast %23 : i32 to index
    %c0_36 = arith.constant 0 : index
    %c0_37 = arith.constant 0 : index
    %91 = vector.load %arg18[%90, %c0_36, %c0_37] : memref<8x2x128xf32, #tpu.memory_space<vmem>>, vector<1x2x128xf32>
    %92 = vector.shape_cast %91 : vector<1x2x128xf32> to vector<2x128xf32>
    %93 = vector.shape_cast %85 : vector<2x128xf32> to vector<1x2x128xf32>
    tpu.vector_store %arg18[%90, %c0_36, %c0_37], %93 {strides = array<i32>} : memref<8x2x128xf32, #tpu.memory_space<vmem>>, vector<1x2x128xf32>,
    %c1_i32 = arith.constant 1 : i32
    %c7_i32_38 = arith.constant 7 : i32
    %94 = arith.subi %c7_i32_38, %c1_i32 : i32
    %95 = tpu.concatenate %56, %85 in 1 : vector<2x128xf32>, vector<2x128xf32> -> vector<2x256xf32>
    %cst_39 = arith.constant dense<0.000000e+00> : vector<2x1024xf32>
    %96 = tpu.matmul %95, %20, %cst_39 {dimension_numbers = #tpu.dot_dimension_numbers<[1], [0], [0], [1], [0, 0, 1, 1], [], []>} : vector<2x256xf32>, vector<256x1024xf32>, vector<2x1024xf32> -> vector<2x1024xf32>
    %97 = vector.extract_strided_slice %96 {offsets = [0, 0], sizes = [2, 512], strides = [1, 1]} : vector<2x1024xf32> to vector<2x512xf32>
    %98 = vector.extract_strided_slice %96 {offsets = [0, 512], sizes = [2, 512], strides = [1, 1]} : vector<2x1024xf32> to vector<2x512xf32>
    %99 = arith.index_cast %c1_i32 : i32 to index
    %c0_40 = arith.constant 0 : index
    %c0_41 = arith.constant 0 : index
    %100 = vector.load %arg15[%99, %c0_40, %c0_41] : memref<8x2x512xf32, #tpu.memory_space<vmem>>, vector<1x2x512xf32>
    %101 = vector.shape_cast %100 : vector<1x2x512xf32> to vector<2x512xf32>
    %102 = arith.addf %97, %101 : vector<2x512xf32>
    %103 = vector.extract_strided_slice %102 {offsets = [0, 0], sizes = [2, 128], strides = [1, 1]} : vector<2x512xf32> to vector<2x128xf32>
    %104 = arith.negf %103 : vector<2x128xf32>
    %105 = math.exp %104 : vector<2x128xf32>
    %cst_42 = arith.constant 1.000000e+00 : f32
    %106 = vector.broadcast %cst_42 : f32 to vector<2x128xf32>
    %107 = arith.addf %106, %105 : vector<2x128xf32>
    %108 = arith.divf %106, %107 : vector<2x128xf32>
    %109 = vector.extract_strided_slice %102 {offsets = [0, 128], sizes = [2, 128], strides = [1, 1]} : vector<2x512xf32> to vector<2x128xf32>
    %110 = arith.negf %109 : vector<2x128xf32>
    %111 = math.exp %110 : vector<2x128xf32>
    %cst_43 = arith.constant 1.000000e+00 : f32
    %112 = vector.broadcast %cst_43 : f32 to vector<2x128xf32>
    %113 = arith.addf %112, %111 : vector<2x128xf32>
    %114 = arith.divf %112, %113 : vector<2x128xf32>
    %115 = vector.extract_strided_slice %102 {offsets = [0, 256], sizes = [2, 128], strides = [1, 1]} : vector<2x512xf32> to vector<2x128xf32>
    %116 = math.tanh %115 : vector<2x128xf32>
    %117 = vector.extract_strided_slice %102 {offsets = [0, 384], sizes = [2, 128], strides = [1, 1]} : vector<2x512xf32> to vector<2x128xf32>
    %118 = arith.negf %117 : vector<2x128xf32>
    %119 = math.exp %118 : vector<2x128xf32>
    %cst_44 = arith.constant 1.000000e+00 : f32
    %120 = vector.broadcast %cst_44 : f32 to vector<2x128xf32>
    %121 = arith.addf %120, %119 : vector<2x128xf32>
    %122 = arith.divf %120, %121 : vector<2x128xf32>
    %123 = arith.mulf %114, %54 : vector<2x128xf32>
    %124 = arith.mulf %108, %116 : vector<2x128xf32>
    %125 = arith.addf %123, %124 : vector<2x128xf32>
    %126 = math.tanh %125 : vector<2x128xf32>
    %127 = arith.mulf %122, %126 : vector<2x128xf32>
    %128 = arith.index_cast %94 : i32 to index
    %c0_45 = arith.constant 0 : index
    %c0_46 = arith.constant 0 : index
    %129 = vector.load %arg16[%128, %c0_45, %c0_46] : memref<8x2x512xf32, #tpu.memory_space<vmem>>, vector<1x2x512xf32>
    %130 = vector.shape_cast %129 : vector<1x2x512xf32> to vector<2x512xf32>
    %131 = arith.addf %98, %130 : vector<2x512xf32>
    %132 = vector.extract_strided_slice %131 {offsets = [0, 0], sizes = [2, 128], strides = [1, 1]} : vector<2x512xf32> to vector<2x128xf32>
    %133 = arith.negf %132 : vector<2x128xf32>
    %134 = math.exp %133 : vector<2x128xf32>
    %cst_47 = arith.constant 1.000000e+00 : f32
    %135 = vector.broadcast %cst_47 : f32 to vector<2x128xf32>
    %136 = arith.addf %135, %134 : vector<2x128xf32>
    %137 = arith.divf %135, %136 : vector<2x128xf32>
    %138 = vector.extract_strided_slice %131 {offsets = [0, 128], sizes = [2, 128], strides = [1, 1]} : vector<2x512xf32> to vector<2x128xf32>
    %139 = arith.negf %138 : vector<2x128xf32>
    %140 = math.exp %139 : vector<2x128xf32>
    %cst_48 = arith.constant 1.000000e+00 : f32
    %141 = vector.broadcast %cst_48 : f32 to vector<2x128xf32>
    %142 = arith.addf %141, %140 : vector<2x128xf32>
    %143 = arith.divf %141, %142 : vector<2x128xf32>
    %144 = vector.extract_strided_slice %131 {offsets = [0, 256], sizes = [2, 128], strides = [1, 1]} : vector<2x512xf32> to vector<2x128xf32>
    %145 = math.tanh %144 : vector<2x128xf32>
    %146 = vector.extract_strided_slice %131 {offsets = [0, 384], sizes = [2, 128], strides = [1, 1]} : vector<2x512xf32> to vector<2x128xf32>
    %147 = arith.negf %146 : vector<2x128xf32>
    %148 = math.exp %147 : vector<2x128xf32>
    %cst_49 = arith.constant 1.000000e+00 : f32
    %149 = vector.broadcast %cst_49 : f32 to vector<2x128xf32>
    %150 = arith.addf %149, %148 : vector<2x128xf32>
    %151 = arith.divf %149, %150 : vector<2x128xf32>
    %152 = arith.mulf %143, %83 : vector<2x128xf32>
    %153 = arith.mulf %137, %145 : vector<2x128xf32>
    %154 = arith.addf %152, %153 : vector<2x128xf32>
    %155 = math.tanh %154 : vector<2x128xf32>
    %156 = arith.mulf %151, %155 : vector<2x128xf32>
    %157 = arith.index_cast %c1_i32 : i32 to index
    %c0_50 = arith.constant 0 : index
    %c0_51 = arith.constant 0 : index
    %158 = vector.load %arg17[%157, %c0_50, %c0_51] : memref<8x2x128xf32, #tpu.memory_space<vmem>>, vector<1x2x128xf32>
    %159 = vector.shape_cast %158 : vector<1x2x128xf32> to vector<2x128xf32>
    %160 = vector.shape_cast %127 : vector<2x128xf32> to vector<1x2x128xf32>
    tpu.vector_store %arg17[%157, %c0_50, %c0_51], %160 {strides = array<i32>} : memref<8x2x128xf32, #tpu.memory_space<vmem>>, vector<1x2x128xf32>,
    %161 = arith.index_cast %94 : i32 to index
    %c0_52 = arith.constant 0 : index
    %c0_53 = arith.constant 0 : index
    %162 = vector.load %arg18[%161, %c0_52, %c0_53] : memref<8x2x128xf32, #tpu.memory_space<vmem>>, vector<1x2x128xf32>
    %163 = vector.shape_cast %162 : vector<1x2x128xf32> to vector<2x128xf32>
    %164 = vector.shape_cast %156 : vector<2x128xf32> to vector<1x2x128xf32>
    tpu.vector_store %arg18[%161, %c0_52, %c0_53], %164 {strides = array<i32>} : memref<8x2x128xf32, #tpu.memory_space<vmem>>, vector<1x2x128xf32>,
    %c2_i32 = arith.constant 2 : i32
    %c7_i32_54 = arith.constant 7 : i32
    %165 = arith.subi %c7_i32_54, %c2_i32 : i32
    %166 = tpu.concatenate %127, %156 in 1 : vector<2x128xf32>, vector<2x128xf32> -> vector<2x256xf32>
    %cst_55 = arith.constant dense<0.000000e+00> : vector<2x1024xf32>
    %167 = tpu.matmul %166, %20, %cst_55 {dimension_numbers = #tpu.dot_dimension_numbers<[1], [0], [0], [1], [0, 0, 1, 1], [], []>} : vector<2x256xf32>, vector<256x1024xf32>, vector<2x1024xf32> -> vector<2x1024xf32>
    %168 = vector.extract_strided_slice %167 {offsets = [0, 0], sizes = [2, 512], strides = [1, 1]} : vector<2x1024xf32> to vector<2x512xf32>
    %169 = vector.extract_strided_slice %167 {offsets = [0, 512], sizes = [2, 512], strides = [1, 1]} : vector<2x1024xf32> to vector<2x512xf32>
    %170 = arith.index_cast %c2_i32 : i32 to index
    %c0_56 = arith.constant 0 : index
    %c0_57 = arith.constant 0 : index
    %171 = vector.load %arg15[%170, %c0_56, %c0_57] : memref<8x2x512xf32, #tpu.memory_space<vmem>>, vector<1x2x512xf32>
    %172 = vector.shape_cast %171 : vector<1x2x512xf32> to vector<2x512xf32>
    %173 = arith.addf %168, %172 : vector<2x512xf32>
    %174 = vector.extract_strided_slice %173 {offsets = [0, 0], sizes = [2, 128], strides = [1, 1]} : vector<2x512xf32> to vector<2x128xf32>
    %175 = arith.negf %174 : vector<2x128xf32>
    %176 = math.exp %175 : vector<2x128xf32>
    %cst_58 = arith.constant 1.000000e+00 : f32
    %177 = vector.broadcast %cst_58 : f32 to vector<2x128xf32>
    %178 = arith.addf %177, %176 : vector<2x128xf32>
    %179 = arith.divf %177, %178 : vector<2x128xf32>
    %180 = vector.extract_strided_slice %173 {offsets = [0, 128], sizes = [2, 128], strides = [1, 1]} : vector<2x512xf32> to vector<2x128xf32>
    %181 = arith.negf %180 : vector<2x128xf32>
    %182 = math.exp %181 : vector<2x128xf32>
    %cst_59 = arith.constant 1.000000e+00 : f32
    %183 = vector.broadcast %cst_59 : f32 to vector<2x128xf32>
    %184 = arith.addf %183, %182 : vector<2x128xf32>
    %185 = arith.divf %183, %184 : vector<2x128xf32>
    %186 = vector.extract_strided_slice %173 {offsets = [0, 256], sizes = [2, 128], strides = [1, 1]} : vector<2x512xf32> to vector<2x128xf32>
    %187 = math.tanh %186 : vector<2x128xf32>
    %188 = vector.extract_strided_slice %173 {offsets = [0, 384], sizes = [2, 128], strides = [1, 1]} : vector<2x512xf32> to vector<2x128xf32>
    %189 = arith.negf %188 : vector<2x128xf32>
    %190 = math.exp %189 : vector<2x128xf32>
    %cst_60 = arith.constant 1.000000e+00 : f32
    %191 = vector.broadcast %cst_60 : f32 to vector<2x128xf32>
    %192 = arith.addf %191, %190 : vector<2x128xf32>
    %193 = arith.divf %191, %192 : vector<2x128xf32>
    %194 = arith.mulf %185, %125 : vector<2x128xf32>
    %195 = arith.mulf %179, %187 : vector<2x128xf32>
    %196 = arith.addf %194, %195 : vector<2x128xf32>
    %197 = math.tanh %196 : vector<2x128xf32>
    %198 = arith.mulf %193, %197 : vector<2x128xf32>
    %199 = arith.index_cast %165 : i32 to index
    %c0_61 = arith.constant 0 : index
    %c0_62 = arith.constant 0 : index
    %200 = vector.load %arg16[%199, %c0_61, %c0_62] : memref<8x2x512xf32, #tpu.memory_space<vmem>>, vector<1x2x512xf32>
    %201 = vector.shape_cast %200 : vector<1x2x512xf32> to vector<2x512xf32>
    %202 = arith.addf %169, %201 : vector<2x512xf32>
    %203 = vector.extract_strided_slice %202 {offsets = [0, 0], sizes = [2, 128], strides = [1, 1]} : vector<2x512xf32> to vector<2x128xf32>
    %204 = arith.negf %203 : vector<2x128xf32>
    %205 = math.exp %204 : vector<2x128xf32>
    %cst_63 = arith.constant 1.000000e+00 : f32
    %206 = vector.broadcast %cst_63 : f32 to vector<2x128xf32>
    %207 = arith.addf %206, %205 : vector<2x128xf32>
    %208 = arith.divf %206, %207 : vector<2x128xf32>
    %209 = vector.extract_strided_slice %202 {offsets = [0, 128], sizes = [2, 128], strides = [1, 1]} : vector<2x512xf32> to vector<2x128xf32>
    %210 = arith.negf %209 : vector<2x128xf32>
    %211 = math.exp %210 : vector<2x128xf32>
    %cst_64 = arith.constant 1.000000e+00 : f32
    %212 = vector.broadcast %cst_64 : f32 to vector<2x128xf32>
    %213 = arith.addf %212, %211 : vector<2x128xf32>
    %214 = arith.divf %212, %213 : vector<2x128xf32>
    %215 = vector.extract_strided_slice %202 {offsets = [0, 256], sizes = [2, 128], strides = [1, 1]} : vector<2x512xf32> to vector<2x128xf32>
    %216 = math.tanh %215 : vector<2x128xf32>
    %217 = vector.extract_strided_slice %202 {offsets = [0, 384], sizes = [2, 128], strides = [1, 1]} : vector<2x512xf32> to vector<2x128xf32>
    %218 = arith.negf %217 : vector<2x128xf32>
    %219 = math.exp %218 : vector<2x128xf32>
    %cst_65 = arith.constant 1.000000e+00 : f32
    %220 = vector.broadcast %cst_65 : f32 to vector<2x128xf32>
    %221 = arith.addf %220, %219 : vector<2x128xf32>
    %222 = arith.divf %220, %221 : vector<2x128xf32>
    %223 = arith.mulf %214, %154 : vector<2x128xf32>
    %224 = arith.mulf %208, %216 : vector<2x128xf32>
    %225 = arith.addf %223, %224 : vector<2x128xf32>
    %226 = math.tanh %225 : vector<2x128xf32>
    %227 = arith.mulf %222, %226 : vector<2x128xf32>
    %228 = arith.index_cast %c2_i32 : i32 to index
    %c0_66 = arith.constant 0 : index
    %c0_67 = arith.constant 0 : index
    %229 = vector.load %arg17[%228, %c0_66, %c0_67] : memref<8x2x128xf32, #tpu.memory_space<vmem>>, vector<1x2x128xf32>
    %230 = vector.shape_cast %229 : vector<1x2x128xf32> to vector<2x128xf32>
    %231 = vector.shape_cast %198 : vector<2x128xf32> to vector<1x2x128xf32>
    tpu.vector_store %arg17[%228, %c0_66, %c0_67], %231 {strides = array<i32>} : memref<8x2x128xf32, #tpu.memory_space<vmem>>, vector<1x2x128xf32>,
    %232 = arith.index_cast %165 : i32 to index
    %c0_68 = arith.constant 0 : index
    %c0_69 = arith.constant 0 : index
    %233 = vector.load %arg18[%232, %c0_68, %c0_69] : memref<8x2x128xf32, #tpu.memory_space<vmem>>, vector<1x2x128xf32>
    %234 = vector.shape_cast %233 : vector<1x2x128xf32> to vector<2x128xf32>
    %235 = vector.shape_cast %227 : vector<2x128xf32> to vector<1x2x128xf32>
    tpu.vector_store %arg18[%232, %c0_68, %c0_69], %235 {strides = array<i32>} : memref<8x2x128xf32, #tpu.memory_space<vmem>>, vector<1x2x128xf32>,
    %c3_i32 = arith.constant 3 : i32
    %c7_i32_70 = arith.constant 7 : i32
    %236 = arith.subi %c7_i32_70, %c3_i32 : i32
    %237 = tpu.concatenate %198, %227 in 1 : vector<2x128xf32>, vector<2x128xf32> -> vector<2x256xf32>
    %cst_71 = arith.constant dense<0.000000e+00> : vector<2x1024xf32>
    %238 = tpu.matmul %237, %20, %cst_71 {dimension_numbers = #tpu.dot_dimension_numbers<[1], [0], [0], [1], [0, 0, 1, 1], [], []>} : vector<2x256xf32>, vector<256x1024xf32>, vector<2x1024xf32> -> vector<2x1024xf32>
    %239 = vector.extract_strided_slice %238 {offsets = [0, 0], sizes = [2, 512], strides = [1, 1]} : vector<2x1024xf32> to vector<2x512xf32>
    %240 = vector.extract_strided_slice %238 {offsets = [0, 512], sizes = [2, 512], strides = [1, 1]} : vector<2x1024xf32> to vector<2x512xf32>
    %241 = arith.index_cast %c3_i32 : i32 to index
    %c0_72 = arith.constant 0 : index
    %c0_73 = arith.constant 0 : index
    %242 = vector.load %arg15[%241, %c0_72, %c0_73] : memref<8x2x512xf32, #tpu.memory_space<vmem>>, vector<1x2x512xf32>
    %243 = vector.shape_cast %242 : vector<1x2x512xf32> to vector<2x512xf32>
    %244 = arith.addf %239, %243 : vector<2x512xf32>
    %245 = vector.extract_strided_slice %244 {offsets = [0, 0], sizes = [2, 128], strides = [1, 1]} : vector<2x512xf32> to vector<2x128xf32>
    %246 = arith.negf %245 : vector<2x128xf32>
    %247 = math.exp %246 : vector<2x128xf32>
    %cst_74 = arith.constant 1.000000e+00 : f32
    %248 = vector.broadcast %cst_74 : f32 to vector<2x128xf32>
    %249 = arith.addf %248, %247 : vector<2x128xf32>
    %250 = arith.divf %248, %249 : vector<2x128xf32>
    %251 = vector.extract_strided_slice %244 {offsets = [0, 128], sizes = [2, 128], strides = [1, 1]} : vector<2x512xf32> to vector<2x128xf32>
    %252 = arith.negf %251 : vector<2x128xf32>
    %253 = math.exp %252 : vector<2x128xf32>
    %cst_75 = arith.constant 1.000000e+00 : f32
    %254 = vector.broadcast %cst_75 : f32 to vector<2x128xf32>
    %255 = arith.addf %254, %253 : vector<2x128xf32>
    %256 = arith.divf %254, %255 : vector<2x128xf32>
    %257 = vector.extract_strided_slice %244 {offsets = [0, 256], sizes = [2, 128], strides = [1, 1]} : vector<2x512xf32> to vector<2x128xf32>
    %258 = math.tanh %257 : vector<2x128xf32>
    %259 = vector.extract_strided_slice %244 {offsets = [0, 384], sizes = [2, 128], strides = [1, 1]} : vector<2x512xf32> to vector<2x128xf32>
    %260 = arith.negf %259 : vector<2x128xf32>
    %261 = math.exp %260 : vector<2x128xf32>
    %cst_76 = arith.constant 1.000000e+00 : f32
    %262 = vector.broadcast %cst_76 : f32 to vector<2x128xf32>
    %263 = arith.addf %262, %261 : vector<2x128xf32>
    %264 = arith.divf %262, %263 : vector<2x128xf32>
    %265 = arith.mulf %256, %196 : vector<2x128xf32>
    %266 = arith.mulf %250, %258 : vector<2x128xf32>
    %267 = arith.addf %265, %266 : vector<2x128xf32>
    %268 = math.tanh %267 : vector<2x128xf32>
    %269 = arith.mulf %264, %268 : vector<2x128xf32>
    %270 = arith.index_cast %236 : i32 to index
    %c0_77 = arith.constant 0 : index
    %c0_78 = arith.constant 0 : index
    %271 = vector.load %arg16[%270, %c0_77, %c0_78] : memref<8x2x512xf32, #tpu.memory_space<vmem>>, vector<1x2x512xf32>
    %272 = vector.shape_cast %271 : vector<1x2x512xf32> to vector<2x512xf32>
    %273 = arith.addf %240, %272 : vector<2x512xf32>
    %274 = vector.extract_strided_slice %273 {offsets = [0, 0], sizes = [2, 128], strides = [1, 1]} : vector<2x512xf32> to vector<2x128xf32>
    %275 = arith.negf %274 : vector<2x128xf32>
    %276 = math.exp %275 : vector<2x128xf32>
    %cst_79 = arith.constant 1.000000e+00 : f32
    %277 = vector.broadcast %cst_79 : f32 to vector<2x128xf32>
    %278 = arith.addf %277, %276 : vector<2x128xf32>
    %279 = arith.divf %277, %278 : vector<2x128xf32>
    %280 = vector.extract_strided_slice %273 {offsets = [0, 128], sizes = [2, 128], strides = [1, 1]} : vector<2x512xf32> to vector<2x128xf32>
    %281 = arith.negf %280 : vector<2x128xf32>
    %282 = math.exp %281 : vector<2x128xf32>
    %cst_80 = arith.constant 1.000000e+00 : f32
    %283 = vector.broadcast %cst_80 : f32 to vector<2x128xf32>
    %284 = arith.addf %283, %282 : vector<2x128xf32>
    %285 = arith.divf %283, %284 : vector<2x128xf32>
    %286 = vector.extract_strided_slice %273 {offsets = [0, 256], sizes = [2, 128], strides = [1, 1]} : vector<2x512xf32> to vector<2x128xf32>
    %287 = math.tanh %286 : vector<2x128xf32>
    %288 = vector.extract_strided_slice %273 {offsets = [0, 384], sizes = [2, 128], strides = [1, 1]} : vector<2x512xf32> to vector<2x128xf32>
    %289 = arith.negf %288 : vector<2x128xf32>
    %290 = math.exp %289 : vector<2x128xf32>
    %cst_81 = arith.constant 1.000000e+00 : f32
    %291 = vector.broadcast %cst_81 : f32 to vector<2x128xf32>
    %292 = arith.addf %291, %290 : vector<2x128xf32>
    %293 = arith.divf %291, %292 : vector<2x128xf32>
    %294 = arith.mulf %285, %225 : vector<2x128xf32>
    %295 = arith.mulf %279, %287 : vector<2x128xf32>
    %296 = arith.addf %294, %295 : vector<2x128xf32>
    %297 = math.tanh %296 : vector<2x128xf32>
    %298 = arith.mulf %293, %297 : vector<2x128xf32>
    %299 = arith.index_cast %c3_i32 : i32 to index
    %c0_82 = arith.constant 0 : index
    %c0_83 = arith.constant 0 : index
    %300 = vector.load %arg17[%299, %c0_82, %c0_83] : memref<8x2x128xf32, #tpu.memory_space<vmem>>, vector<1x2x128xf32>
    %301 = vector.shape_cast %300 : vector<1x2x128xf32> to vector<2x128xf32>
    %302 = vector.shape_cast %269 : vector<2x128xf32> to vector<1x2x128xf32>
    tpu.vector_store %arg17[%299, %c0_82, %c0_83], %302 {strides = array<i32>} : memref<8x2x128xf32, #tpu.memory_space<vmem>>, vector<1x2x128xf32>,
    %303 = arith.index_cast %236 : i32 to index
    %c0_84 = arith.constant 0 : index
    %c0_85 = arith.constant 0 : index
    %304 = vector.load %arg18[%303, %c0_84, %c0_85] : memref<8x2x128xf32, #tpu.memory_space<vmem>>, vector<1x2x128xf32>
    %305 = vector.shape_cast %304 : vector<1x2x128xf32> to vector<2x128xf32>
    %306 = vector.shape_cast %298 : vector<2x128xf32> to vector<1x2x128xf32>
    tpu.vector_store %arg18[%303, %c0_84, %c0_85], %306 {strides = array<i32>} : memref<8x2x128xf32, #tpu.memory_space<vmem>>, vector<1x2x128xf32>,
    %c4_i32 = arith.constant 4 : i32
    %c7_i32_86 = arith.constant 7 : i32
    %307 = arith.subi %c7_i32_86, %c4_i32 : i32
    %308 = tpu.concatenate %269, %298 in 1 : vector<2x128xf32>, vector<2x128xf32> -> vector<2x256xf32>
    %cst_87 = arith.constant dense<0.000000e+00> : vector<2x1024xf32>
    %309 = tpu.matmul %308, %20, %cst_87 {dimension_numbers = #tpu.dot_dimension_numbers<[1], [0], [0], [1], [0, 0, 1, 1], [], []>} : vector<2x256xf32>, vector<256x1024xf32>, vector<2x1024xf32> -> vector<2x1024xf32>
    %310 = vector.extract_strided_slice %309 {offsets = [0, 0], sizes = [2, 512], strides = [1, 1]} : vector<2x1024xf32> to vector<2x512xf32>
    %311 = vector.extract_strided_slice %309 {offsets = [0, 512], sizes = [2, 512], strides = [1, 1]} : vector<2x1024xf32> to vector<2x512xf32>
    %312 = arith.index_cast %c4_i32 : i32 to index
    %c0_88 = arith.constant 0 : index
    %c0_89 = arith.constant 0 : index
    %313 = vector.load %arg15[%312, %c0_88, %c0_89] : memref<8x2x512xf32, #tpu.memory_space<vmem>>, vector<1x2x512xf32>
    %314 = vector.shape_cast %313 : vector<1x2x512xf32> to vector<2x512xf32>
    %315 = arith.addf %310, %314 : vector<2x512xf32>
    %316 = vector.extract_strided_slice %315 {offsets = [0, 0], sizes = [2, 128], strides = [1, 1]} : vector<2x512xf32> to vector<2x128xf32>
    %317 = arith.negf %316 : vector<2x128xf32>
    %318 = math.exp %317 : vector<2x128xf32>
    %cst_90 = arith.constant 1.000000e+00 : f32
    %319 = vector.broadcast %cst_90 : f32 to vector<2x128xf32>
    %320 = arith.addf %319, %318 : vector<2x128xf32>
    %321 = arith.divf %319, %320 : vector<2x128xf32>
    %322 = vector.extract_strided_slice %315 {offsets = [0, 128], sizes = [2, 128], strides = [1, 1]} : vector<2x512xf32> to vector<2x128xf32>
    %323 = arith.negf %322 : vector<2x128xf32>
    %324 = math.exp %323 : vector<2x128xf32>
    %cst_91 = arith.constant 1.000000e+00 : f32
    %325 = vector.broadcast %cst_91 : f32 to vector<2x128xf32>
    %326 = arith.addf %325, %324 : vector<2x128xf32>
    %327 = arith.divf %325, %326 : vector<2x128xf32>
    %328 = vector.extract_strided_slice %315 {offsets = [0, 256], sizes = [2, 128], strides = [1, 1]} : vector<2x512xf32> to vector<2x128xf32>
    %329 = math.tanh %328 : vector<2x128xf32>
    %330 = vector.extract_strided_slice %315 {offsets = [0, 384], sizes = [2, 128], strides = [1, 1]} : vector<2x512xf32> to vector<2x128xf32>
    %331 = arith.negf %330 : vector<2x128xf32>
    %332 = math.exp %331 : vector<2x128xf32>
    %cst_92 = arith.constant 1.000000e+00 : f32
    %333 = vector.broadcast %cst_92 : f32 to vector<2x128xf32>
    %334 = arith.addf %333, %332 : vector<2x128xf32>
    %335 = arith.divf %333, %334 : vector<2x128xf32>
    %336 = arith.mulf %327, %267 : vector<2x128xf32>
    %337 = arith.mulf %321, %329 : vector<2x128xf32>
    %338 = arith.addf %336, %337 : vector<2x128xf32>
    %339 = math.tanh %338 : vector<2x128xf32>
    %340 = arith.mulf %335, %339 : vector<2x128xf32>
    %341 = arith.index_cast %307 : i32 to index
    %c0_93 = arith.constant 0 : index
    %c0_94 = arith.constant 0 : index
    %342 = vector.load %arg16[%341, %c0_93, %c0_94] : memref<8x2x512xf32, #tpu.memory_space<vmem>>, vector<1x2x512xf32>
    %343 = vector.shape_cast %342 : vector<1x2x512xf32> to vector<2x512xf32>
    %344 = arith.addf %311, %343 : vector<2x512xf32>
    %345 = vector.extract_strided_slice %344 {offsets = [0, 0], sizes = [2, 128], strides = [1, 1]} : vector<2x512xf32> to vector<2x128xf32>
    %346 = arith.negf %345 : vector<2x128xf32>
    %347 = math.exp %346 : vector<2x128xf32>
    %cst_95 = arith.constant 1.000000e+00 : f32
    %348 = vector.broadcast %cst_95 : f32 to vector<2x128xf32>
    %349 = arith.addf %348, %347 : vector<2x128xf32>
    %350 = arith.divf %348, %349 : vector<2x128xf32>
    %351 = vector.extract_strided_slice %344 {offsets = [0, 128], sizes = [2, 128], strides = [1, 1]} : vector<2x512xf32> to vector<2x128xf32>
    %352 = arith.negf %351 : vector<2x128xf32>
    %353 = math.exp %352 : vector<2x128xf32>
    %cst_96 = arith.constant 1.000000e+00 : f32
    %354 = vector.broadcast %cst_96 : f32 to vector<2x128xf32>
    %355 = arith.addf %354, %353 : vector<2x128xf32>
    %356 = arith.divf %354, %355 : vector<2x128xf32>
    %357 = vector.extract_strided_slice %344 {offsets = [0, 256], sizes = [2, 128], strides = [1, 1]} : vector<2x512xf32> to vector<2x128xf32>
    %358 = math.tanh %357 : vector<2x128xf32>
    %359 = vector.extract_strided_slice %344 {offsets = [0, 384], sizes = [2, 128], strides = [1, 1]} : vector<2x512xf32> to vector<2x128xf32>
    %360 = arith.negf %359 : vector<2x128xf32>
    %361 = math.exp %360 : vector<2x128xf32>
    %cst_97 = arith.constant 1.000000e+00 : f32
    %362 = vector.broadcast %cst_97 : f32 to vector<2x128xf32>
    %363 = arith.addf %362, %361 : vector<2x128xf32>
    %364 = arith.divf %362, %363 : vector<2x128xf32>
    %365 = arith.mulf %356, %296 : vector<2x128xf32>
    %366 = arith.mulf %350, %358 : vector<2x128xf32>
    %367 = arith.addf %365, %366 : vector<2x128xf32>
    %368 = math.tanh %367 : vector<2x128xf32>
    %369 = arith.mulf %364, %368 : vector<2x128xf32>
    %370 = arith.index_cast %c4_i32 : i32 to index
    %c0_98 = arith.constant 0 : index
    %c0_99 = arith.constant 0 : index
    %371 = vector.load %arg17[%370, %c0_98, %c0_99] : memref<8x2x128xf32, #tpu.memory_space<vmem>>, vector<1x2x128xf32>
    %372 = vector.shape_cast %371 : vector<1x2x128xf32> to vector<2x128xf32>
    %373 = vector.shape_cast %340 : vector<2x128xf32> to vector<1x2x128xf32>
    tpu.vector_store %arg17[%370, %c0_98, %c0_99], %373 {strides = array<i32>} : memref<8x2x128xf32, #tpu.memory_space<vmem>>, vector<1x2x128xf32>,
    %374 = arith.index_cast %307 : i32 to index
    %c0_100 = arith.constant 0 : index
    %c0_101 = arith.constant 0 : index
    %375 = vector.load %arg18[%374, %c0_100, %c0_101] : memref<8x2x128xf32, #tpu.memory_space<vmem>>, vector<1x2x128xf32>
    %376 = vector.shape_cast %375 : vector<1x2x128xf32> to vector<2x128xf32>
    %377 = vector.shape_cast %369 : vector<2x128xf32> to vector<1x2x128xf32>
    tpu.vector_store %arg18[%374, %c0_100, %c0_101], %377 {strides = array<i32>} : memref<8x2x128xf32, #tpu.memory_space<vmem>>, vector<1x2x128xf32>,
    %c5_i32 = arith.constant 5 : i32
    %c7_i32_102 = arith.constant 7 : i32
    %378 = arith.subi %c7_i32_102, %c5_i32 : i32
    %379 = tpu.concatenate %340, %369 in 1 : vector<2x128xf32>, vector<2x128xf32> -> vector<2x256xf32>
    %cst_103 = arith.constant dense<0.000000e+00> : vector<2x1024xf32>
    %380 = tpu.matmul %379, %20, %cst_103 {dimension_numbers = #tpu.dot_dimension_numbers<[1], [0], [0], [1], [0, 0, 1, 1], [], []>} : vector<2x256xf32>, vector<256x1024xf32>, vector<2x1024xf32> -> vector<2x1024xf32>
    %381 = vector.extract_strided_slice %380 {offsets = [0, 0], sizes = [2, 512], strides = [1, 1]} : vector<2x1024xf32> to vector<2x512xf32>
    %382 = vector.extract_strided_slice %380 {offsets = [0, 512], sizes = [2, 512], strides = [1, 1]} : vector<2x1024xf32> to vector<2x512xf32>
    %383 = arith.index_cast %c5_i32 : i32 to index
    %c0_104 = arith.constant 0 : index
    %c0_105 = arith.constant 0 : index
    %384 = vector.load %arg15[%383, %c0_104, %c0_105] : memref<8x2x512xf32, #tpu.memory_space<vmem>>, vector<1x2x512xf32>
    %385 = vector.shape_cast %384 : vector<1x2x512xf32> to vector<2x512xf32>
    %386 = arith.addf %381, %385 : vector<2x512xf32>
    %387 = vector.extract_strided_slice %386 {offsets = [0, 0], sizes = [2, 128], strides = [1, 1]} : vector<2x512xf32> to vector<2x128xf32>
    %388 = arith.negf %387 : vector<2x128xf32>
    %389 = math.exp %388 : vector<2x128xf32>
    %cst_106 = arith.constant 1.000000e+00 : f32
    %390 = vector.broadcast %cst_106 : f32 to vector<2x128xf32>
    %391 = arith.addf %390, %389 : vector<2x128xf32>
    %392 = arith.divf %390, %391 : vector<2x128xf32>
    %393 = vector.extract_strided_slice %386 {offsets = [0, 128], sizes = [2, 128], strides = [1, 1]} : vector<2x512xf32> to vector<2x128xf32>
    %394 = arith.negf %393 : vector<2x128xf32>
    %395 = math.exp %394 : vector<2x128xf32>
    %cst_107 = arith.constant 1.000000e+00 : f32
    %396 = vector.broadcast %cst_107 : f32 to vector<2x128xf32>
    %397 = arith.addf %396, %395 : vector<2x128xf32>
    %398 = arith.divf %396, %397 : vector<2x128xf32>
    %399 = vector.extract_strided_slice %386 {offsets = [0, 256], sizes = [2, 128], strides = [1, 1]} : vector<2x512xf32> to vector<2x128xf32>
    %400 = math.tanh %399 : vector<2x128xf32>
    %401 = vector.extract_strided_slice %386 {offsets = [0, 384], sizes = [2, 128], strides = [1, 1]} : vector<2x512xf32> to vector<2x128xf32>
    %402 = arith.negf %401 : vector<2x128xf32>
    %403 = math.exp %402 : vector<2x128xf32>
    %cst_108 = arith.constant 1.000000e+00 : f32
    %404 = vector.broadcast %cst_108 : f32 to vector<2x128xf32>
    %405 = arith.addf %404, %403 : vector<2x128xf32>
    %406 = arith.divf %404, %405 : vector<2x128xf32>
    %407 = arith.mulf %398, %338 : vector<2x128xf32>
    %408 = arith.mulf %392, %400 : vector<2x128xf32>
    %409 = arith.addf %407, %408 : vector<2x128xf32>
    %410 = math.tanh %409 : vector<2x128xf32>
    %411 = arith.mulf %406, %410 : vector<2x128xf32>
    %412 = arith.index_cast %378 : i32 to index
    %c0_109 = arith.constant 0 : index
    %c0_110 = arith.constant 0 : index
    %413 = vector.load %arg16[%412, %c0_109, %c0_110] : memref<8x2x512xf32, #tpu.memory_space<vmem>>, vector<1x2x512xf32>
    %414 = vector.shape_cast %413 : vector<1x2x512xf32> to vector<2x512xf32>
    %415 = arith.addf %382, %414 : vector<2x512xf32>
    %416 = vector.extract_strided_slice %415 {offsets = [0, 0], sizes = [2, 128], strides = [1, 1]} : vector<2x512xf32> to vector<2x128xf32>
    %417 = arith.negf %416 : vector<2x128xf32>
    %418 = math.exp %417 : vector<2x128xf32>
    %cst_111 = arith.constant 1.000000e+00 : f32
    %419 = vector.broadcast %cst_111 : f32 to vector<2x128xf32>
    %420 = arith.addf %419, %418 : vector<2x128xf32>
    %421 = arith.divf %419, %420 : vector<2x128xf32>
    %422 = vector.extract_strided_slice %415 {offsets = [0, 128], sizes = [2, 128], strides = [1, 1]} : vector<2x512xf32> to vector<2x128xf32>
    %423 = arith.negf %422 : vector<2x128xf32>
    %424 = math.exp %423 : vector<2x128xf32>
    %cst_112 = arith.constant 1.000000e+00 : f32
    %425 = vector.broadcast %cst_112 : f32 to vector<2x128xf32>
    %426 = arith.addf %425, %424 : vector<2x128xf32>
    %427 = arith.divf %425, %426 : vector<2x128xf32>
    %428 = vector.extract_strided_slice %415 {offsets = [0, 256], sizes = [2, 128], strides = [1, 1]} : vector<2x512xf32> to vector<2x128xf32>
    %429 = math.tanh %428 : vector<2x128xf32>
    %430 = vector.extract_strided_slice %415 {offsets = [0, 384], sizes = [2, 128], strides = [1, 1]} : vector<2x512xf32> to vector<2x128xf32>
    %431 = arith.negf %430 : vector<2x128xf32>
    %432 = math.exp %431 : vector<2x128xf32>
    %cst_113 = arith.constant 1.000000e+00 : f32
    %433 = vector.broadcast %cst_113 : f32 to vector<2x128xf32>
    %434 = arith.addf %433, %432 : vector<2x128xf32>
    %435 = arith.divf %433, %434 : vector<2x128xf32>
    %436 = arith.mulf %427, %367 : vector<2x128xf32>
    %437 = arith.mulf %421, %429 : vector<2x128xf32>
    %438 = arith.addf %436, %437 : vector<2x128xf32>
    %439 = math.tanh %438 : vector<2x128xf32>
    %440 = arith.mulf %435, %439 : vector<2x128xf32>
    %441 = arith.index_cast %c5_i32 : i32 to index
    %c0_114 = arith.constant 0 : index
    %c0_115 = arith.constant 0 : index
    %442 = vector.load %arg17[%441, %c0_114, %c0_115] : memref<8x2x128xf32, #tpu.memory_space<vmem>>, vector<1x2x128xf32>
    %443 = vector.shape_cast %442 : vector<1x2x128xf32> to vector<2x128xf32>
    %444 = vector.shape_cast %411 : vector<2x128xf32> to vector<1x2x128xf32>
    tpu.vector_store %arg17[%441, %c0_114, %c0_115], %444 {strides = array<i32>} : memref<8x2x128xf32, #tpu.memory_space<vmem>>, vector<1x2x128xf32>,
    %445 = arith.index_cast %378 : i32 to index
    %c0_116 = arith.constant 0 : index
    %c0_117 = arith.constant 0 : index
    %446 = vector.load %arg18[%445, %c0_116, %c0_117] : memref<8x2x128xf32, #tpu.memory_space<vmem>>, vector<1x2x128xf32>
    %447 = vector.shape_cast %446 : vector<1x2x128xf32> to vector<2x128xf32>
    %448 = vector.shape_cast %440 : vector<2x128xf32> to vector<1x2x128xf32>
    tpu.vector_store %arg18[%445, %c0_116, %c0_117], %448 {strides = array<i32>} : memref<8x2x128xf32, #tpu.memory_space<vmem>>, vector<1x2x128xf32>,
    %c6_i32 = arith.constant 6 : i32
    %c7_i32_118 = arith.constant 7 : i32
    %449 = arith.subi %c7_i32_118, %c6_i32 : i32
    %450 = tpu.concatenate %411, %440 in 1 : vector<2x128xf32>, vector<2x128xf32> -> vector<2x256xf32>
    %cst_119 = arith.constant dense<0.000000e+00> : vector<2x1024xf32>
    %451 = tpu.matmul %450, %20, %cst_119 {dimension_numbers = #tpu.dot_dimension_numbers<[1], [0], [0], [1], [0, 0, 1, 1], [], []>} : vector<2x256xf32>, vector<256x1024xf32>, vector<2x1024xf32> -> vector<2x1024xf32>
    %452 = vector.extract_strided_slice %451 {offsets = [0, 0], sizes = [2, 512], strides = [1, 1]} : vector<2x1024xf32> to vector<2x512xf32>
    %453 = vector.extract_strided_slice %451 {offsets = [0, 512], sizes = [2, 512], strides = [1, 1]} : vector<2x1024xf32> to vector<2x512xf32>
    %454 = arith.index_cast %c6_i32 : i32 to index
    %c0_120 = arith.constant 0 : index
    %c0_121 = arith.constant 0 : index
    %455 = vector.load %arg15[%454, %c0_120, %c0_121] : memref<8x2x512xf32, #tpu.memory_space<vmem>>, vector<1x2x512xf32>
    %456 = vector.shape_cast %455 : vector<1x2x512xf32> to vector<2x512xf32>
    %457 = arith.addf %452, %456 : vector<2x512xf32>
    %458 = vector.extract_strided_slice %457 {offsets = [0, 0], sizes = [2, 128], strides = [1, 1]} : vector<2x512xf32> to vector<2x128xf32>
    %459 = arith.negf %458 : vector<2x128xf32>
    %460 = math.exp %459 : vector<2x128xf32>
    %cst_122 = arith.constant 1.000000e+00 : f32
    %461 = vector.broadcast %cst_122 : f32 to vector<2x128xf32>
    %462 = arith.addf %461, %460 : vector<2x128xf32>
    %463 = arith.divf %461, %462 : vector<2x128xf32>
    %464 = vector.extract_strided_slice %457 {offsets = [0, 128], sizes = [2, 128], strides = [1, 1]} : vector<2x512xf32> to vector<2x128xf32>
    %465 = arith.negf %464 : vector<2x128xf32>
    %466 = math.exp %465 : vector<2x128xf32>
    %cst_123 = arith.constant 1.000000e+00 : f32
    %467 = vector.broadcast %cst_123 : f32 to vector<2x128xf32>
    %468 = arith.addf %467, %466 : vector<2x128xf32>
    %469 = arith.divf %467, %468 : vector<2x128xf32>
    %470 = vector.extract_strided_slice %457 {offsets = [0, 256], sizes = [2, 128], strides = [1, 1]} : vector<2x512xf32> to vector<2x128xf32>
    %471 = math.tanh %470 : vector<2x128xf32>
    %472 = vector.extract_strided_slice %457 {offsets = [0, 384], sizes = [2, 128], strides = [1, 1]} : vector<2x512xf32> to vector<2x128xf32>
    %473 = arith.negf %472 : vector<2x128xf32>
    %474 = math.exp %473 : vector<2x128xf32>
    %cst_124 = arith.constant 1.000000e+00 : f32
    %475 = vector.broadcast %cst_124 : f32 to vector<2x128xf32>
    %476 = arith.addf %475, %474 : vector<2x128xf32>
    %477 = arith.divf %475, %476 : vector<2x128xf32>
    %478 = arith.mulf %469, %409 : vector<2x128xf32>
    %479 = arith.mulf %463, %471 : vector<2x128xf32>
    %480 = arith.addf %478, %479 : vector<2x128xf32>
    %481 = math.tanh %480 : vector<2x128xf32>
    %482 = arith.mulf %477, %481 : vector<2x128xf32>
    %483 = arith.index_cast %449 : i32 to index
    %c0_125 = arith.constant 0 : index
    %c0_126 = arith.constant 0 : index
    %484 = vector.load %arg16[%483, %c0_125, %c0_126] : memref<8x2x512xf32, #tpu.memory_space<vmem>>, vector<1x2x512xf32>
    %485 = vector.shape_cast %484 : vector<1x2x512xf32> to vector<2x512xf32>
    %486 = arith.addf %453, %485 : vector<2x512xf32>
    %487 = vector.extract_strided_slice %486 {offsets = [0, 0], sizes = [2, 128], strides = [1, 1]} : vector<2x512xf32> to vector<2x128xf32>
    %488 = arith.negf %487 : vector<2x128xf32>
    %489 = math.exp %488 : vector<2x128xf32>
    %cst_127 = arith.constant 1.000000e+00 : f32
    %490 = vector.broadcast %cst_127 : f32 to vector<2x128xf32>
    %491 = arith.addf %490, %489 : vector<2x128xf32>
    %492 = arith.divf %490, %491 : vector<2x128xf32>
    %493 = vector.extract_strided_slice %486 {offsets = [0, 128], sizes = [2, 128], strides = [1, 1]} : vector<2x512xf32> to vector<2x128xf32>
    %494 = arith.negf %493 : vector<2x128xf32>
    %495 = math.exp %494 : vector<2x128xf32>
    %cst_128 = arith.constant 1.000000e+00 : f32
    %496 = vector.broadcast %cst_128 : f32 to vector<2x128xf32>
    %497 = arith.addf %496, %495 : vector<2x128xf32>
    %498 = arith.divf %496, %497 : vector<2x128xf32>
    %499 = vector.extract_strided_slice %486 {offsets = [0, 256], sizes = [2, 128], strides = [1, 1]} : vector<2x512xf32> to vector<2x128xf32>
    %500 = math.tanh %499 : vector<2x128xf32>
    %501 = vector.extract_strided_slice %486 {offsets = [0, 384], sizes = [2, 128], strides = [1, 1]} : vector<2x512xf32> to vector<2x128xf32>
    %502 = arith.negf %501 : vector<2x128xf32>
    %503 = math.exp %502 : vector<2x128xf32>
    %cst_129 = arith.constant 1.000000e+00 : f32
    %504 = vector.broadcast %cst_129 : f32 to vector<2x128xf32>
    %505 = arith.addf %504, %503 : vector<2x128xf32>
    %506 = arith.divf %504, %505 : vector<2x128xf32>
    %507 = arith.mulf %498, %438 : vector<2x128xf32>
    %508 = arith.mulf %492, %500 : vector<2x128xf32>
    %509 = arith.addf %507, %508 : vector<2x128xf32>
    %510 = math.tanh %509 : vector<2x128xf32>
    %511 = arith.mulf %506, %510 : vector<2x128xf32>
    %512 = arith.index_cast %c6_i32 : i32 to index
    %c0_130 = arith.constant 0 : index
    %c0_131 = arith.constant 0 : index
    %513 = vector.load %arg17[%512, %c0_130, %c0_131] : memref<8x2x128xf32, #tpu.memory_space<vmem>>, vector<1x2x128xf32>
    %514 = vector.shape_cast %513 : vector<1x2x128xf32> to vector<2x128xf32>
    %515 = vector.shape_cast %482 : vector<2x128xf32> to vector<1x2x128xf32>
    tpu.vector_store %arg17[%512, %c0_130, %c0_131], %515 {strides = array<i32>} : memref<8x2x128xf32, #tpu.memory_space<vmem>>, vector<1x2x128xf32>,
    %516 = arith.index_cast %449 : i32 to index
    %c0_132 = arith.constant 0 : index
    %c0_133 = arith.constant 0 : index
    %517 = vector.load %arg18[%516, %c0_132, %c0_133] : memref<8x2x128xf32, #tpu.memory_space<vmem>>, vector<1x2x128xf32>
    %518 = vector.shape_cast %517 : vector<1x2x128xf32> to vector<2x128xf32>
    %519 = vector.shape_cast %511 : vector<2x128xf32> to vector<1x2x128xf32>
    tpu.vector_store %arg18[%516, %c0_132, %c0_133], %519 {strides = array<i32>} : memref<8x2x128xf32, #tpu.memory_space<vmem>>, vector<1x2x128xf32>,
    %c7_i32_134 = arith.constant 7 : i32
    %c7_i32_135 = arith.constant 7 : i32
    %520 = arith.subi %c7_i32_135, %c7_i32_134 : i32
    %521 = tpu.concatenate %482, %511 in 1 : vector<2x128xf32>, vector<2x128xf32> -> vector<2x256xf32>
    %cst_136 = arith.constant dense<0.000000e+00> : vector<2x1024xf32>
    %522 = tpu.matmul %521, %20, %cst_136 {dimension_numbers = #tpu.dot_dimension_numbers<[1], [0], [0], [1], [0, 0, 1, 1], [], []>} : vector<2x256xf32>, vector<256x1024xf32>, vector<2x1024xf32> -> vector<2x1024xf32>
    %523 = vector.extract_strided_slice %522 {offsets = [0, 0], sizes = [2, 512], strides = [1, 1]} : vector<2x1024xf32> to vector<2x512xf32>
    %524 = vector.extract_strided_slice %522 {offsets = [0, 512], sizes = [2, 512], strides = [1, 1]} : vector<2x1024xf32> to vector<2x512xf32>
    %525 = arith.index_cast %c7_i32_134 : i32 to index
    %c0_137 = arith.constant 0 : index
    %c0_138 = arith.constant 0 : index
    %526 = vector.load %arg15[%525, %c0_137, %c0_138] : memref<8x2x512xf32, #tpu.memory_space<vmem>>, vector<1x2x512xf32>
    %527 = vector.shape_cast %526 : vector<1x2x512xf32> to vector<2x512xf32>
    %528 = arith.addf %523, %527 : vector<2x512xf32>
    %529 = vector.extract_strided_slice %528 {offsets = [0, 0], sizes = [2, 128], strides = [1, 1]} : vector<2x512xf32> to vector<2x128xf32>
    %530 = arith.negf %529 : vector<2x128xf32>
    %531 = math.exp %530 : vector<2x128xf32>
    %cst_139 = arith.constant 1.000000e+00 : f32
    %532 = vector.broadcast %cst_139 : f32 to vector<2x128xf32>
    %533 = arith.addf %532, %531 : vector<2x128xf32>
    %534 = arith.divf %532, %533 : vector<2x128xf32>
    %535 = vector.extract_strided_slice %528 {offsets = [0, 128], sizes = [2, 128], strides = [1, 1]} : vector<2x512xf32> to vector<2x128xf32>
    %536 = arith.negf %535 : vector<2x128xf32>
    %537 = math.exp %536 : vector<2x128xf32>
    %cst_140 = arith.constant 1.000000e+00 : f32
    %538 = vector.broadcast %cst_140 : f32 to vector<2x128xf32>
    %539 = arith.addf %538, %537 : vector<2x128xf32>
    %540 = arith.divf %538, %539 : vector<2x128xf32>
    %541 = vector.extract_strided_slice %528 {offsets = [0, 256], sizes = [2, 128], strides = [1, 1]} : vector<2x512xf32> to vector<2x128xf32>
    %542 = math.tanh %541 : vector<2x128xf32>
    %543 = vector.extract_strided_slice %528 {offsets = [0, 384], sizes = [2, 128], strides = [1, 1]} : vector<2x512xf32> to vector<2x128xf32>
    %544 = arith.negf %543 : vector<2x128xf32>
    %545 = math.exp %544 : vector<2x128xf32>
    %cst_141 = arith.constant 1.000000e+00 : f32
    %546 = vector.broadcast %cst_141 : f32 to vector<2x128xf32>
    %547 = arith.addf %546, %545 : vector<2x128xf32>
    %548 = arith.divf %546, %547 : vector<2x128xf32>
    %549 = arith.mulf %540, %480 : vector<2x128xf32>
    %550 = arith.mulf %534, %542 : vector<2x128xf32>
    %551 = arith.addf %549, %550 : vector<2x128xf32>
    %552 = math.tanh %551 : vector<2x128xf32>
    %553 = arith.mulf %548, %552 : vector<2x128xf32>
    %554 = arith.index_cast %520 : i32 to index
    %c0_142 = arith.constant 0 : index
    %c0_143 = arith.constant 0 : index
    %555 = vector.load %arg16[%554, %c0_142, %c0_143] : memref<8x2x512xf32, #tpu.memory_space<vmem>>, vector<1x2x512xf32>
    %556 = vector.shape_cast %555 : vector<1x2x512xf32> to vector<2x512xf32>
    %557 = arith.addf %524, %556 : vector<2x512xf32>
    %558 = vector.extract_strided_slice %557 {offsets = [0, 0], sizes = [2, 128], strides = [1, 1]} : vector<2x512xf32> to vector<2x128xf32>
    %559 = arith.negf %558 : vector<2x128xf32>
    %560 = math.exp %559 : vector<2x128xf32>
    %cst_144 = arith.constant 1.000000e+00 : f32
    %561 = vector.broadcast %cst_144 : f32 to vector<2x128xf32>
    %562 = arith.addf %561, %560 : vector<2x128xf32>
    %563 = arith.divf %561, %562 : vector<2x128xf32>
    %564 = vector.extract_strided_slice %557 {offsets = [0, 128], sizes = [2, 128], strides = [1, 1]} : vector<2x512xf32> to vector<2x128xf32>
    %565 = arith.negf %564 : vector<2x128xf32>
    %566 = math.exp %565 : vector<2x128xf32>
    %cst_145 = arith.constant 1.000000e+00 : f32
    %567 = vector.broadcast %cst_145 : f32 to vector<2x128xf32>
    %568 = arith.addf %567, %566 : vector<2x128xf32>
    %569 = arith.divf %567, %568 : vector<2x128xf32>
    %570 = vector.extract_strided_slice %557 {offsets = [0, 256], sizes = [2, 128], strides = [1, 1]} : vector<2x512xf32> to vector<2x128xf32>
    %571 = math.tanh %570 : vector<2x128xf32>
    %572 = vector.extract_strided_slice %557 {offsets = [0, 384], sizes = [2, 128], strides = [1, 1]} : vector<2x512xf32> to vector<2x128xf32>
    %573 = arith.negf %572 : vector<2x128xf32>
    %574 = math.exp %573 : vector<2x128xf32>
    %cst_146 = arith.constant 1.000000e+00 : f32
    %575 = vector.broadcast %cst_146 : f32 to vector<2x128xf32>
    %576 = arith.addf %575, %574 : vector<2x128xf32>
    %577 = arith.divf %575, %576 : vector<2x128xf32>
    %578 = arith.mulf %569, %509 : vector<2x128xf32>
    %579 = arith.mulf %563, %571 : vector<2x128xf32>
    %580 = arith.addf %578, %579 : vector<2x128xf32>
    %581 = math.tanh %580 : vector<2x128xf32>
    %582 = arith.mulf %577, %581 : vector<2x128xf32>
    %583 = arith.index_cast %c7_i32_134 : i32 to index
    %c0_147 = arith.constant 0 : index
    %c0_148 = arith.constant 0 : index
    %584 = vector.load %arg17[%583, %c0_147, %c0_148] : memref<8x2x128xf32, #tpu.memory_space<vmem>>, vector<1x2x128xf32>
    %585 = vector.shape_cast %584 : vector<1x2x128xf32> to vector<2x128xf32>
    %586 = vector.shape_cast %553 : vector<2x128xf32> to vector<1x2x128xf32>
    tpu.vector_store %arg17[%583, %c0_147, %c0_148], %586 {strides = array<i32>} : memref<8x2x128xf32, #tpu.memory_space<vmem>>, vector<1x2x128xf32>,
    %587 = arith.index_cast %520 : i32 to index
    %c0_149 = arith.constant 0 : index
    %c0_150 = arith.constant 0 : index
    %588 = vector.load %arg18[%587, %c0_149, %c0_150] : memref<8x2x128xf32, #tpu.memory_space<vmem>>, vector<1x2x128xf32>
    %589 = vector.shape_cast %588 : vector<1x2x128xf32> to vector<2x128xf32>
    %590 = vector.shape_cast %582 : vector<2x128xf32> to vector<1x2x128xf32>
    tpu.vector_store %arg18[%587, %c0_149, %c0_150], %590 {strides = array<i32>} : memref<8x2x128xf32, #tpu.memory_space<vmem>>, vector<1x2x128xf32>,
    %c8_i32 = arith.constant 8 : i32
    %c0_151 = arith.constant 0 : index
    %c0_152 = arith.constant 0 : index
    %591 = vector.load %arg9[%c0_151, %c0_152] : memref<1x128xf32, #tpu.memory_space<vmem>>, vector<1x128xf32>
    %c0_153 = arith.constant 0 : index
    %c0_154 = arith.constant 0 : index
    %592 = vector.load %arg10[%c0_153, %c0_154] : memref<1x128xf32, #tpu.memory_space<vmem>>, vector<1x128xf32>
    %c0_155 = arith.constant 0 : index
    %c0_156 = arith.constant 0 : index
    %c0_157 = arith.constant 0 : index
    %593 = vector.load %arg17[%c0_155, %c0_156, %c0_157] : memref<8x2x128xf32, #tpu.memory_space<vmem>>, vector<8x2x128xf32>
    %594 = vector.shape_cast %591 : vector<1x128xf32> to vector<1x1x128xf32>
    %595 = vector.broadcast %594 : vector<1x1x128xf32> to vector<8x2x128xf32>
    %596 = arith.mulf %593, %595 : vector<8x2x128xf32>
    %cst_158 = arith.constant dense<0.000000e+00> : vector<8x2xf32>
    %597 = vector.multi_reduction <add>, %596, %cst_158 [2] : vector<8x2x128xf32> to vector<8x2xf32>
    %c0_159 = arith.constant 0 : index
    %c0_160 = arith.constant 0 : index
    %c0_161 = arith.constant 0 : index
    %598 = vector.load %arg18[%c0_159, %c0_160, %c0_161] : memref<8x2x128xf32, #tpu.memory_space<vmem>>, vector<8x2x128xf32>
    %599 = vector.shape_cast %592 : vector<1x128xf32> to vector<1x1x128xf32>
    %600 = vector.broadcast %599 : vector<1x1x128xf32> to vector<8x2x128xf32>
    %601 = arith.mulf %598, %600 : vector<8x2x128xf32>
    %cst_162 = arith.constant dense<0.000000e+00> : vector<8x2xf32>
    %602 = vector.multi_reduction <add>, %601, %cst_162 [2] : vector<8x2x128xf32> to vector<8x2xf32>
    %603 = arith.addf %597, %602 : vector<8x2xf32>
    %c0_163 = arith.constant 0 : index
    %c0_164 = arith.constant 0 : index
    %604 = vector.load %arg11[%c0_163, %c0_164] : memref<1x1xf32, #tpu.memory_space<vmem>>, vector<1x1xf32>
    %605 = vector.broadcast %604 : vector<1x1xf32> to vector<8x2xf32>
    %606 = arith.addf %603, %605 : vector<8x2xf32>
    %c0_165 = arith.constant 0 : index
    %c0_166 = arith.constant 0 : index
    %607 = vector.load %arg2[%c0_165, %c0_166] : memref<8x2xf32, #tpu.memory_space<vmem>>, vector<8x2xf32>
    %cst_167 = arith.constant 0.000000e+00 : f32
    %608 = vector.broadcast %cst_167 : f32 to vector<8x2xf32>
    %609 = arith.cmpf oeq, %607, %608 : vector<8x2xf32>
    %cst_168 = arith.constant -1.000000e+09 : f32
    %610 = vector.broadcast %cst_168 : f32 to vector<8x2xf32>
    %611 = arith.select %609, %610, %606 : vector<8x2xi1>, vector<8x2xf32>
    %c0_169 = arith.constant 0 : index
    %c0_170 = arith.constant 0 : index
    %612 = vector.load %arg3[%c0_169, %c0_170] : memref<8x2xf32, #tpu.memory_space<vmem>>, vector<8x2xf32>
    %613 = arith.mulf %611, %612 : vector<8x2xf32>
    %cst_171 = arith.constant dense<0xFF800000> : vector<2xf32>
    %614 = vector.multi_reduction <maximumf>, %613, %cst_171 [0] : vector<8x2xf32> to vector<2xf32>
    %615 = vector.shape_cast %614 : vector<2xf32> to vector<1x2xf32>
    %616 = vector.broadcast %615 : vector<1x2xf32> to vector<8x2xf32>
    %617 = arith.subf %613, %616 : vector<8x2xf32>
    %618 = math.exp %617 : vector<8x2xf32>
    %cst_172 = arith.constant dense<0.000000e+00> : vector<2xf32>
    %619 = vector.multi_reduction <add>, %618, %cst_172 [0] : vector<8x2xf32> to vector<2xf32>
    %620 = vector.shape_cast %619 : vector<2xf32> to vector<1x2xf32>
    %621 = vector.broadcast %620 : vector<1x2xf32> to vector<8x2xf32>
    %622 = arith.divf %618, %621 : vector<8x2xf32>
    %cst_173 = arith.constant 0.000000e+00 : f32
    %623 = vector.broadcast %cst_173 : f32 to vector<2x128xf32>
    %cst_174 = arith.constant 0.000000e+00 : f32
    %624 = vector.broadcast %cst_174 : f32 to vector<2x128xf32>
    %625 = vector.shape_cast %622 : vector<8x2xf32> to vector<8x2x1xf32>
    %c0_175 = arith.constant 0 : index
    %c0_176 = arith.constant 0 : index
    %c0_177 = arith.constant 0 : index
    %626 = vector.load %arg17[%c0_175, %c0_176, %c0_177] : memref<8x2x128xf32, #tpu.memory_space<vmem>>, vector<8x2x128xf32>
    %627 = vector.broadcast %625 : vector<8x2x1xf32> to vector<8x2x128xf32>
    %628 = arith.mulf %626, %627 : vector<8x2x128xf32>
    %cst_178 = arith.constant dense<0.000000e+00> : vector<2x128xf32>
    %629 = vector.multi_reduction <add>, %628, %cst_178 [0] : vector<8x2x128xf32> to vector<2x128xf32>
    %630 = arith.addf %623, %629 : vector<2x128xf32>
    %c0_179 = arith.constant 0 : index
    %c0_180 = arith.constant 0 : index
    %c0_181 = arith.constant 0 : index
    %631 = vector.load %arg18[%c0_179, %c0_180, %c0_181] : memref<8x2x128xf32, #tpu.memory_space<vmem>>, vector<8x2x128xf32>
    %632 = vector.broadcast %625 : vector<8x2x1xf32> to vector<8x2x128xf32>
    %633 = arith.mulf %631, %632 : vector<8x2x128xf32>
    %cst_182 = arith.constant dense<0.000000e+00> : vector<2x128xf32>
    %634 = vector.multi_reduction <add>, %633, %cst_182 [0] : vector<8x2x128xf32> to vector<2x128xf32>
    %635 = arith.addf %624, %634 : vector<2x128xf32>
    %636 = tpu.concatenate %630, %635 in 1 : vector<2x128xf32>, vector<2x128xf32> -> vector<2x256xf32>
    %c0_183 = arith.constant 0 : index
    %c0_184 = arith.constant 0 : index
    %637 = vector.load %arg12[%c0_183, %c0_184] : memref<256x128xf32, #tpu.memory_space<vmem>>, vector<256x128xf32>
    %cst_185 = arith.constant dense<0.000000e+00> : vector<2x128xf32>
    %638 = tpu.matmul %636, %637, %cst_185 {dimension_numbers = #tpu.dot_dimension_numbers<[1], [0], [0], [1], [0, 0, 1, 1], [], []>} : vector<2x256xf32>, vector<256x128xf32>, vector<2x128xf32> -> vector<2x128xf32>
    %c0_186 = arith.constant 0 : index
    %c0_187 = arith.constant 0 : index
    %639 = vector.load %arg13[%c0_186, %c0_187] : memref<1x128xf32, #tpu.memory_space<vmem>>, vector<1x128xf32>
    %640 = vector.broadcast %639 : vector<1x128xf32> to vector<2x128xf32>
    %641 = arith.addf %638, %640 : vector<2x128xf32>
    %c0_188 = arith.constant 0 : index
    %c0_189 = arith.constant 0 : index
    %642 = vector.load %arg14[%c0_188, %c0_189] : memref<2x128xf32, #tpu.memory_space<vmem>>, vector<2x128xf32>
    tpu.vector_store %arg14[%c0_188, %c0_189], %641 {strides = array<i32>} : memref<2x128xf32, #tpu.memory_space<vmem>>, vector<2x128xf32>,
    return
  }
  func.func @transform_0(%arg0: i32) -> (i32, i32, i32) {
    %c0_i32 = arith.constant 0 : i32
    %c0_i32_0 = arith.constant 0 : i32
    %c0_i32_1 = arith.constant 0 : i32
    return %c0_i32, %arg0, %c0_i32_0 : i32, i32, i32
  }
  func.func @transform_1(%arg0: i32) -> (i32, i32) {
    %c0_i32 = arith.constant 0 : i32
    %c0_i32_0 = arith.constant 0 : i32
    return %c0_i32, %arg0 : i32, i32
  }
  func.func @transform_2(%arg0: i32) -> (i32, i32) {
    %c0_i32 = arith.constant 0 : i32
    %c0_i32_0 = arith.constant 0 : i32
    return %c0_i32, %arg0 : i32, i32
  }
  func.func @transform_3(%arg0: i32) -> (i32, i32) {
    %c0_i32 = arith.constant 0 : i32
    %c0_i32_0 = arith.constant 0 : i32
    %c0_i32_1 = arith.constant 0 : i32
    return %c0_i32, %c0_i32_0 : i32, i32
  }
  func.func @transform_4(%arg0: i32) -> (i32, i32) {
    %c0_i32 = arith.constant 0 : i32
    %c0_i32_0 = arith.constant 0 : i32
    %c0_i32_1 = arith.constant 0 : i32
    return %c0_i32, %c0_i32_0 : i32, i32
  }
  func.func @transform_5(%arg0: i32) -> (i32, i32) {
    %c0_i32 = arith.constant 0 : i32
    %c0_i32_0 = arith.constant 0 : i32
    %c0_i32_1 = arith.constant 0 : i32
    return %c0_i32, %c0_i32_0 : i32, i32
  }
  func.func @transform_6(%arg0: i32) -> (i32, i32) {
    %c0_i32 = arith.constant 0 : i32
    %c0_i32_0 = arith.constant 0 : i32
    %c0_i32_1 = arith.constant 0 : i32
    return %c0_i32, %c0_i32_0 : i32, i32
  }
  func.func @transform_7(%arg0: i32) -> (i32, i32) {
    %c0_i32 = arith.constant 0 : i32
    %c0_i32_0 = arith.constant 0 : i32
    %c0_i32_1 = arith.constant 0 : i32
    return %c0_i32, %c0_i32_0 : i32, i32
  }
  func.func @transform_8(%arg0: i32) -> (i32, i32) {
    %c0_i32 = arith.constant 0 : i32
    %c0_i32_0 = arith.constant 0 : i32
    %c0_i32_1 = arith.constant 0 : i32
    return %c0_i32, %c0_i32_0 : i32, i32
  }
  func.func @transform_9(%arg0: i32) -> (i32, i32) {
    %c0_i32 = arith.constant 0 : i32
    %c0_i32_0 = arith.constant 0 : i32
    %c0_i32_1 = arith.constant 0 : i32
    return %c0_i32, %c0_i32_0 : i32, i32
  }
  func.func @transform_10(%arg0: i32) -> (i32, i32) {
    %c0_i32 = arith.constant 0 : i32
    %c0_i32_0 = arith.constant 0 : i32
    %c0_i32_1 = arith.constant 0 : i32
    return %c0_i32, %c0_i32_0 : i32, i32
  }
  func.func @transform_11(%arg0: i32) -> (i32, i32) {
    %c0_i32 = arith.constant 0 : i32
    %c0_i32_0 = arith.constant 0 : i32
    %c0_i32_1 = arith.constant 0 : i32
    return %c0_i32, %c0_i32_0 : i32, i32
  }
  func.func @transform_12(%arg0: i32) -> (i32, i32) {
    %c0_i32 = arith.constant 0 : i32
    %c0_i32_0 = arith.constant 0 : i32
    %c0_i32_1 = arith.constant 0 : i32
    return %c0_i32, %c0_i32_0 : i32, i32
  }
  func.func @transform_13(%arg0: i32) -> (i32, i32) {
    %c0_i32 = arith.constant 0 : i32
    %c0_i32_0 = arith.constant 0 : i32
    return %arg0, %c0_i32 : i32, i32
  }
}

</mosaic_0001>

<llo_original>
// kernel: tpu_custom_call.1
$region0: #{tpu_custom_call.1}
  #allocation0 [shape = 'u32[]', space=smem, size = 0x4, offset = 0x4, fixed_abs, tag = 'smem constant byte address 0x4 - core index']
  #allocation1 [shape = 'u32[144,128]{1,0:T(1,128)}', space=vmem, size = 0x12000, scoped, tag = 'internal scratch']
  #allocation2 [shape = 'f32[8,2,512]{2,1,0:T(2,128)}', space=vmem, size = 0x8000, scoped, tag = 'scratch operand']
  #allocation3 [shape = 'f32[8,2,512]{2,1,0:T(2,128)}', space=vmem, size = 0x8000, scoped, tag = 'scratch operand']
  #allocation4 [shape = 'f32[8,2,128]{2,1,0:T(2,128)}', space=vmem, size = 0x2000, scoped, tag = 'scratch operand']
  #allocation5 [shape = 'f32[8,2,128]{2,1,0:T(2,128)}', space=vmem, size = 0x2000, scoped, tag = 'scratch operand']
  #allocation6 [shape = 'f32[1,1]{1,0:T(1,128)S(1)}', space=vmem, size = 0x200, scoped, tag = 'scoped memory for tpu_custom_call.1']
  %s0 = inlined_call_operand.vmem [shape: f32[8,2,16], index: 0, kind: input, shape index: {}]
  %s1 = inlined_call_operand.vmem [shape: f32[8,2], index: 1, kind: input, shape index: {}]
  %s2 = inlined_call_operand.vmem [shape: f32[8,2], index: 2, kind: input, shape index: {}]
  %s3 = inlined_call_operand.hbm [shape: f32[16,512], index: 3, kind: input, shape index: {}]
  %s4 = inlined_call_operand.hbm [shape: f32[16,512], index: 4, kind: input, shape index: {}]
  %s5 = inlined_call_operand.hbm [shape: f32[256,1024], index: 5, kind: input, shape index: {}]
  %s6 = inlined_call_operand.vmem [shape: f32[1,512], index: 6, kind: input, shape index: {}]
  %s7 = inlined_call_operand.vmem [shape: f32[1,512], index: 7, kind: input, shape index: {}]
  %s8 = inlined_call_operand.vmem [shape: f32[1,128], index: 8, kind: input, shape index: {}]
  %s9 = inlined_call_operand.vmem [shape: f32[1,128], index: 9, kind: input, shape index: {}]
  %s10 = inlined_call_operand.<no memory space> [shape: f32[1,1], index: 10, kind: input, shape index: {}]
  %s11 = inlined_call_operand.hbm [shape: f32[256,128], index: 11, kind: input, shape index: {}]
  %s12 = inlined_call_operand.vmem [shape: f32[1,128], index: 12, kind: input, shape index: {}]
  %s13 = inlined_call_operand.hbm [shape: f32[2,128], index: 13, kind: output, shape index: {}]
  %s14 = sld [smem:[#allocation0]]
  $region78: #{tpu_custom_call.1} parent=0
    _
  %s16 = ssub.s32 1, %s14
  %s17 = scalar_select 0, %s16, %s14
  %v18 = vstv %s10
  %19 = vst [vmem:[#allocation6] sm:$0x1] %v18
  $region1: #{tpu_custom_call.1} parent=0
    #allocation7 [shape = 'u8[32768]{0}', space=vmem, size = 0x8000, scoped, tag = 'input window, operand 3, single buffered']
    #allocation8 [shape = 's32[1]{0}', space=sflag, size = 0x4, scoped, tag = 'scoped memory for tpu_custom_call.1']
    #allocation9 [shape = 's32[1]{0}', space=sflag, size = 0x4, scoped, tag = 'scoped memory for tpu_custom_call.1']
    #allocation10 [shape = 'u8[32768]{0}', space=vmem, size = 0x8000, scoped, tag = 'input window, operand 4, single buffered']
    #allocation11 [shape = 's32[1]{0}', space=sflag, size = 0x4, scoped, tag = 'scoped memory for tpu_custom_call.1']
    #allocation12 [shape = 'u8[1048576]{0}', space=vmem, size = 0x100000, scoped, tag = 'input window, operand 5, single buffered']
    #allocation13 [shape = 'u8[131072]{0}', space=vmem, size = 0x20000, scoped, tag = 'input window, operand 11, single buffered']
    #allocation14 [shape = 's32[1]{0}', space=sflag, size = 0x4, scoped, tag = 'scoped memory for tpu_custom_call.1']
    #allocation15 [shape = 'u8[1024]{0}', space=vmem, size = 0x400, scoped, tag = 'output window, operand 0, single buffered']
    %20 = vsyncpa [#allocation8], 0
    %21 = vsyncpa [#allocation11], 0
    %22 = vsyncpa [#allocation14], 0
    %23 = vsyncpa [#allocation9], 0
    // Predicated region
    $region2: #{tpu_custom_call.1} parent=1 // pred_check
      _
    $region3: #{tpu_custom_call.1} parent=1 // pred_check_branch
      %25 = sbr.rel (0) target = $region5
    $region4: #{tpu_custom_call.1} parent=1 // pred_region
      _
    $region5: #{tpu_custom_call.1} parent=1 // pred_fallthru
      _
    // Predicated region
    $region6: #{tpu_custom_call.1} parent=1 // pred_check
      _
    $region7: #{tpu_custom_call.1} parent=1 // pred_check_branch
      %27 = sbr.rel (0) target = $region9
    $region8: #{tpu_custom_call.1} parent=1 // pred_region
      _
    $region9: #{tpu_custom_call.1} parent=1 // pred_fallthru
      _
    // Predicated region
    $region10: #{tpu_custom_call.1} parent=1 // pred_check
      _
    $region11: #{tpu_custom_call.1} parent=1 // pred_check_branch
      %29 = sbr.rel (0) target = $region13
    $region12: #{tpu_custom_call.1} parent=1 // pred_region
      _
    $region13: #{tpu_custom_call.1} parent=1 // pred_fallthru
      _
    // Predicated region
    $region14: #{tpu_custom_call.1} parent=1 // pred_check
      _
    $region15: #{tpu_custom_call.1} parent=1 // pred_check_branch
      %31 = sbr.rel (0) target = $region17
    $region16: #{tpu_custom_call.1} parent=1 // pred_region
      %s33 = ssub.s32 1024, 1024
      %34 = vsyncadd [#allocation8], %s33
      %s35 = sshll.u32 [#allocation7], 4
      %s36 = int_to_ptr.vmem [resolvable:$true] %s35
      %41 = dma.hbm_to_vmem [thread:$0]  %s3, 1024, %s36, [#allocation8], 512, 512, 32
    $region17: #{tpu_custom_call.1} parent=1 // pred_fallthru
      _
    // Predicated region
    $region18: #{tpu_custom_call.1} parent=1 // pred_check
      _
    $region19: #{tpu_custom_call.1} parent=1 // pred_check_branch
      %43 = sbr.rel (0) target = $region21
    $region20: #{tpu_custom_call.1} parent=1 // pred_region
      %s45 = ssub.s32 1024, 1024
      %46 = vsyncadd [#allocation11], %s45
      %s47 = sshll.u32 [#allocation10], 4
      %s48 = int_to_ptr.vmem [resolvable:$true] %s47
      %53 = dma.hbm_to_vmem [thread:$0]  %s4, 1024, %s48, [#allocation11], 512, 512, 32
    $region21: #{tpu_custom_call.1} parent=1 // pred_fallthru
      _
    // Predicated region
    $region22: #{tpu_custom_call.1} parent=1 // pred_check
      _
    $region23: #{tpu_custom_call.1} parent=1 // pred_check_branch
      %55 = sbr.rel (0) target = $region25
    $region24: #{tpu_custom_call.1} parent=1 // pred_region
      %s57 = ssub.s32 32768, 32768
      %58 = vsyncadd [#allocation11], %s57
      %s59 = sshll.u32 [#allocation12], 4
      %s60 = int_to_ptr.vmem [resolvable:$true] %s59
      %65 = dma.hbm_to_vmem [thread:$0]  %s5, 32768, %s60, [#allocation11], 1024, 1024, 64
    $region25: #{tpu_custom_call.1} parent=1 // pred_fallthru
      _
    // Predicated region
    $region26: #{tpu_custom_call.1} parent=1 // pred_check
      _
    $region27: #{tpu_custom_call.1} parent=1 // pred_check_branch
      %67 = sbr.rel (0) target = $region29
    $region28: #{tpu_custom_call.1} parent=1 // pred_region
      _
    $region29: #{tpu_custom_call.1} parent=1 // pred_fallthru
      _
    // Predicated region
    $region30: #{tpu_custom_call.1} parent=1 // pred_check
      _
    $region31: #{tpu_custom_call.1} parent=1 // pred_check_branch
      %69 = sbr.rel (0) target = $region33
    $region32: #{tpu_custom_call.1} parent=1 // pred_region
      _
    $region33: #{tpu_custom_call.1} parent=1 // pred_fallthru
      _
    // Predicated region
    $region34: #{tpu_custom_call.1} parent=1 // pred_check
      _
    $region35: #{tpu_custom_call.1} parent=1 // pred_check_branch
      %71 = sbr.rel (0) target = $region37
    $region36: #{tpu_custom_call.1} parent=1 // pred_region
      _
    $region37: #{tpu_custom_call.1} parent=1 // pred_fallthru
      _
    // Predicated region
    $region38: #{tpu_custom_call.1} parent=1 // pred_check
      _
    $region39: #{tpu_custom_call.1} parent=1 // pred_check_branch
      %73 = sbr.rel (0) target = $region41
    $region40: #{tpu_custom_call.1} parent=1 // pred_region
      _
    $region41: #{tpu_custom_call.1} parent=1 // pred_fallthru
      _
    // Predicated region
    $region42: #{tpu_custom_call.1} parent=1 // pred_check
      _
    $region43: #{tpu_custom_call.1} parent=1 // pred_check_branch
      %75 = sbr.rel (0) target = $region45
    $region44: #{tpu_custom_call.1} parent=1 // pred_region
      _
    $region45: #{tpu_custom_call.1} parent=1 // pred_fallthru
      _
    // Predicated region
    $region46: #{tpu_custom_call.1} parent=1 // pred_check
      _
    $region47: #{tpu_custom_call.1} parent=1 // pred_check_branch
      %77 = sbr.rel (0) target = $region49
    $region48: #{tpu_custom_call.1} parent=1 // pred_region
      %s79 = ssub.s32 4096, 4096
      %80 = vsyncadd [#allocation14], %s79
      %s81 = sshll.u32 [#allocation13], 4
      %s82 = int_to_ptr.vmem [resolvable:$true] %s81
      %87 = dma.hbm_to_vmem [thread:$0]  %s11, 4096, %s82, [#allocation14], 128, 128, 8
    $region49: #{tpu_custom_call.1} parent=1 // pred_fallthru
      _
    // Predicated region
    $region50: #{tpu_custom_call.1} parent=1 // pred_check
      _
    $region51: #{tpu_custom_call.1} parent=1 // pred_check_branch
      %89 = sbr.rel (0) target = $region53
    $region52: #{tpu_custom_call.1} parent=1 // pred_region
      _
    $region53: #{tpu_custom_call.1} parent=1 // pred_fallthru
      _
    // Predicated region
    $region54: #{tpu_custom_call.1} parent=1 // pred_check
      _
    $region55: #{tpu_custom_call.1} parent=1 // pred_check_branch
      %91 = sbr.rel (0) target = $region57
    $region56: #{tpu_custom_call.1} parent=1 // pred_region
      %92 = dma.done [#allocation8], 1024
    $region57: #{tpu_custom_call.1} parent=1 // pred_fallthru
      _
    // Predicated region
    $region58: #{tpu_custom_call.1} parent=1 // pred_check
      _
    $region59: #{tpu_custom_call.1} parent=1 // pred_check_branch
      %94 = sbr.rel (0) target = $region61
    $region60: #{tpu_custom_call.1} parent=1 // pred_region
      %95 = dma.done [#allocation11], 1024
    $region61: #{tpu_custom_call.1} parent=1 // pred_fallthru
      _
    // Predicated region
    $region62: #{tpu_custom_call.1} parent=1 // pred_check
      _
    $region63: #{tpu_custom_call.1} parent=1 // pred_check_branch
      %97 = sbr.rel (0) target = $region65
    $region64: #{tpu_custom_call.1} parent=1 // pred_region
      %98 = dma.done [#allocation11], 32768
    $region65: #{tpu_custom_call.1} parent=1 // pred_fallthru
      _
    // Predicated region
    $region66: #{tpu_custom_call.1} parent=1 // pred_check
      _
    $region67: #{tpu_custom_call.1} parent=1 // pred_check_branch
      %100 = sbr.rel (0) target = $region69
    $region68: #{tpu_custom_call.1} parent=1 // pred_region
      %101 = dma.done [#allocation14], 4096
    $region69: #{tpu_custom_call.1} parent=1 // pred_fallthru
      _
    %v102 = vld [vmem:[#allocation7] sm:$0xff]
    %v103 = vld [vmem:[#allocation7 + $0x8] sm:$0xff]
    %v104 = vld [vmem:[#allocation7 + $0x10] sm:$0xff]
    %v105 = vld [vmem:[#allocation7 + $0x18] sm:$0xff]
    %v106 = vld [vmem:[#allocation7 + $0x20] sm:$0xff]
    %v107 = vld [vmem:[#allocation7 + $0x28] sm:$0xff]
    %v108 = vld [vmem:[#allocation7 + $0x30] sm:$0xff]
    %v109 = vld [vmem:[#allocation7 + $0x38] sm:$0xff]
    %v110 = vld [vmem:[#allocation10] sm:$0xff]
    %v111 = vld [vmem:[#allocation10 + $0x8] sm:$0xff]
    %v112 = vld [vmem:[#allocation10 + $0x10] sm:$0xff]
    %v113 = vld [vmem:[#allocation10 + $0x18] sm:$0xff]
    %v114 = vld [vmem:[#allocation10 + $0x20] sm:$0xff]
    %v115 = vld [vmem:[#allocation10 + $0x28] sm:$0xff]
    %v116 = vld [vmem:[#allocation10 + $0x30] sm:$0xff]
    %v117 = vld [vmem:[#allocation10 + $0x38] sm:$0xff]
    %v118 = vld [vmem:[%s6] sm:$0xf]
    %v119 = vld [vmem:[%s7] sm:$0xf]
    %v120 = vld [vmem:[%s0] sm:$0x3]
    %v121 = vld [vmem:[%s0 + $0x2] sm:$0x3]
    %v122 = vld [vmem:[%s0 + $0x4] sm:$0x3]
    %v123 = vld [vmem:[%s0 + $0x6] sm:$0x3]
    %v124 = vld [vmem:[%s0 + $0x8] sm:$0x3]
    %v125 = vld [vmem:[%s0 + $0xa] sm:$0x3]
    %v126 = vld [vmem:[%s0 + $0xc] sm:$0x3]
    %v127 = vld [vmem:[%s0 + $0xe] sm:$0x3]
    %v128 = vld [vmem:[%s2] sm:$0xff]
    %v129 = vlaneseq
    %v130 = vshrl.u32 %v129, 7
    %v131 = vsub.s32 0, %v130
    %v132 = vrot.slane %v128, %v131
    %134 = vbcast.lane.b32.xlu0 %v132, 256
    %v135 = vpop.permute.xlu0 %134
    %v136 = vlaneseq
    %v137 = vshrl.u32 %v136, 7
    %v138 = vsub.s32 1, %v137
    %v139 = vrot.slane %v128, %v138
    %141 = vbcast.lane.b32.xlu0 %v139, 256
    %v142 = vpop.permute.xlu0 %141
    %v143 = vlaneseq
    %v144 = vshrl.u32 %v143, 7
    %v145 = vsub.s32 2, %v144
    %v146 = vrot.slane %v128, %v145
    %148 = vbcast.lane.b32.xlu0 %v146, 256
    %v149 = vpop.permute.xlu0 %148
    %v150 = vlaneseq
    %v151 = vshrl.u32 %v150, 7
    %v152 = vsub.s32 3, %v151
    %v153 = vrot.slane %v128, %v152
    %155 = vbcast.lane.b32.xlu0 %v153, 256
    %v156 = vpop.permute.xlu0 %155
    %v157 = vlaneseq
    %v158 = vshrl.u32 %v157, 7
    %v159 = vsub.s32 4, %v158
    %v160 = vrot.slane %v128, %v159
    %162 = vbcast.lane.b32.xlu0 %v160, 256
    %v163 = vpop.permute.xlu0 %162
    %v164 = vlaneseq
    %v165 = vshrl.u32 %v164, 7
    %v166 = vsub.s32 5, %v165
    %v167 = vrot.slane %v128, %v166
    %169 = vbcast.lane.b32.xlu0 %v167, 256
    %v170 = vpop.permute.xlu0 %169
    %v171 = vlaneseq
    %v172 = vshrl.u32 %v171, 7
    %v173 = vsub.s32 6, %v172
    %v174 = vrot.slane %v128, %v173
    %176 = vbcast.lane.b32.xlu0 %v174, 256
    %v177 = vpop.permute.xlu0 %176
    %v178 = vlaneseq
    %v179 = vshrl.u32 %v178, 7
    %v180 = vsub.s32 7, %v179
    %v181 = vrot.slane %v128, %v180
    %183 = vbcast.lane.b32.xlu0 %v181, 256
    %v184 = vpop.permute.xlu0 %183
    %v185 = vmul.f32 %v120, %v135
    %v186 = vmul.f32 %v121, %v142
    %v187 = vmul.f32 %v122, %v149
    %v188 = vmul.f32 %v123, %v156
    %v189 = vmul.f32 %v124, %v163
    %v190 = vmul.f32 %v125, %v170
    %v191 = vmul.f32 %v126, %v177
    %v192 = vmul.f32 %v127, %v184
    %v194 = vlaneseq
    %v195 = vshrl.u32 %v194, 7
    %v196 = vsub.s32 0, %v195
    %v197 = vrot.slane %v118, %v196
    %v198 = vlaneseq
    %v199 = vshrl.u32 %v198, 7
    %v200 = vsub.s32 1, %v199
    %v201 = vrot.slane %v118, %v200
    %v202 = vlaneseq
    %v203 = vshrl.u32 %v202, 7
    %v204 = vsub.s32 2, %v203
    %v205 = vrot.slane %v118, %v204
    %v206 = vlaneseq
    %v207 = vshrl.u32 %v206, 7
    %v208 = vsub.s32 3, %v207
    %v209 = vrot.slane %v118, %v208
    %v222 = vcombine.low %v185, %v186
    %v223 = vcombine.low %v187, %v188
    %v225 = vunpack.c.l.s4 1983009808
    %v226 = vunpack.c.0.s8 %v225
    %v227 = vlaneseq
    %v228 = vshrl.u32 %v227, 7
    %v229 = vsub.s32 %v226, %v228
    %v230 = vrot.slane %v222, %v229
    %v232 = vunpack.c.l.s4 1983009808
    %v233 = vunpack.c.0.s8 %v232
    %v234 = vlaneseq
    %v235 = vshrl.u32 %v234, 7
    %v236 = vsub.s32 %v233, %v235
    %v237 = vrot.slane %v223, %v236
    %v238 = vcombine.low %v230, %v237
    %v239 = vcombine.low %v189, %v190
    %v240 = vcombine.low %v191, %v192
    %v242 = vunpack.c.l.s4 1983009808
    %v243 = vunpack.c.0.s8 %v242
    %v244 = vlaneseq
    %v245 = vshrl.u32 %v244, 7
    %v246 = vsub.s32 %v243, %v245
    %v247 = vrot.slane %v239, %v246
    %v249 = vunpack.c.l.s4 1983009808
    %v250 = vunpack.c.0.s8 %v249
    %v251 = vlaneseq
    %v252 = vshrl.u32 %v251, 7
    %v253 = vsub.s32 %v250, %v252
    %v254 = vrot.slane %v240, %v253
    %v255 = vcombine.low %v247, %v254
    %vm256 = vcmask 130048
    %v257 = vsel %vm256, %v238, 0
    %v259 = vsel %vm256, %v255, 0
    %261 = vmatprep.subr.mxu0 %v103
    %262 = vmatpush1.msra.mxu0 %v102
    %263 = vmatprep.subr.mxu0 %v107
    %264 = vmatpush1.msra.mxu0 %v106
    %265 = vmatprep.subr.mxu0 0.0
    %266 = vmatpush1.msra.mxu0 0.0
    %267 = vmatprep.subr.mxu0 0.0
    %268 = vmatpush1.msra.mxu0 0.0
    %269 = vmatprep.subr.mxu0 0.0
    %270 = vmatpush1.msra.mxu0 0.0
    %271 = vmatprep.subr.mxu0 0.0
    %272 = vmatpush1.msra.mxu0 0.0
    %273 = vmatprep.subr.mxu0 0.0
    %274 = vmatpush1.msra.mxu0 0.0
    %275 = vmatprep.subr.mxu0 0.0
    %276 = vmatpush1.msra.mxu0 0.0
    %277 = vmatprep.subr.mxu0 0.0
    %278 = vmatpush1.msra.mxu0 0.0
    %279 = vmatprep.subr.mxu0 0.0
    %280 = vmatpush1.msra.mxu0 0.0
    %281 = vmatprep.subr.mxu0 0.0
    %282 = vmatpush1.msra.mxu0 0.0
    %283 = vmatprep.subr.mxu0 0.0
    %284 = vmatpush1.msra.mxu0 0.0
    %285 = vmatprep.subr.mxu0 0.0
    %286 = vmatpush1.msra.mxu0 0.0
    %287 = vmatprep.subr.mxu0 0.0
    %288 = vmatpush1.msra.mxu0 0.0
    %289 = vmatprep.subr.mxu0 0.0
    %290 = vmatpush1.msra.mxu0 0.0
    %291 = vmatprep.subr.mxu0 0.0
    %292 = vmatpush1.msra.mxu0 0.0
    %293 = vmatprep.subr.mxu0 0.0
    %294 = vmatpush1.msra.mxu0 0.0
    %295 = vmatprep.subr.mxu0 0.0
    %296 = vmatpush1.msra.mxu0 0.0
    %297 = vmatprep.subr.mxu0 0.0
    %298 = vmatpush1.msra.mxu0 0.0
    %299 = vmatprep.subr.mxu0 0.0
    %300 = vmatpush1.msra.mxu0 0.0
    %301 = vmatprep.subr.mxu0 0.0
    %302 = vmatpush1.msra.mxu0 0.0
    %303 = vmatprep.subr.mxu0 0.0
    %304 = vmatpush1.msra.mxu0 0.0
    %305 = vmatprep.subr.mxu0 0.0
    %306 = vmatpush1.msra.mxu0 0.0
    %307 = vmatprep.subr.mxu0 0.0
    %308 = vmatpush1.msra.mxu0 0.0
    %309 = vmatprep.subr.mxu0 0.0
    %310 = vmatpush1.msra.mxu0 0.0
    %311 = vmatprep.subr.mxu0 0.0
    %312 = vmatpush1.msra.mxu0 0.0
    %313 = vmatprep.subr.mxu0 0.0
    %314 = vmatpush1.msra.mxu0 0.0
    %315 = vmatprep.subr.mxu0 0.0
    %316 = vmatpush1.msra.mxu0 0.0
    %317 = vmatprep.subr.mxu0 0.0
    %318 = vmatpush1.msra.mxu0 0.0
    %319 = vmatprep.subr.mxu0 0.0
    %320 = vmatpush1.msra.mxu0 0.0
    %321 = vmatprep.subr.mxu0 0.0
    %322 = vmatpush1.msra.mxu0 0.0
    %323 = vmatprep.subr.mxu0 0.0
    %324 = vmatpush1.msra.mxu0 0.0
    %325 = vmatprep.mubr.f32.mxu0 0.0
    %326 = vmatmul.mubr.f32.gmra.mrb[0].mxu0 %v257
    %v327 = vpop.f32.mrb[0].mxu0
    %v328 = vadd.f32 %v197, %v327
    %v329 = vpop.f32.mrb[0].mxu0
    %v330 = vadd.f32 %v201, %v329
    %331 = vmatprep.mubr.f32.mxu0 0.0
    %332 = vmatmul.mubr.f32.gmra.mrb[0].mxu0 %v259
    %v333 = vpop.f32.mrb[0].mxu0
    %v334 = vadd.f32 %v197, %v333
    %v335 = vpop.f32.mrb[0].mxu0
    %v336 = vadd.f32 %v201, %v335
    %337 = vdwg.mxu0
    %338 = vmatprep.subr.mxu0 %v105
    %339 = vmatpush1.msra.mxu0 %v104
    %340 = vmatprep.subr.mxu0 %v109
    %341 = vmatpush1.msra.mxu0 %v108
    %342 = vmatprep.subr.mxu0 0.0
    %343 = vmatpush1.msra.mxu0 0.0
    %344 = vmatprep.subr.mxu0 0.0
    %345 = vmatpush1.msra.mxu0 0.0
    %346 = vmatprep.subr.mxu0 0.0
    %347 = vmatpush1.msra.mxu0 0.0
    %348 = vmatprep.subr.mxu0 0.0
    %349 = vmatpush1.msra.mxu0 0.0
    %350 = vmatprep.subr.mxu0 0.0
    %351 = vmatpush1.msra.mxu0 0.0
    %352 = vmatprep.subr.mxu0 0.0
    %353 = vmatpush1.msra.mxu0 0.0
    %354 = vmatprep.subr.mxu0 0.0
    %355 = vmatpush1.msra.mxu0 0.0
    %356 = vmatprep.subr.mxu0 0.0
    %357 = vmatpush1.msra.mxu0 0.0
    %358 = vmatprep.subr.mxu0 0.0
    %359 = vmatpush1.msra.mxu0 0.0
    %360 = vmatprep.subr.mxu0 0.0
    %361 = vmatpush1.msra.mxu0 0.0
    %362 = vmatprep.subr.mxu0 0.0
    %363 = vmatpush1.msra.mxu0 0.0
    %364 = vmatprep.subr.mxu0 0.0
    %365 = vmatpush1.msra.mxu0 0.0
    %366 = vmatprep.subr.mxu0 0.0
    %367 = vmatpush1.msra.mxu0 0.0
    %368 = vmatprep.subr.mxu0 0.0
    %369 = vmatpush1.msra.mxu0 0.0
    %370 = vmatprep.subr.mxu0 0.0
    %371 = vmatpush1.msra.mxu0 0.0
    %372 = vmatprep.subr.mxu0 0.0
    %373 = vmatpush1.msra.mxu0 0.0
    %374 = vmatprep.subr.mxu0 0.0
    %375 = vmatpush1.msra.mxu0 0.0
    %376 = vmatprep.subr.mxu0 0.0
    %377 = vmatpush1.msra.mxu0 0.0
    %378 = vmatprep.subr.mxu0 0.0
    %379 = vmatpush1.msra.mxu0 0.0
    %380 = vmatprep.subr.mxu0 0.0
    %381 = vmatpush1.msra.mxu0 0.0
    %382 = vmatprep.subr.mxu0 0.0
    %383 = vmatpush1.msra.mxu0 0.0
    %384 = vmatprep.subr.mxu0 0.0
    %385 = vmatpush1.msra.mxu0 0.0
    %386 = vmatprep.subr.mxu0 0.0
    %387 = vmatpush1.msra.mxu0 0.0
    %388 = vmatprep.subr.mxu0 0.0
    %389 = vmatpush1.msra.mxu0 0.0
    %390 = vmatprep.subr.mxu0 0.0
    %391 = vmatpush1.msra.mxu0 0.0
    %392 = vmatprep.subr.mxu0 0.0
    %393 = vmatpush1.msra.mxu0 0.0
    %394 = vmatprep.subr.mxu0 0.0
    %395 = vmatpush1.msra.mxu0 0.0
    %396 = vmatprep.subr.mxu0 0.0
    %397 = vmatpush1.msra.mxu0 0.0
    %398 = vmatprep.subr.mxu0 0.0
    %399 = vmatpush1.msra.mxu0 0.0
    %400 = vmatprep.subr.mxu0 0.0
    %401 = vmatpush1.msra.mxu0 0.0
    %402 = vmatprep.mubr.f32.mxu0 0.0
    %403 = vmatmul.mubr.f32.gmra.mrb[0].mxu0 %v257
    %v404 = vpop.f32.mrb[0].mxu0
    %v405 = vadd.f32 %v205, %v404
    %v406 = vpop.f32.mrb[0].mxu0
    %v407 = vadd.f32 %v209, %v406
    %408 = vmatprep.mubr.f32.mxu0 0.0
    %409 = vmatmul.mubr.f32.gmra.mrb[0].mxu0 %v259
    %v410 = vpop.f32.mrb[0].mxu0
    %v411 = vadd.f32 %v205, %v410
    %v412 = vpop.f32.mrb[0].mxu0
    %v413 = vadd.f32 %v209, %v412
    %414 = vdwg.mxu0
    %v423 = vcombine.low %v328, %v330
    %v424 = vcombine.high %v328, %v330
    %v425 = vcombine.low %v405, %v407
    %v426 = vcombine.high %v405, %v407
    %v428 = vunpack.c.l.s4 1983009808
    %v429 = vunpack.c.0.s8 %v428
    %v430 = vlaneseq
    %v431 = vshrl.u32 %v430, 7
    %v432 = vsub.s32 %v429, %v431
    %v433 = vrot.slane %v423, %v432
    %v435 = vunpack.c.l.s4 1983009808
    %v436 = vunpack.c.0.s8 %v435
    %v437 = vlaneseq
    %v438 = vshrl.u32 %v437, 7
    %v439 = vsub.s32 %v436, %v438
    %v440 = vrot.slane %v424, %v439
    %v442 = vunpack.c.l.s4 1983009808
    %v443 = vunpack.c.0.s8 %v442
    %v444 = vlaneseq
    %v445 = vshrl.u32 %v444, 7
    %v446 = vsub.s32 %v443, %v445
    %v447 = vrot.slane %v425, %v446
    %v449 = vunpack.c.l.s4 1983009808
    %v450 = vunpack.c.0.s8 %v449
    %v451 = vlaneseq
    %v452 = vshrl.u32 %v451, 7
    %v453 = vsub.s32 %v450, %v452
    %v454 = vrot.slane %v426, %v453
    %v455 = vcombine.low %v433, %v447
    %v456 = vcombine.high %v433, %v447
    %v457 = vcombine.low %v440, %v454
    %v458 = vcombine.high %v440, %v454
    %v459 = vcombine.low %v334, %v336
    %v460 = vcombine.high %v334, %v336
    %v461 = vcombine.low %v411, %v413
    %v462 = vcombine.high %v411, %v413
    %v464 = vunpack.c.l.s4 1983009808
    %v465 = vunpack.c.0.s8 %v464
    %v466 = vlaneseq
    %v467 = vshrl.u32 %v466, 7
    %v468 = vsub.s32 %v465, %v467
    %v469 = vrot.slane %v459, %v468
    %v471 = vunpack.c.l.s4 1983009808
    %v472 = vunpack.c.0.s8 %v471
    %v473 = vlaneseq
    %v474 = vshrl.u32 %v473, 7
    %v475 = vsub.s32 %v472, %v474
    %v476 = vrot.slane %v460, %v475
    %v478 = vunpack.c.l.s4 1983009808
    %v479 = vunpack.c.0.s8 %v478
    %v480 = vlaneseq
    %v481 = vshrl.u32 %v480, 7
    %v482 = vsub.s32 %v479, %v481
    %v483 = vrot.slane %v461, %v482
    %v485 = vunpack.c.l.s4 1983009808
    %v486 = vunpack.c.0.s8 %v485
    %v487 = vlaneseq
    %v488 = vshrl.u32 %v487, 7
    %v489 = vsub.s32 %v486, %v488
    %v490 = vrot.slane %v462, %v489
    %v491 = vcombine.low %v469, %v483
    %v492 = vcombine.high %v469, %v483
    %v493 = vcombine.low %v476, %v490
    %v494 = vcombine.high %v476, %v490
    %503 = vst [vmem:[#allocation2] sm:$0xff] %v455
    %504 = vst [vmem:[#allocation2 + $0x8] sm:$0xff] %v456
    %505 = vst [vmem:[#allocation2 + $0x10] sm:$0xff] %v457
    %506 = vst [vmem:[#allocation2 + $0x18] sm:$0xff] %v458
    %507 = vst [vmem:[#allocation2 + $0x20] sm:$0xff] %v491
    %508 = vst [vmem:[#allocation2 + $0x28] sm:$0xff] %v492
    %509 = vst [vmem:[#allocation2 + $0x30] sm:$0xff] %v493
    %510 = vst [vmem:[#allocation2 + $0x38] sm:$0xff] %v494
    %v512 = vlaneseq
    %v513 = vshrl.u32 %v512, 7
    %v514 = vsub.s32 0, %v513
    %v515 = vrot.slane %v119, %v514
    %v516 = vlaneseq
    %v517 = vshrl.u32 %v516, 7
    %v518 = vsub.s32 1, %v517
    %v519 = vrot.slane %v119, %v518
    %v520 = vlaneseq
    %v521 = vshrl.u32 %v520, 7
    %v522 = vsub.s32 2, %v521
    %v523 = vrot.slane %v119, %v522
    %v524 = vlaneseq
    %v525 = vshrl.u32 %v524, 7
    %v526 = vsub.s32 3, %v525
    %v527 = vrot.slane %v119, %v526
    %532 = vmatprep.subr.mxu0 %v111
    %533 = vmatpush1.msra.mxu0 %v110
    %534 = vmatprep.subr.mxu0 %v115
    %535 = vmatpush1.msra.mxu0 %v114
    %536 = vmatprep.subr.mxu0 0.0
    %537 = vmatpush1.msra.mxu0 0.0
    %538 = vmatprep.subr.mxu0 0.0
    %539 = vmatpush1.msra.mxu0 0.0
    %540 = vmatprep.subr.mxu0 0.0
    %541 = vmatpush1.msra.mxu0 0.0
    %542 = vmatprep.subr.mxu0 0.0
    %543 = vmatpush1.msra.mxu0 0.0
    %544 = vmatprep.subr.mxu0 0.0
    %545 = vmatpush1.msra.mxu0 0.0
    %546 = vmatprep.subr.mxu0 0.0
    %547 = vmatpush1.msra.mxu0 0.0
    %548 = vmatprep.subr.mxu0 0.0
    %549 = vmatpush1.msra.mxu0 0.0
    %550 = vmatprep.subr.mxu0 0.0
    %551 = vmatpush1.msra.mxu0 0.0
    %552 = vmatprep.subr.mxu0 0.0
    %553 = vmatpush1.msra.mxu0 0.0
    %554 = vmatprep.subr.mxu0 0.0
    %555 = vmatpush1.msra.mxu0 0.0
    %556 = vmatprep.subr.mxu0 0.0
    %557 = vmatpush1.msra.mxu0 0.0
    %558 = vmatprep.subr.mxu0 0.0
    %559 = vmatpush1.msra.mxu0 0.0
    %560 = vmatprep.subr.mxu0 0.0
    %561 = vmatpush1.msra.mxu0 0.0
    %562 = vmatprep.subr.mxu0 0.0
    %563 = vmatpush1.msra.mxu0 0.0
    %564 = vmatprep.subr.mxu0 0.0
    %565 = vmatpush1.msra.mxu0 0.0
    %566 = vmatprep.subr.mxu0 0.0
    %567 = vmatpush1.msra.mxu0 0.0
    %568 = vmatprep.subr.mxu0 0.0
    %569 = vmatpush1.msra.mxu0 0.0
    %570 = vmatprep.subr.mxu0 0.0
    %571 = vmatpush1.msra.mxu0 0.0
    %572 = vmatprep.subr.mxu0 0.0
    %573 = vmatpush1.msra.mxu0 0.0
    %574 = vmatprep.subr.mxu0 0.0
    %575 = vmatpush1.msra.mxu0 0.0
    %576 = vmatprep.subr.mxu0 0.0
    %577 = vmatpush1.msra.mxu0 0.0
    %578 = vmatprep.subr.mxu0 0.0
    %579 = vmatpush1.msra.mxu0 0.0
    %580 = vmatprep.subr.mxu0 0.0
    %581 = vmatpush1.msra.mxu0 0.0
    %582 = vmatprep.subr.mxu0 0.0
    %583 = vmatpush1.msra.mxu0 0.0
    %584 = vmatprep.subr.mxu0 0.0
    %585 = vmatpush1.msra.mxu0 0.0
    %586 = vmatprep.subr.mxu0 0.0
    %587 = vmatpush1.msra.mxu0 0.0
    %588 = vmatprep.subr.mxu0 0.0
    %589 = vmatpush1.msra.mxu0 0.0
    %590 = vmatprep.subr.mxu0 0.0
    %591 = vmatpush1.msra.mxu0 0.0
    %592 = vmatprep.subr.mxu0 0.0
    %593 = vmatpush1.msra.mxu0 0.0
    %594 = vmatprep.subr.mxu0 0.0
    %595 = vmatpush1.msra.mxu0 0.0
    %596 = vmatprep.mubr.f32.mxu0 0.0
    %597 = vmatmul.mubr.f32.gmra.mrb[0].mxu0 %v257
    %v598 = vpop.f32.mrb[0].mxu0
    %v599 = vadd.f32 %v515, %v598
    %v600 = vpop.f32.mrb[0].mxu0
    %v601 = vadd.f32 %v519, %v600
    %602 = vmatprep.mubr.f32.mxu0 0.0
    %603 = vmatmul.mubr.f32.gmra.mrb[0].mxu0 %v259
    %v604 = vpop.f32.mrb[0].mxu0
    %v605 = vadd.f32 %v515, %v604
    %v606 = vpop.f32.mrb[0].mxu0
    %v607 = vadd.f32 %v519, %v606
    %608 = vdwg.mxu0
    %609 = vmatprep.subr.mxu0 %v113
    %610 = vmatpush1.msra.mxu0 %v112
    %611 = vmatprep.subr.mxu0 %v117
    %612 = vmatpush1.msra.mxu0 %v116
    %613 = vmatprep.subr.mxu0 0.0
    %614 = vmatpush1.msra.mxu0 0.0
    %615 = vmatprep.subr.mxu0 0.0
    %616 = vmatpush1.msra.mxu0 0.0
    %617 = vmatprep.subr.mxu0 0.0
    %618 = vmatpush1.msra.mxu0 0.0
    %619 = vmatprep.subr.mxu0 0.0
    %620 = vmatpush1.msra.mxu0 0.0
    %621 = vmatprep.subr.mxu0 0.0
    %622 = vmatpush1.msra.mxu0 0.0
    %623 = vmatprep.subr.mxu0 0.0
    %624 = vmatpush1.msra.mxu0 0.0
    %625 = vmatprep.subr.mxu0 0.0
    %626 = vmatpush1.msra.mxu0 0.0
    %627 = vmatprep.subr.mxu0 0.0
    %628 = vmatpush1.msra.mxu0 0.0
    %629 = vmatprep.subr.mxu0 0.0
    %630 = vmatpush1.msra.mxu0 0.0
    %631 = vmatprep.subr.mxu0 0.0
    %632 = vmatpush1.msra.mxu0 0.0
    %633 = vmatprep.subr.mxu0 0.0
    %634 = vmatpush1.msra.mxu0 0.0
    %635 = vmatprep.subr.mxu0 0.0
    %636 = vmatpush1.msra.mxu0 0.0
    %637 = vmatprep.subr.mxu0 0.0
    %638 = vmatpush1.msra.mxu0 0.0
    %639 = vmatprep.subr.mxu0 0.0
    %640 = vmatpush1.msra.mxu0 0.0
    %641 = vmatprep.subr.mxu0 0.0
    %642 = vmatpush1.msra.mxu0 0.0
    %643 = vmatprep.subr.mxu0 0.0
    %644 = vmatpush1.msra.mxu0 0.0
    %645 = vmatprep.subr.mxu0 0.0
    %646 = vmatpush1.msra.mxu0 0.0
    %647 = vmatprep.subr.mxu0 0.0
    %648 = vmatpush1.msra.mxu0 0.0
    %649 = vmatprep.subr.mxu0 0.0
    %650 = vmatpush1.msra.mxu0 0.0
    %651 = vmatprep.subr.mxu0 0.0
    %652 = vmatpush1.msra.mxu0 0.0
    %653 = vmatprep.subr.mxu0 0.0
    %654 = vmatpush1.msra.mxu0 0.0
    %655 = vmatprep.subr.mxu0 0.0
    %656 = vmatpush1.msra.mxu0 0.0
    %657 = vmatprep.subr.mxu0 0.0
    %658 = vmatpush1.msra.mxu0 0.0
    %659 = vmatprep.subr.mxu0 0.0
    %660 = vmatpush1.msra.mxu0 0.0
    %661 = vmatprep.subr.mxu0 0.0
    %662 = vmatpush1.msra.mxu0 0.0
    %663 = vmatprep.subr.mxu0 0.0
    %664 = vmatpush1.msra.mxu0 0.0
    %665 = vmatprep.subr.mxu0 0.0
    %666 = vmatpush1.msra.mxu0 0.0
    %667 = vmatprep.subr.mxu0 0.0
    %668 = vmatpush1.msra.mxu0 0.0
    %669 = vmatprep.subr.mxu0 0.0
    %670 = vmatpush1.msra.mxu0 0.0
    %671 = vmatprep.subr.mxu0 0.0
    %672 = vmatpush1.msra.mxu0 0.0
    %673 = vmatprep.mubr.f32.mxu0 0.0
    %674 = vmatmul.mubr.f32.gmra.mrb[0].mxu0 %v257
    %v675 = vpop.f32.mrb[0].mxu0
    %v676 = vadd.f32 %v523, %v675
    %v677 = vpop.f32.mrb[0].mxu0
    %v678 = vadd.f32 %v527, %v677
    %679 = vmatprep.mubr.f32.mxu0 0.0
    %680 = vmatmul.mubr.f32.gmra.mrb[0].mxu0 %v259
    %v681 = vpop.f32.mrb[0].mxu0
    %v682 = vadd.f32 %v523, %v681
    %v683 = vpop.f32.mrb[0].mxu0
    %v684 = vadd.f32 %v527, %v683
    %685 = vdwg.mxu0
    %v694 = vcombine.low %v599, %v601
    %v695 = vcombine.high %v599, %v601
    %v696 = vcombine.low %v676, %v678
    %v697 = vcombine.high %v676, %v678
    %v699 = vunpack.c.l.s4 1983009808
    %v700 = vunpack.c.0.s8 %v699
    %v701 = vlaneseq
    %v702 = vshrl.u32 %v701, 7
    %v703 = vsub.s32 %v700, %v702
    %v704 = vrot.slane %v694, %v703
    %v706 = vunpack.c.l.s4 1983009808
    %v707 = vunpack.c.0.s8 %v706
    %v708 = vlaneseq
    %v709 = vshrl.u32 %v708, 7
    %v710 = vsub.s32 %v707, %v709
    %v711 = vrot.slane %v695, %v710
    %v713 = vunpack.c.l.s4 1983009808
    %v714 = vunpack.c.0.s8 %v713
    %v715 = vlaneseq
    %v716 = vshrl.u32 %v715, 7
    %v717 = vsub.s32 %v714, %v716
    %v718 = vrot.slane %v696, %v717
    %v720 = vunpack.c.l.s4 1983009808
    %v721 = vunpack.c.0.s8 %v720
    %v722 = vlaneseq
    %v723 = vshrl.u32 %v722, 7
    %v724 = vsub.s32 %v721, %v723
    %v725 = vrot.slane %v697, %v724
    %v726 = vcombine.low %v704, %v718
    %v727 = vcombine.high %v704, %v718
    %v728 = vcombine.low %v711, %v725
    %v729 = vcombine.high %v711, %v725
    %v730 = vcombine.low %v605, %v607
    %v731 = vcombine.high %v605, %v607
    %v732 = vcombine.low %v682, %v684
    %v733 = vcombine.high %v682, %v684
    %v735 = vunpack.c.l.s4 1983009808
    %v736 = vunpack.c.0.s8 %v735
    %v737 = vlaneseq
    %v738 = vshrl.u32 %v737, 7
    %v739 = vsub.s32 %v736, %v738
    %v740 = vrot.slane %v730, %v739
    %v742 = vunpack.c.l.s4 1983009808
    %v743 = vunpack.c.0.s8 %v742
    %v744 = vlaneseq
    %v745 = vshrl.u32 %v744, 7
    %v746 = vsub.s32 %v743, %v745
    %v747 = vrot.slane %v731, %v746
    %v749 = vunpack.c.l.s4 1983009808
    %v750 = vunpack.c.0.s8 %v749
    %v751 = vlaneseq
    %v752 = vshrl.u32 %v751, 7
    %v753 = vsub.s32 %v750, %v752
    %v754 = vrot.slane %v732, %v753
    %v756 = vunpack.c.l.s4 1983009808
    %v757 = vunpack.c.0.s8 %v756
    %v758 = vlaneseq
    %v759 = vshrl.u32 %v758, 7
    %v760 = vsub.s32 %v757, %v759
    %v761 = vrot.slane %v733, %v760
    %v762 = vcombine.low %v740, %v754
    %v763 = vcombine.high %v740, %v754
    %v764 = vcombine.low %v747, %v761
    %v765 = vcombine.high %v747, %v761
    %774 = vst [vmem:[#allocation3] sm:$0xff] %v726
    %775 = vst [vmem:[#allocation3 + $0x8] sm:$0xff] %v727
    %776 = vst [vmem:[#allocation3 + $0x10] sm:$0xff] %v728
    %777 = vst [vmem:[#allocation3 + $0x18] sm:$0xff] %v729
    %778 = vst [vmem:[#allocation3 + $0x20] sm:$0xff] %v762
    %779 = vst [vmem:[#allocation3 + $0x28] sm:$0xff] %v763
    %780 = vst [vmem:[#allocation3 + $0x30] sm:$0xff] %v764
    %781 = vst [vmem:[#allocation3 + $0x38] sm:$0xff] %v765
    %v782 = vld [vmem:[#allocation12] sm:$0xff]
    %v783 = vld [vmem:[#allocation12 + $0x8] sm:$0xff]
    %v784 = vld [vmem:[#allocation12 + $0x10] sm:$0xff]
    %v785 = vld [vmem:[#allocation12 + $0x18] sm:$0xff]
    %v786 = vld [vmem:[#allocation12 + $0x20] sm:$0xff]
    %v787 = vld [vmem:[#allocation12 + $0x28] sm:$0xff]
    %v788 = vld [vmem:[#allocation12 + $0x30] sm:$0xff]
    %v789 = vld [vmem:[#allocation12 + $0x38] sm:$0xff]
    %v790 = vld [vmem:[#allocation12 + $0x40] sm:$0xff]
    %v791 = vld [vmem:[#allocation12 + $0x48] sm:$0xff]
    %v792 = vld [vmem:[#allocation12 + $0x50] sm:$0xff]
    %v793 = vld [vmem:[#allocation12 + $0x58] sm:$0xff]
    %v794 = vld [vmem:[#allocation12 + $0x60] sm:$0xff]
    %v795 = vld [vmem:[#allocation12 + $0x68] sm:$0xff]
    %v796 = vld [vmem:[#allocation12 + $0x70] sm:$0xff]
    %v797 = vld [vmem:[#allocation12 + $0x78] sm:$0xff]
    %v798 = vld [vmem:[#allocation12 + $0x80] sm:$0xff]
    %v799 = vld [vmem:[#allocation12 + $0x88] sm:$0xff]
    %v800 = vld [vmem:[#allocation12 + $0x90] sm:$0xff]
    %v801 = vld [vmem:[#allocation12 + $0x98] sm:$0xff]
    %v802 = vld [vmem:[#allocation12 + $0xa0] sm:$0xff]
    %v803 = vld [vmem:[#allocation12 + $0xa8] sm:$0xff]
    %v804 = vld [vmem:[#allocation12 + $0xb0] sm:$0xff]
    %v805 = vld [vmem:[#allocation12 + $0xb8] sm:$0xff]
    %v806 = vld [vmem:[#allocation12 + $0xc0] sm:$0xff]
    %v807 = vld [vmem:[#allocation12 + $0xc8] sm:$0xff]
    %v808 = vld [vmem:[#allocation12 + $0xd0] sm:$0xff]
    %v809 = vld [vmem:[#allocation12 + $0xd8] sm:$0xff]
    %v810 = vld [vmem:[#allocation12 + $0xe0] sm:$0xff]
    %v811 = vld [vmem:[#allocation12 + $0xe8] sm:$0xff]
    %v812 = vld [vmem:[#allocation12 + $0xf0] sm:$0xff]
    %v813 = vld [vmem:[#allocation12 + $0xf8] sm:$0xff]
    %v814 = vld [vmem:[#allocation12 + $0x100] sm:$0xff]
    %v815 = vld [vmem:[#allocation12 + $0x108] sm:$0xff]
    %v816 = vld [vmem:[#allocation12 + $0x110] sm:$0xff]
    %v817 = vld [vmem:[#allocation12 + $0x118] sm:$0xff]
    %v818 = vld [vmem:[#allocation12 + $0x120] sm:$0xff]
    %v819 = vld [vmem:[#allocation12 + $0x128] sm:$0xff]
    %v820 = vld [vmem:[#allocation12 + $0x130] sm:$0xff]
    %v821 = vld [vmem:[#allocation12 + $0x138] sm:$0xff]
    %v822 = vld [vmem:[#allocation12 + $0x140] sm:$0xff]
    %v823 = vld [vmem:[#allocation12 + $0x148] sm:$0xff]
    %v824 = vld [vmem:[#allocation12 + $0x150] sm:$0xff]
    %v825 = vld [vmem:[#allocation12 + $0x158] sm:$0xff]
    %v826 = vld [vmem:[#allocation12 + $0x160] sm:$0xff]
    %v827 = vld [vmem:[#allocation12 + $0x168] sm:$0xff]
    %v828 = vld [vmem:[#allocation12 + $0x170] sm:$0xff]
    %v829 = vld [vmem:[#allocation12 + $0x178] sm:$0xff]
    %v830 = vld [vmem:[#allocation12 + $0x180] sm:$0xff]
    %v831 = vld [vmem:[#allocation12 + $0x188] sm:$0xff]
    %v832 = vld [vmem:[#allocation12 + $0x190] sm:$0xff]
    %v833 = vld [vmem:[#allocation12 + $0x198] sm:$0xff]
    %v834 = vld [vmem:[#allocation12 + $0x1a0] sm:$0xff]
    %v835 = vld [vmem:[#allocation12 + $0x1a8] sm:$0xff]
    %v836 = vld [vmem:[#allocation12 + $0x1b0] sm:$0xff]
    %v837 = vld [vmem:[#allocation12 + $0x1b8] sm:$0xff]
    %v838 = vld [vmem:[#allocation12 + $0x1c0] sm:$0xff]
    %v839 = vld [vmem:[#allocation12 + $0x1c8] sm:$0xff]
    %v840 = vld [vmem:[#allocation12 + $0x1d0] sm:$0xff]
    %v841 = vld [vmem:[#allocation12 + $0x1d8] sm:$0xff]
    %v842 = vld [vmem:[#allocation12 + $0x1e0] sm:$0xff]
    %v843 = vld [vmem:[#allocation12 + $0x1e8] sm:$0xff]
    %v844 = vld [vmem:[#allocation12 + $0x1f0] sm:$0xff]
    %v845 = vld [vmem:[#allocation12 + $0x1f8] sm:$0xff]
    %v846 = vld [vmem:[#allocation12 + $0x200] sm:$0xff]
    %v847 = vld [vmem:[#allocation12 + $0x208] sm:$0xff]
    %v848 = vld [vmem:[#allocation12 + $0x210] sm:$0xff]
    %v849 = vld [vmem:[#allocation12 + $0x218] sm:$0xff]
    %v850 = vld [vmem:[#allocation12 + $0x220] sm:$0xff]
    %v851 = vld [vmem:[#allocation12 + $0x228] sm:$0xff]
    %v852 = vld [vmem:[#allocation12 + $0x230] sm:$0xff]
    %v853 = vld [vmem:[#allocation12 + $0x238] sm:$0xff]
    %v854 = vld [vmem:[#allocation12 + $0x240] sm:$0xff]
    %v855 = vld [vmem:[#allocation12 + $0x248] sm:$0xff]
    %v856 = vld [vmem:[#allocation12 + $0x250] sm:$0xff]
    %v857 = vld [vmem:[#allocation12 + $0x258] sm:$0xff]
    %v858 = vld [vmem:[#allocation12 + $0x260] sm:$0xff]
    %v859 = vld [vmem:[#allocation12 + $0x268] sm:$0xff]
    %v860 = vld [vmem:[#allocation12 + $0x270] sm:$0xff]
    %v861 = vld [vmem:[#allocation12 + $0x278] sm:$0xff]
    %v862 = vld [vmem:[#allocation12 + $0x280] sm:$0xff]
    %v863 = vld [vmem:[#allocation12 + $0x288] sm:$0xff]
    %v864 = vld [vmem:[#allocation12 + $0x290] sm:$0xff]
    %v865 = vld [vmem:[#allocation12 + $0x298] sm:$0xff]
    %v866 = vld [vmem:[#allocation12 + $0x2a0] sm:$0xff]
    %v867 = vld [vmem:[#allocation12 + $0x2a8] sm:$0xff]
    %v868 = vld [vmem:[#allocation12 + $0x2b0] sm:$0xff]
    %v869 = vld [vmem:[#allocation12 + $0x2b8] sm:$0xff]
    %v870 = vld [vmem:[#allocation12 + $0x2c0] sm:$0xff]
    %v871 = vld [vmem:[#allocation12 + $0x2c8] sm:$0xff]
    %v872 = vld [vmem:[#allocation12 + $0x2d0] sm:$0xff]
    %v873 = vld [vmem:[#allocation12 + $0x2d8] sm:$0xff]
    %v874 = vld [vmem:[#allocation12 + $0x2e0] sm:$0xff]
    %v875 = vld [vmem:[#allocation12 + $0x2e8] sm:$0xff]
    %v876 = vld [vmem:[#allocation12 + $0x2f0] sm:$0xff]
    %v877 = vld [vmem:[#allocation12 + $0x2f8] sm:$0xff]
    %v878 = vld [vmem:[#allocation12 + $0x300] sm:$0xff]
    %v879 = vld [vmem:[#allocation12 + $0x308] sm:$0xff]
    %v880 = vld [vmem:[#allocation12 + $0x310] sm:$0xff]
    %v881 = vld [vmem:[#allocation12 + $0x318] sm:$0xff]
    %v882 = vld [vmem:[#allocation12 + $0x320] sm:$0xff]
    %v883 = vld [vmem:[#allocation12 + $0x328] sm:$0xff]
    %v884 = vld [vmem:[#allocation12 + $0x330] sm:$0xff]
    %v885 = vld [vmem:[#allocation12 + $0x338] sm:$0xff]
    %v886 = vld [vmem:[#allocation12 + $0x340] sm:$0xff]
    %v887 = vld [vmem:[#allocation12 + $0x348] sm:$0xff]
    %v888 = vld [vmem:[#allocation12 + $0x350] sm:$0xff]
    %v889 = vld [vmem:[#allocation12 + $0x358] sm:$0xff]
    %v890 = vld [vmem:[#allocation12 + $0x360] sm:$0xff]
    %v891 = vld [vmem:[#allocation12 + $0x368] sm:$0xff]
    %v892 = vld [vmem:[#allocation12 + $0x370] sm:$0xff]
    %v893 = vld [vmem:[#allocation12 + $0x378] sm:$0xff]
    %v894 = vld [vmem:[#allocation12 + $0x380] sm:$0xff]
    %v895 = vld [vmem:[#allocation12 + $0x388] sm:$0xff]
    %v896 = vld [vmem:[#allocation12 + $0x390] sm:$0xff]
    %v897 = vld [vmem:[#allocation12 + $0x398] sm:$0xff]
    %v898 = vld [vmem:[#allocation12 + $0x3a0] sm:$0xff]
    %v899 = vld [vmem:[#allocation12 + $0x3a8] sm:$0xff]
    %v900 = vld [vmem:[#allocation12 + $0x3b0] sm:$0xff]
    %v901 = vld [vmem:[#allocation12 + $0x3b8] sm:$0xff]
    %v902 = vld [vmem:[#allocation12 + $0x3c0] sm:$0xff]
    %v903 = vld [vmem:[#allocation12 + $0x3c8] sm:$0xff]
    %v904 = vld [vmem:[#allocation12 + $0x3d0] sm:$0xff]
    %v905 = vld [vmem:[#allocation12 + $0x3d8] sm:$0xff]
    %v906 = vld [vmem:[#allocation12 + $0x3e0] sm:$0xff]
    %v907 = vld [vmem:[#allocation12 + $0x3e8] sm:$0xff]
    %v908 = vld [vmem:[#allocation12 + $0x3f0] sm:$0xff]
    %v909 = vld [vmem:[#allocation12 + $0x3f8] sm:$0xff]
    %v910 = vld [vmem:[#allocation12 + $0x400] sm:$0xff]
    %v911 = vld [vmem:[#allocation12 + $0x408] sm:$0xff]
    %v912 = vld [vmem:[#allocation12 + $0x410] sm:$0xff]
    %v913 = vld [vmem:[#allocation12 + $0x418] sm:$0xff]
    %v914 = vld [vmem:[#allocation12 + $0x420] sm:$0xff]
    %v915 = vld [vmem:[#allocation12 + $0x428] sm:$0xff]
    %v916 = vld [vmem:[#allocation12 + $0x430] sm:$0xff]
    %v917 = vld [vmem:[#allocation12 + $0x438] sm:$0xff]
    %v918 = vld [vmem:[#allocation12 + $0x440] sm:$0xff]
    %v919 = vld [vmem:[#allocation12 + $0x448] sm:$0xff]
    %v920 = vld [vmem:[#allocation12 + $0x450] sm:$0xff]
    %v921 = vld [vmem:[#allocation12 + $0x458] sm:$0xff]
    %v922 = vld [vmem:[#allocation12 + $0x460] sm:$0xff]
    %v923 = vld [vmem:[#allocation12 + $0x468] sm:$0xff]
    %v924 = vld [vmem:[#allocation12 + $0x470] sm:$0xff]
    %v925 = vld [vmem:[#allocation12 + $0x478] sm:$0xff]
    %v926 = vld [vmem:[#allocation12 + $0x480] sm:$0xff]
    %v927 = vld [vmem:[#allocation12 + $0x488] sm:$0xff]
    %v928 = vld [vmem:[#allocation12 + $0x490] sm:$0xff]
    %v929 = vld [vmem:[#allocation12 + $0x498] sm:$0xff]
    %v930 = vld [vmem:[#allocation12 + $0x4a0] sm:$0xff]
    %v931 = vld [vmem:[#allocation12 + $0x4a8] sm:$0xff]
    %v932 = vld [vmem:[#allocation12 + $0x4b0] sm:$0xff]
    %v933 = vld [vmem:[#allocation12 + $0x4b8] sm:$0xff]
    %v934 = vld [vmem:[#allocation12 + $0x4c0] sm:$0xff]
    %v935 = vld [vmem:[#allocation12 + $0x4c8] sm:$0xff]
    %v936 = vld [vmem:[#allocation12 + $0x4d0] sm:$0xff]
    %v937 = vld [vmem:[#allocation12 + $0x4d8] sm:$0xff]
    %v938 = vld [vmem:[#allocation12 + $0x4e0] sm:$0xff]
    %v939 = vld [vmem:[#allocation12 + $0x4e8] sm:$0xff]
    %v940 = vld [vmem:[#allocation12 + $0x4f0] sm:$0xff]
    %v941 = vld [vmem:[#allocation12 + $0x4f8] sm:$0xff]
    %v942 = vld [vmem:[#allocation12 + $0x500] sm:$0xff]
    %v943 = vld [vmem:[#allocation12 + $0x508] sm:$0xff]
    %v944 = vld [vmem:[#allocation12 + $0x510] sm:$0xff]
    %v945 = vld [vmem:[#allocation12 + $0x518] sm:$0xff]
    %v946 = vld [vmem:[#allocation12 + $0x520] sm:$0xff]
    %v947 = vld [vmem:[#allocation12 + $0x528] sm:$0xff]
    %v948 = vld [vmem:[#allocation12 + $0x530] sm:$0xff]
    %v949 = vld [vmem:[#allocation12 + $0x538] sm:$0xff]
    %v950 = vld [vmem:[#allocation12 + $0x540] sm:$0xff]
    %v951 = vld [vmem:[#allocation12 + $0x548] sm:$0xff]
    %v952 = vld [vmem:[#allocation12 + $0x550] sm:$0xff]
    %v953 = vld [vmem:[#allocation12 + $0x558] sm:$0xff]
    %v954 = vld [vmem:[#allocation12 + $0x560] sm:$0xff]
    %v955 = vld [vmem:[#allocation12 + $0x568] sm:$0xff]
    %v956 = vld [vmem:[#allocation12 + $0x570] sm:$0xff]
    %v957 = vld [vmem:[#allocation12 + $0x578] sm:$0xff]
    %v958 = vld [vmem:[#allocation12 + $0x580] sm:$0xff]
    %v959 = vld [vmem:[#allocation12 + $0x588] sm:$0xff]
    %v960 = vld [vmem:[#allocation12 + $0x590] sm:$0xff]
    %v961 = vld [vmem:[#allocation12 + $0x598] sm:$0xff]
    %v962 = vld [vmem:[#allocation12 + $0x5a0] sm:$0xff]
    %v963 = vld [vmem:[#allocation12 + $0x5a8] sm:$0xff]
    %v964 = vld [vmem:[#allocation12 + $0x5b0] sm:$0xff]
    %v965 = vld [vmem:[#allocation12 + $0x5b8] sm:$0xff]
    %v966 = vld [vmem:[#allocation12 + $0x5c0] sm:$0xff]
    %v967 = vld [vmem:[#allocation12 + $0x5c8] sm:$0xff]
    %v968 = vld [vmem:[#allocation12 + $0x5d0] sm:$0xff]
    %v969 = vld [vmem:[#allocation12 + $0x5d8] sm:$0xff]
    %v970 = vld [vmem:[#allocation12 + $0x5e0] sm:$0xff]
    %v971 = vld [vmem:[#allocation12 + $0x5e8] sm:$0xff]
    %v972 = vld [vmem:[#allocation12 + $0x5f0] sm:$0xff]
    %v973 = vld [vmem:[#allocation12 + $0x5f8] sm:$0xff]
    %v974 = vld [vmem:[#allocation12 + $0x600] sm:$0xff]
    %v975 = vld [vmem:[#allocation12 + $0x608] sm:$0xff]
    %v976 = vld [vmem:[#allocation12 + $0x610] sm:$0xff]
    %v977 = vld [vmem:[#allocation12 + $0x618] sm:$0xff]
    %v978 = vld [vmem:[#allocation12 + $0x620] sm:$0xff]
    %v979 = vld [vmem:[#allocation12 + $0x628] sm:$0xff]
    %v980 = vld [vmem:[#allocation12 + $0x630] sm:$0xff]
    %v981 = vld [vmem:[#allocation12 + $0x638] sm:$0xff]
    %v982 = vld [vmem:[#allocation12 + $0x640] sm:$0xff]
    %v983 = vld [vmem:[#allocation12 + $0x648] sm:$0xff]
    %v984 = vld [vmem:[#allocation12 + $0x650] sm:$0xff]
    %v985 = vld [vmem:[#allocation12 + $0x658] sm:$0xff]
    %v986 = vld [vmem:[#allocation12 + $0x660] sm:$0xff]
    %v987 = vld [vmem:[#allocation12 + $0x668] sm:$0xff]
    %v988 = vld [vmem:[#allocation12 + $0x670] sm:$0xff]
    %v989 = vld [vmem:[#allocation12 + $0x678] sm:$0xff]
    %v990 = vld [vmem:[#allocation12 + $0x680] sm:$0xff]
    %v991 = vld [vmem:[#allocation12 + $0x688] sm:$0xff]
    %v992 = vld [vmem:[#allocation12 + $0x690] sm:$0xff]
    %v993 = vld [vmem:[#allocation12 + $0x698] sm:$0xff]
    %v994 = vld [vmem:[#allocation12 + $0x6a0] sm:$0xff]
    %v995 = vld [vmem:[#allocation12 + $0x6a8] sm:$0xff]
    %v996 = vld [vmem:[#allocation12 + $0x6b0] sm:$0xff]
    %v997 = vld [vmem:[#allocation12 + $0x6b8] sm:$0xff]
    %v998 = vld [vmem:[#allocation12 + $0x6c0] sm:$0xff]
    %v999 = vld [vmem:[#allocation12 + $0x6c8] sm:$0xff]
    %v1000 = vld [vmem:[#allocation12 + $0x6d0] sm:$0xff]
    %v1001 = vld [vmem:[#allocation12 + $0x6d8] sm:$0xff]
    %v1002 = vld [vmem:[#allocation12 + $0x6e0] sm:$0xff]
    %v1003 = vld [vmem:[#allocation12 + $0x6e8] sm:$0xff]
    %v1004 = vld [vmem:[#allocation12 + $0x6f0] sm:$0xff]
    %v1005 = vld [vmem:[#allocation12 + $0x6f8] sm:$0xff]
    %v1006 = vld [vmem:[#allocation12 + $0x700] sm:$0xff]
    %v1007 = vld [vmem:[#allocation12 + $0x708] sm:$0xff]
    %v1008 = vld [vmem:[#allocation12 + $0x710] sm:$0xff]
    %v1009 = vld [vmem:[#allocation12 + $0x718] sm:$0xff]
    %v1010 = vld [vmem:[#allocation12 + $0x720] sm:$0xff]
    %v1011 = vld [vmem:[#allocation12 + $0x728] sm:$0xff]
    %v1012 = vld [vmem:[#allocation12 + $0x730] sm:$0xff]
    %v1013 = vld [vmem:[#allocation12 + $0x738] sm:$0xff]
    %v1014 = vld [vmem:[#allocation12 + $0x740] sm:$0xff]
    %v1015 = vld [vmem:[#allocation12 + $0x748] sm:$0xff]
    %v1016 = vld [vmem:[#allocation12 + $0x750] sm:$0xff]
    %v1017 = vld [vmem:[#allocation12 + $0x758] sm:$0xff]
    %v1018 = vld [vmem:[#allocation12 + $0x760] sm:$0xff]
    %v1019 = vld [vmem:[#allocation12 + $0x768] sm:$0xff]
    %v1020 = vld [vmem:[#allocation12 + $0x770] sm:$0xff]
    %v1021 = vld [vmem:[#allocation12 + $0x778] sm:$0xff]
    %v1022 = vld [vmem:[#allocation12 + $0x780] sm:$0xff]
    %v1023 = vld [vmem:[#allocation12 + $0x788] sm:$0xff]
    %v1024 = vld [vmem:[#allocation12 + $0x790] sm:$0xff]
    %v1025 = vld [vmem:[#allocation12 + $0x798] sm:$0xff]
    %v1026 = vld [vmem:[#allocation12 + $0x7a0] sm:$0xff]
    %v1027 = vld [vmem:[#allocation12 + $0x7a8] sm:$0xff]
    %v1028 = vld [vmem:[#allocation12 + $0x7b0] sm:$0xff]
    %v1029 = vld [vmem:[#allocation12 + $0x7b8] sm:$0xff]
    %v1030 = vld [vmem:[#allocation12 + $0x7c0] sm:$0xff]
    %v1031 = vld [vmem:[#allocation12 + $0x7c8] sm:$0xff]
    %v1032 = vld [vmem:[#allocation12 + $0x7d0] sm:$0xff]
    %v1033 = vld [vmem:[#allocation12 + $0x7d8] sm:$0xff]
    %v1034 = vld [vmem:[#allocation12 + $0x7e0] sm:$0xff]
    %v1035 = vld [vmem:[#allocation12 + $0x7e8] sm:$0xff]
    %v1036 = vld [vmem:[#allocation12 + $0x7f0] sm:$0xff]
    %v1037 = vld [vmem:[#allocation12 + $0x7f8] sm:$0xff]
    %1038 = vmatprep.subr.mxu0 %v783
    %1039 = vmatpush1.msra.mxu0 %v782
    %1040 = vmatprep.subr.mxu0 %v791
    %1041 = vmatpush1.msra.mxu0 %v790
    %1042 = vmatprep.subr.mxu0 %v799
    %1043 = vmatpush1.msra.mxu0 %v798
    %1044 = vmatprep.subr.mxu0 %v807
    %1045 = vmatpush1.msra.mxu0 %v806
    %1046 = vmatprep.subr.mxu0 %v815
    %1047 = vmatpush1.msra.mxu0 %v814
    %1048 = vmatprep.subr.mxu0 %v823
    %1049 = vmatpush1.msra.mxu0 %v822
    %1050 = vmatprep.subr.mxu0 %v831
    %1051 = vmatpush1.msra.mxu0 %v830
    %1052 = vmatprep.subr.mxu0 %v839
    %1053 = vmatpush1.msra.mxu0 %v838
    %1054 = vmatprep.subr.mxu0 %v847
    %1055 = vmatpush1.msra.mxu0 %v846
    %1056 = vmatprep.subr.mxu0 %v855
    %1057 = vmatpush1.msra.mxu0 %v854
    %1058 = vmatprep.subr.mxu0 %v863
    %1059 = vmatpush1.msra.mxu0 %v862
    %1060 = vmatprep.subr.mxu0 %v871
    %1061 = vmatpush1.msra.mxu0 %v870
    %1062 = vmatprep.subr.mxu0 %v879
    %1063 = vmatpush1.msra.mxu0 %v878
    %1064 = vmatprep.subr.mxu0 %v887
    %1065 = vmatpush1.msra.mxu0 %v886
    %1066 = vmatprep.subr.mxu0 %v895
    %1067 = vmatpush1.msra.mxu0 %v894
    %1068 = vmatprep.subr.mxu0 %v903
    %1069 = vmatpush1.msra.mxu0 %v902
    %1070 = vmatprep.subr.mxu0 %v911
    %1071 = vmatpush1.msra.mxu0 %v910
    %1072 = vmatprep.subr.mxu0 %v919
    %1073 = vmatpush1.msra.mxu0 %v918
    %1074 = vmatprep.subr.mxu0 %v927
    %1075 = vmatpush1.msra.mxu0 %v926
    %1076 = vmatprep.subr.mxu0 %v935
    %1077 = vmatpush1.msra.mxu0 %v934
    %1078 = vmatprep.subr.mxu0 %v943
    %1079 = vmatpush1.msra.mxu0 %v942
    %1080 = vmatprep.subr.mxu0 %v951
    %1081 = vmatpush1.msra.mxu0 %v950
    %1082 = vmatprep.subr.mxu0 %v959
    %1083 = vmatpush1.msra.mxu0 %v958
    %1084 = vmatprep.subr.mxu0 %v967
    %1085 = vmatpush1.msra.mxu0 %v966
    %1086 = vmatprep.subr.mxu0 %v975
    %1087 = vmatpush1.msra.mxu0 %v974
    %1088 = vmatprep.subr.mxu0 %v983
    %1089 = vmatpush1.msra.mxu0 %v982
    %1090 = vmatprep.subr.mxu0 %v991
    %1091 = vmatpush1.msra.mxu0 %v990
    %1092 = vmatprep.subr.mxu0 %v999
    %1093 = vmatpush1.msra.mxu0 %v998
    %1094 = vmatprep.subr.mxu0 %v1007
    %1095 = vmatpush1.msra.mxu0 %v1006
    %1096 = vmatprep.subr.mxu0 %v1015
    %1097 = vmatpush1.msra.mxu0 %v1014
    %1098 = vmatprep.subr.mxu0 %v1023
    %1099 = vmatpush1.msra.mxu0 %v1022
    %1100 = vmatprep.subr.mxu0 %v1031
    %1101 = vmatpush1.msra.mxu0 %v1030
    %1102 = vmatprep.mubr.f32.mxu0 0.0
    %1103 = vmatmul.mubr.f32.gmra.mrb[0].mxu0 0.0
    %v1104 = vpop.f32.mrb[0].mxu0
    %v1105 = vadd.f32 0.0, %v1104
    %v1106 = vpop.f32.mrb[0].mxu0
    %v1107 = vadd.f32 0.0, %v1106
    %1108 = vdwg.mxu0
    %1109 = vmatprep.subr.mxu0 %v785
    %1110 = vmatpush1.msra.mxu0 %v784
    %1111 = vmatprep.subr.mxu0 %v793
    %1112 = vmatpush1.msra.mxu0 %v792
    %1113 = vmatprep.subr.mxu0 %v801
    %1114 = vmatpush1.msra.mxu0 %v800
    %1115 = vmatprep.subr.mxu0 %v809
    %1116 = vmatpush1.msra.mxu0 %v808
    %1117 = vmatprep.subr.mxu0 %v817
    %1118 = vmatpush1.msra.mxu0 %v816
    %1119 = vmatprep.subr.mxu0 %v825
    %1120 = vmatpush1.msra.mxu0 %v824
    %1121 = vmatprep.subr.mxu0 %v833
    %1122 = vmatpush1.msra.mxu0 %v832
    %1123 = vmatprep.subr.mxu0 %v841
    %1124 = vmatpush1.msra.mxu0 %v840
    %1125 = vmatprep.subr.mxu0 %v849
    %1126 = vmatpush1.msra.mxu0 %v848
    %1127 = vmatprep.subr.mxu0 %v857
    %1128 = vmatpush1.msra.mxu0 %v856
    %1129 = vmatprep.subr.mxu0 %v865
    %1130 = vmatpush1.msra.mxu0 %v864
    %1131 = vmatprep.subr.mxu0 %v873
    %1132 = vmatpush1.msra.mxu0 %v872
    %1133 = vmatprep.subr.mxu0 %v881
    %1134 = vmatpush1.msra.mxu0 %v880
    %1135 = vmatprep.subr.mxu0 %v889
    %1136 = vmatpush1.msra.mxu0 %v888
    %1137 = vmatprep.subr.mxu0 %v897
    %1138 = vmatpush1.msra.mxu0 %v896
    %1139 = vmatprep.subr.mxu0 %v905
    %1140 = vmatpush1.msra.mxu0 %v904
    %1141 = vmatprep.subr.mxu0 %v913
    %1142 = vmatpush1.msra.mxu0 %v912
    %1143 = vmatprep.subr.mxu0 %v921
    %1144 = vmatpush1.msra.mxu0 %v920
    %1145 = vmatprep.subr.mxu0 %v929
    %1146 = vmatpush1.msra.mxu0 %v928
    %1147 = vmatprep.subr.mxu0 %v937
    %1148 = vmatpush1.msra.mxu0 %v936
    %1149 = vmatprep.subr.mxu0 %v945
    %1150 = vmatpush1.msra.mxu0 %v944
    %1151 = vmatprep.subr.mxu0 %v953
    %1152 = vmatpush1.msra.mxu0 %v952
    %1153 = vmatprep.subr.mxu0 %v961
    %1154 = vmatpush1.msra.mxu0 %v960
    %1155 = vmatprep.subr.mxu0 %v969
    %1156 = vmatpush1.msra.mxu0 %v968
    %1157 = vmatprep.subr.mxu0 %v977
    %1158 = vmatpush1.msra.mxu0 %v976
    %1159 = vmatprep.subr.mxu0 %v985
    %1160 = vmatpush1.msra.mxu0 %v984
    %1161 = vmatprep.subr.mxu0 %v993
    %1162 = vmatpush1.msra.mxu0 %v992
    %1163 = vmatprep.subr.mxu0 %v1001
    %1164 = vmatpush1.msra.mxu0 %v1000
    %1165 = vmatprep.subr.mxu0 %v1009
    %1166 = vmatpush1.msra.mxu0 %v1008
    %1167 = vmatprep.subr.mxu0 %v1017
    %1168 = vmatpush1.msra.mxu0 %v1016
    %1169 = vmatprep.subr.mxu0 %v1025
    %1170 = vmatpush1.msra.mxu0 %v1024
    %1171 = vmatprep.subr.mxu0 %v1033
    %1172 = vmatpush1.msra.mxu0 %v1032
    %1173 = vmatprep.mubr.f32.mxu0 0.0
    %1174 = vmatmul.mubr.f32.gmra.mrb[0].mxu0 0.0
    %v1175 = vpop.f32.mrb[0].mxu0
    %v1176 = vadd.f32 0.0, %v1175
    %v1177 = vpop.f32.mrb[0].mxu0
    %v1178 = vadd.f32 0.0, %v1177
    %1179 = vdwg.mxu0
    %1180 = vmatprep.subr.mxu0 %v787
    %1181 = vmatpush1.msra.mxu0 %v786
    %1182 = vmatprep.subr.mxu0 %v795
    %1183 = vmatpush1.msra.mxu0 %v794
    %1184 = vmatprep.subr.mxu0 %v803
    %1185 = vmatpush1.msra.mxu0 %v802
    %1186 = vmatprep.subr.mxu0 %v811
    %1187 = vmatpush1.msra.mxu0 %v810
    %1188 = vmatprep.subr.mxu0 %v819
    %1189 = vmatpush1.msra.mxu0 %v818
    %1190 = vmatprep.subr.mxu0 %v827
    %1191 = vmatpush1.msra.mxu0 %v826
    %1192 = vmatprep.subr.mxu0 %v835
    %1193 = vmatpush1.msra.mxu0 %v834
    %1194 = vmatprep.subr.mxu0 %v843
    %1195 = vmatpush1.msra.mxu0 %v842
    %1196 = vmatprep.subr.mxu0 %v851
    %1197 = vmatpush1.msra.mxu0 %v850
    %1198 = vmatprep.subr.mxu0 %v859
    %1199 = vmatpush1.msra.mxu0 %v858
    %1200 = vmatprep.subr.mxu0 %v867
    %1201 = vmatpush1.msra.mxu0 %v866
    %1202 = vmatprep.subr.mxu0 %v875
    %1203 = vmatpush1.msra.mxu0 %v874
    %1204 = vmatprep.subr.mxu0 %v883
    %1205 = vmatpush1.msra.mxu0 %v882
    %1206 = vmatprep.subr.mxu0 %v891
    %1207 = vmatpush1.msra.mxu0 %v890
    %1208 = vmatprep.subr.mxu0 %v899
    %1209 = vmatpush1.msra.mxu0 %v898
    %1210 = vmatprep.subr.mxu0 %v907
    %1211 = vmatpush1.msra.mxu0 %v906
    %1212 = vmatprep.subr.mxu0 %v915
    %1213 = vmatpush1.msra.mxu0 %v914
    %1214 = vmatprep.subr.mxu0 %v923
    %1215 = vmatpush1.msra.mxu0 %v922
    %1216 = vmatprep.subr.mxu0 %v931
    %1217 = vmatpush1.msra.mxu0 %v930
    %1218 = vmatprep.subr.mxu0 %v939
    %1219 = vmatpush1.msra.mxu0 %v938
    %1220 = vmatprep.subr.mxu0 %v947
    %1221 = vmatpush1.msra.mxu0 %v946
    %1222 = vmatprep.subr.mxu0 %v955
    %1223 = vmatpush1.msra.mxu0 %v954
    %1224 = vmatprep.subr.mxu0 %v963
    %1225 = vmatpush1.msra.mxu0 %v962
    %1226 = vmatprep.subr.mxu0 %v971
    %1227 = vmatpush1.msra.mxu0 %v970
    %1228 = vmatprep.subr.mxu0 %v979
    %1229 = vmatpush1.msra.mxu0 %v978
    %1230 = vmatprep.subr.mxu0 %v987
    %1231 = vmatpush1.msra.mxu0 %v986
    %1232 = vmatprep.subr.mxu0 %v995
    %1233 = vmatpush1.msra.mxu0 %v994
    %1234 = vmatprep.subr.mxu0 %v1003
    %1235 = vmatpush1.msra.mxu0 %v1002
    %1236 = vmatprep.subr.mxu0 %v1011
    %1237 = vmatpush1.msra.mxu0 %v1010
    %1238 = vmatprep.subr.mxu0 %v1019
    %1239 = vmatpush1.msra.mxu0 %v1018
    %1240 = vmatprep.subr.mxu0 %v1027
    %1241 = vmatpush1.msra.mxu0 %v1026
    %1242 = vmatprep.subr.mxu0 %v1035
    %1243 = vmatpush1.msra.mxu0 %v1034
    %1244 = vmatprep.mubr.f32.mxu0 0.0
    %1245 = vmatmul.mubr.f32.gmra.mrb[0].mxu0 0.0
    %v1246 = vpop.f32.mrb[0].mxu0
    %v1247 = vadd.f32 0.0, %v1246
    %v1248 = vpop.f32.mrb[0].mxu0
    %v1249 = vadd.f32 0.0, %v1248
    %1250 = vdwg.mxu0
    %1251 = vmatprep.subr.mxu0 %v789
    %1252 = vmatpush1.msra.mxu0 %v788
    %1253 = vmatprep.subr.mxu0 %v797
    %1254 = vmatpush1.msra.mxu0 %v796
    %1255 = vmatprep.subr.mxu0 %v805
    %1256 = vmatpush1.msra.mxu0 %v804
    %1257 = vmatprep.subr.mxu0 %v813
    %1258 = vmatpush1.msra.mxu0 %v812
    %1259 = vmatprep.subr.mxu0 %v821
    %1260 = vmatpush1.msra.mxu0 %v820
    %1261 = vmatprep.subr.mxu0 %v829
    %1262 = vmatpush1.msra.mxu0 %v828
    %1263 = vmatprep.subr.mxu0 %v837
    %1264 = vmatpush1.msra.mxu0 %v836
    %1265 = vmatprep.subr.mxu0 %v845
    %1266 = vmatpush1.msra.mxu0 %v844
    %1267 = vmatprep.subr.mxu0 %v853
    %1268 = vmatpush1.msra.mxu0 %v852
    %1269 = vmatprep.subr.mxu0 %v861
    %1270 = vmatpush1.msra.mxu0 %v860
    %1271 = vmatprep.subr.mxu0 %v869
    %1272 = vmatpush1.msra.mxu0 %v868
    %1273 = vmatprep.subr.mxu0 %v877
    %1274 = vmatpush1.msra.mxu0 %v876
    %1275 = vmatprep.subr.mxu0 %v885
    %1276 = vmatpush1.msra.mxu0 %v884
    %1277 = vmatprep.subr.mxu0 %v893
    %1278 = vmatpush1.msra.mxu0 %v892
    %1279 = vmatprep.subr.mxu0 %v901
    %1280 = vmatpush1.msra.mxu0 %v900
    %1281 = vmatprep.subr.mxu0 %v909
    %1282 = vmatpush1.msra.mxu0 %v908
    %1283 = vmatprep.subr.mxu0 %v917
    %1284 = vmatpush1.msra.mxu0 %v916
    %1285 = vmatprep.subr.mxu0 %v925
    %1286 = vmatpush1.msra.mxu0 %v924
    %1287 = vmatprep.subr.mxu0 %v933
    %1288 = vmatpush1.msra.mxu0 %v932
    %1289 = vmatprep.subr.mxu0 %v941
    %1290 = vmatpush1.msra.mxu0 %v940
    %1291 = vmatprep.subr.mxu0 %v949
    %1292 = vmatpush1.msra.mxu0 %v948
    %1293 = vmatprep.subr.mxu0 %v957
    %1294 = vmatpush1.msra.mxu0 %v956
    %1295 = vmatprep.subr.mxu0 %v965
    %1296 = vmatpush1.msra.mxu0 %v964
    %1297 = vmatprep.subr.mxu0 %v973
    %1298 = vmatpush1.msra.mxu0 %v972
    %1299 = vmatprep.subr.mxu0 %v981
    %1300 = vmatpush1.msra.mxu0 %v980
    %1301 = vmatprep.subr.mxu0 %v989
    %1302 = vmatpush1.msra.mxu0 %v988
    %1303 = vmatprep.subr.mxu0 %v997
    %1304 = vmatpush1.msra.mxu0 %v996
    %1305 = vmatprep.subr.mxu0 %v1005
    %1306 = vmatpush1.msra.mxu0 %v1004
    %1307 = vmatprep.subr.mxu0 %v1013
    %1308 = vmatpush1.msra.mxu0 %v1012
    %1309 = vmatprep.subr.mxu0 %v1021
    %1310 = vmatpush1.msra.mxu0 %v1020
    %1311 = vmatprep.subr.mxu0 %v1029
    %1312 = vmatpush1.msra.mxu0 %v1028
    %1313 = vmatprep.subr.mxu0 %v1037
    %1314 = vmatpush1.msra.mxu0 %v1036
    %1315 = vmatprep.mubr.f32.mxu0 0.0
    %1316 = vmatmul.mubr.f32.gmra.mrb[0].mxu0 0.0
    %v1317 = vpop.f32.mrb[0].mxu0
    %v1318 = vadd.f32 0.0, %v1317
    %v1319 = vpop.f32.mrb[0].mxu0
    %v1320 = vadd.f32 0.0, %v1319
    %1321 = vdwg.mxu0
    %v1322 = vld [vmem:[#allocation2] sm:$0xff]
    %v1324 = vcombine.high %v1322, %v1322
    %v1326 = vunpack.c.l.s4 1983009808
    %v1327 = vunpack.c.0.s8 %v1326
    %v1328 = vlaneseq
    %v1329 = vshrl.u32 %v1328, 7
    %v1330 = vsub.s32 %v1327, %v1329
    %v1331 = vrot.slane %v1322, %v1330
    %v1333 = vunpack.c.l.s4 1983009808
    %v1334 = vunpack.c.0.s8 %v1333
    %v1335 = vlaneseq
    %v1336 = vshrl.u32 %v1335, 7
    %v1337 = vsub.s32 %v1334, %v1336
    %v1338 = vrot.slane %v1324, %v1337
    %v1339 = vcombine.high %v1331, %v1331
    %v1340 = vcombine.high %v1338, %v1338
    %v1345 = vadd.f32 %v1105, %v1331
    %v1346 = vadd.f32 %v1107, %v1339
    %v1347 = vadd.f32 %v1176, %v1338
    %v1348 = vadd.f32 %v1178, %v1340
    %v1349 = vxor.u32 %v1345, 2147483648
    %v1350 = vmul.f32 %v1349, 1.442695
    %v1351 = vpow.pop %v1350
    %v1352 = vadd.f32 %v1351, 1.0
    %v1353 = vrcp.pop %v1352
    %v1354 = vmul.f32 1.0, %v1353
    %v1355 = vxor.u32 %v1346, 2147483648
    %v1356 = vmul.f32 %v1355, 1.442695
    %v1357 = vpow.pop %v1356
    %v1358 = vadd.f32 %v1357, 1.0
    %v1359 = vrcp.pop %v1358
    %v1360 = vmul.f32 1.0, %v1359
    %v1361 = vtanh.pop %v1347
    %v1362 = vxor.u32 %v1348, 2147483648
    %v1363 = vmul.f32 %v1362, 1.442695
    %v1364 = vpow.pop %v1363
    %v1365 = vadd.f32 %v1364, 1.0
    %v1366 = vrcp.pop %v1365
    %v1367 = vmul.f32 1.0, %v1366
    %v1368 = vmul.f32 %v1360, 0.0
    %v1369 = vmul.f32 %v1354, %v1361
    %v1370 = vadd.f32 %v1368, %v1369
    %v1371 = vtanh.pop %v1370
    %v1372 = vmul.f32 %v1367, %v1371
    %s1373 = scalar_lea.vmem [#allocation3], 56
    %v1374 = vld [vmem:[%s1373] sm:$0xff]
    %v1376 = vcombine.high %v1374, %v1374
    %v1378 = vunpack.c.l.s4 1983009808
    %v1379 = vunpack.c.0.s8 %v1378
    %v1380 = vlaneseq
    %v1381 = vshrl.u32 %v1380, 7
    %v1382 = vsub.s32 %v1379, %v1381
    %v1383 = vrot.slane %v1374, %v1382
    %v1385 = vunpack.c.l.s4 1983009808
    %v1386 = vunpack.c.0.s8 %v1385
    %v1387 = vlaneseq
    %v1388 = vshrl.u32 %v1387, 7
    %v1389 = vsub.s32 %v1386, %v1388
    %v1390 = vrot.slane %v1376, %v1389
    %v1391 = vcombine.high %v1383, %v1383
    %v1392 = vcombine.high %v1390, %v1390
    %v1397 = vadd.f32 %v1247, %v1383
    %v1398 = vadd.f32 %v1249, %v1391
    %v1399 = vadd.f32 %v1318, %v1390
    %v1400 = vadd.f32 %v1320, %v1392
    %v1401 = vxor.u32 %v1397, 2147483648
    %v1402 = vmul.f32 %v1401, 1.442695
    %v1403 = vpow.pop %v1402
    %v1404 = vadd.f32 %v1403, 1.0
    %v1405 = vrcp.pop %v1404
    %v1406 = vmul.f32 1.0, %v1405
    %v1407 = vxor.u32 %v1398, 2147483648
    %v1408 = vmul.f32 %v1407, 1.442695
    %v1409 = vpow.pop %v1408
    %v1410 = vadd.f32 %v1409, 1.0
    %v1411 = vrcp.pop %v1410
    %v1412 = vmul.f32 1.0, %v1411
    %v1413 = vtanh.pop %v1399
    %v1414 = vxor.u32 %v1400, 2147483648
    %v1415 = vmul.f32 %v1414, 1.442695
    %v1416 = vpow.pop %v1415
    %v1417 = vadd.f32 %v1416, 1.0
    %v1418 = vrcp.pop %v1417
    %v1419 = vmul.f32 1.0, %v1418
    %v1420 = vmul.f32 %v1412, 0.0
    %v1421 = vmul.f32 %v1406, %v1413
    %v1422 = vadd.f32 %v1420, %v1421
    %v1423 = vtanh.pop %v1422
    %v1424 = vmul.f32 %v1419, %v1423
    %1425 = vst [vmem:[#allocation4] sm:$0x3] %v1372
    %s1426 = scalar_lea.vmem [#allocation5], 14
    %1427 = vst [vmem:[%s1426] sm:$0x3] %v1424
    %1428 = vmatprep.subr.mxu0 %v783
    %1429 = vmatpush1.msra.mxu0 %v782
    %1430 = vmatprep.subr.mxu0 %v791
    %1431 = vmatpush1.msra.mxu0 %v790
    %1432 = vmatprep.subr.mxu0 %v799
    %1433 = vmatpush1.msra.mxu0 %v798
    %1434 = vmatprep.subr.mxu0 %v807
    %1435 = vmatpush1.msra.mxu0 %v806
    %1436 = vmatprep.subr.mxu0 %v815
    %1437 = vmatpush1.msra.mxu0 %v814
    %1438 = vmatprep.subr.mxu0 %v823
    %1439 = vmatpush1.msra.mxu0 %v822
    %1440 = vmatprep.subr.mxu0 %v831
    %1441 = vmatpush1.msra.mxu0 %v830
    %1442 = vmatprep.subr.mxu0 %v839
    %1443 = vmatpush1.msra.mxu0 %v838
    %1444 = vmatprep.subr.mxu0 %v847
    %1445 = vmatpush1.msra.mxu0 %v846
    %1446 = vmatprep.subr.mxu0 %v855
    %1447 = vmatpush1.msra.mxu0 %v854
    %1448 = vmatprep.subr.mxu0 %v863
    %1449 = vmatpush1.msra.mxu0 %v862
    %1450 = vmatprep.subr.mxu0 %v871
    %1451 = vmatpush1.msra.mxu0 %v870
    %1452 = vmatprep.subr.mxu0 %v879
    %1453 = vmatpush1.msra.mxu0 %v878
    %1454 = vmatprep.subr.mxu0 %v887
    %1455 = vmatpush1.msra.mxu0 %v886
    %1456 = vmatprep.subr.mxu0 %v895
    %1457 = vmatpush1.msra.mxu0 %v894
    %1458 = vmatprep.subr.mxu0 %v903
    %1459 = vmatpush1.msra.mxu0 %v902
    %1460 = vmatprep.subr.mxu0 %v911
    %1461 = vmatpush1.msra.mxu0 %v910
    %1462 = vmatprep.subr.mxu0 %v919
    %1463 = vmatpush1.msra.mxu0 %v918
    %1464 = vmatprep.subr.mxu0 %v927
    %1465 = vmatpush1.msra.mxu0 %v926
    %1466 = vmatprep.subr.mxu0 %v935
    %1467 = vmatpush1.msra.mxu0 %v934
    %1468 = vmatprep.subr.mxu0 %v943
    %1469 = vmatpush1.msra.mxu0 %v942
    %1470 = vmatprep.subr.mxu0 %v951
    %1471 = vmatpush1.msra.mxu0 %v950
    %1472 = vmatprep.subr.mxu0 %v959
    %1473 = vmatpush1.msra.mxu0 %v958
    %1474 = vmatprep.subr.mxu0 %v967
    %1475 = vmatpush1.msra.mxu0 %v966
    %1476 = vmatprep.subr.mxu0 %v975
    %1477 = vmatpush1.msra.mxu0 %v974
    %1478 = vmatprep.subr.mxu0 %v983
    %1479 = vmatpush1.msra.mxu0 %v982
    %1480 = vmatprep.subr.mxu0 %v991
    %1481 = vmatpush1.msra.mxu0 %v990
    %1482 = vmatprep.subr.mxu0 %v999
    %1483 = vmatpush1.msra.mxu0 %v998
    %1484 = vmatprep.subr.mxu0 %v1007
    %1485 = vmatpush1.msra.mxu0 %v1006
    %1486 = vmatprep.subr.mxu0 %v1015
    %1487 = vmatpush1.msra.mxu0 %v1014
    %1488 = vmatprep.subr.mxu0 %v1023
    %1489 = vmatpush1.msra.mxu0 %v1022
    %1490 = vmatprep.subr.mxu0 %v1031
    %1491 = vmatpush1.msra.mxu0 %v1030
    %1492 = vmatprep.mubr.f32.mxu0 %v1424
    %1493 = vmatmul.mubr.f32.gmra.mrb[0].mxu0 %v1372
    %v1494 = vpop.f32.mrb[0].mxu0
    %v1495 = vadd.f32 0.0, %v1494
    %v1496 = vpop.f32.mrb[0].mxu0
    %v1497 = vadd.f32 0.0, %v1496
    %1498 = vdwg.mxu0
    %1499 = vmatprep.subr.mxu0 %v785
    %1500 = vmatpush1.msra.mxu0 %v784
    %1501 = vmatprep.subr.mxu0 %v793
    %1502 = vmatpush1.msra.mxu0 %v792
    %1503 = vmatprep.subr.mxu0 %v801
    %1504 = vmatpush1.msra.mxu0 %v800
    %1505 = vmatprep.subr.mxu0 %v809
    %1506 = vmatpush1.msra.mxu0 %v808
    %1507 = vmatprep.subr.mxu0 %v817
    %1508 = vmatpush1.msra.mxu0 %v816
    %1509 = vmatprep.subr.mxu0 %v825
    %1510 = vmatpush1.msra.mxu0 %v824
    %1511 = vmatprep.subr.mxu0 %v833
    %1512 = vmatpush1.msra.mxu0 %v832
    %1513 = vmatprep.subr.mxu0 %v841
    %1514 = vmatpush1.msra.mxu0 %v840
    %1515 = vmatprep.subr.mxu0 %v849
    %1516 = vmatpush1.msra.mxu0 %v848
    %1517 = vmatprep.subr.mxu0 %v857
    %1518 = vmatpush1.msra.mxu0 %v856
    %1519 = vmatprep.subr.mxu0 %v865
    %1520 = vmatpush1.msra.mxu0 %v864
    %1521 = vmatprep.subr.mxu0 %v873
    %1522 = vmatpush1.msra.mxu0 %v872
    %1523 = vmatprep.subr.mxu0 %v881
    %1524 = vmatpush1.msra.mxu0 %v880
    %1525 = vmatprep.subr.mxu0 %v889
    %1526 = vmatpush1.msra.mxu0 %v888
    %1527 = vmatprep.subr.mxu0 %v897
    %1528 = vmatpush1.msra.mxu0 %v896
    %1529 = vmatprep.subr.mxu0 %v905
    %1530 = vmatpush1.msra.mxu0 %v904
    %1531 = vmatprep.subr.mxu0 %v913
    %1532 = vmatpush1.msra.mxu0 %v912
    %1533 = vmatprep.subr.mxu0 %v921
    %1534 = vmatpush1.msra.mxu0 %v920
    %1535 = vmatprep.subr.mxu0 %v929
    %1536 = vmatpush1.msra.mxu0 %v928
    %1537 = vmatprep.subr.mxu0 %v937
    %1538 = vmatpush1.msra.mxu0 %v936
    %1539 = vmatprep.subr.mxu0 %v945
    %1540 = vmatpush1.msra.mxu0 %v944
    %1541 = vmatprep.subr.mxu0 %v953
    %1542 = vmatpush1.msra.mxu0 %v952
    %1543 = vmatprep.subr.mxu0 %v961
    %1544 = vmatpush1.msra.mxu0 %v960
    %1545 = vmatprep.subr.mxu0 %v969
    %1546 = vmatpush1.msra.mxu0 %v968
    %1547 = vmatprep.subr.mxu0 %v977
    %1548 = vmatpush1.msra.mxu0 %v976
    %1549 = vmatprep.subr.mxu0 %v985
    %1550 = vmatpush1.msra.mxu0 %v984
    %1551 = vmatprep.subr.mxu0 %v993
    %1552 = vmatpush1.msra.mxu0 %v992
    %1553 = vmatprep.subr.mxu0 %v1001
    %1554 = vmatpush1.msra.mxu0 %v1000
    %1555 = vmatprep.subr.mxu0 %v1009
    %1556 = vmatpush1.msra.mxu0 %v1008
    %1557 = vmatprep.subr.mxu0 %v1017
    %1558 = vmatpush1.msra.mxu0 %v1016
    %1559 = vmatprep.subr.mxu0 %v1025
    %1560 = vmatpush1.msra.mxu0 %v1024
    %1561 = vmatprep.subr.mxu0 %v1033
    %1562 = vmatpush1.msra.mxu0 %v1032
    %1563 = vmatprep.mubr.f32.mxu0 %v1424
    %1564 = vmatmul.mubr.f32.gmra.mrb[0].mxu0 %v1372
    %v1565 = vpop.f32.mrb[0].mxu0
    %v1566 = vadd.f32 0.0, %v1565
    %v1567 = vpop.f32.mrb[0].mxu0
    %v1568 = vadd.f32 0.0, %v1567
    %1569 = vdwg.mxu0
    %1570 = vmatprep.subr.mxu0 %v787
    %1571 = vmatpush1.msra.mxu0 %v786
    %1572 = vmatprep.subr.mxu0 %v795
    %1573 = vmatpush1.msra.mxu0 %v794
    %1574 = vmatprep.subr.mxu0 %v803
    %1575 = vmatpush1.msra.mxu0 %v802
    %1576 = vmatprep.subr.mxu0 %v811
    %1577 = vmatpush1.msra.mxu0 %v810
    %1578 = vmatprep.subr.mxu0 %v819
    %1579 = vmatpush1.msra.mxu0 %v818
    %1580 = vmatprep.subr.mxu0 %v827
    %1581 = vmatpush1.msra.mxu0 %v826
    %1582 = vmatprep.subr.mxu0 %v835
    %1583 = vmatpush1.msra.mxu0 %v834
    %1584 = vmatprep.subr.mxu0 %v843
    %1585 = vmatpush1.msra.mxu0 %v842
    %1586 = vmatprep.subr.mxu0 %v851
    %1587 = vmatpush1.msra.mxu0 %v850
    %1588 = vmatprep.subr.mxu0 %v859
    %1589 = vmatpush1.msra.mxu0 %v858
    %1590 = vmatprep.subr.mxu0 %v867
    %1591 = vmatpush1.msra.mxu0 %v866
    %1592 = vmatprep.subr.mxu0 %v875
    %1593 = vmatpush1.msra.mxu0 %v874
    %1594 = vmatprep.subr.mxu0 %v883
    %1595 = vmatpush1.msra.mxu0 %v882
    %1596 = vmatprep.subr.mxu0 %v891
    %1597 = vmatpush1.msra.mxu0 %v890
    %1598 = vmatprep.subr.mxu0 %v899
    %1599 = vmatpush1.msra.mxu0 %v898
    %1600 = vmatprep.subr.mxu0 %v907
    %1601 = vmatpush1.msra.mxu0 %v906
    %1602 = vmatprep.subr.mxu0 %v915
    %1603 = vmatpush1.msra.mxu0 %v914
    %1604 = vmatprep.subr.mxu0 %v923
    %1605 = vmatpush1.msra.mxu0 %v922
    %1606 = vmatprep.subr.mxu0 %v931
    %1607 = vmatpush1.msra.mxu0 %v930
    %1608 = vmatprep.subr.mxu0 %v939
    %1609 = vmatpush1.msra.mxu0 %v938
    %1610 = vmatprep.subr.mxu0 %v947
    %1611 = vmatpush1.msra.mxu0 %v946
    %1612 = vmatprep.subr.mxu0 %v955
    %1613 = vmatpush1.msra.mxu0 %v954
    %1614 = vmatprep.subr.mxu0 %v963
    %1615 = vmatpush1.msra.mxu0 %v962
    %1616 = vmatprep.subr.mxu0 %v971
    %1617 = vmatpush1.msra.mxu0 %v970
    %1618 = vmatprep.subr.mxu0 %v979
    %1619 = vmatpush1.msra.mxu0 %v978
    %1620 = vmatprep.subr.mxu0 %v987
    %1621 = vmatpush1.msra.mxu0 %v986
    %1622 = vmatprep.subr.mxu0 %v995
    %1623 = vmatpush1.msra.mxu0 %v994
    %1624 = vmatprep.subr.mxu0 %v1003
    %1625 = vmatpush1.msra.mxu0 %v1002
    %1626 = vmatprep.subr.mxu0 %v1011
    %1627 = vmatpush1.msra.mxu0 %v1010
    %1628 = vmatprep.subr.mxu0 %v1019
    %1629 = vmatpush1.msra.mxu0 %v1018
    %1630 = vmatprep.subr.mxu0 %v1027
    %1631 = vmatpush1.msra.mxu0 %v1026
    %1632 = vmatprep.subr.mxu0 %v1035
    %1633 = vmatpush1.msra.mxu0 %v1034
    %1634 = vmatprep.mubr.f32.mxu0 %v1424
    %1635 = vmatmul.mubr.f32.gmra.mrb[0].mxu0 %v1372
    %v1636 = vpop.f32.mrb[0].mxu0
    %v1637 = vadd.f32 0.0, %v1636
    %v1638 = vpop.f32.mrb[0].mxu0
    %v1639 = vadd.f32 0.0, %v1638
    %1640 = vdwg.mxu0
    %1641 = vmatprep.subr.mxu0 %v789
    %1642 = vmatpush1.msra.mxu0 %v788
    %1643 = vmatprep.subr.mxu0 %v797
    %1644 = vmatpush1.msra.mxu0 %v796
    %1645 = vmatprep.subr.mxu0 %v805
    %1646 = vmatpush1.msra.mxu0 %v804
    %1647 = vmatprep.subr.mxu0 %v813
    %1648 = vmatpush1.msra.mxu0 %v812
    %1649 = vmatprep.subr.mxu0 %v821
    %1650 = vmatpush1.msra.mxu0 %v820
    %1651 = vmatprep.subr.mxu0 %v829
    %1652 = vmatpush1.msra.mxu0 %v828
    %1653 = vmatprep.subr.mxu0 %v837
    %1654 = vmatpush1.msra.mxu0 %v836
    %1655 = vmatprep.subr.mxu0 %v845
    %1656 = vmatpush1.msra.mxu0 %v844
    %1657 = vmatprep.subr.mxu0 %v853
    %1658 = vmatpush1.msra.mxu0 %v852
    %1659 = vmatprep.subr.mxu0 %v861
    %1660 = vmatpush1.msra.mxu0 %v860
    %1661 = vmatprep.subr.mxu0 %v869
    %1662 = vmatpush1.msra.mxu0 %v868
    %1663 = vmatprep.subr.mxu0 %v877
    %1664 = vmatpush1.msra.mxu0 %v876
    %1665 = vmatprep.subr.mxu0 %v885
    %1666 = vmatpush1.msra.mxu0 %v884
    %1667 = vmatprep.subr.mxu0 %v893
    %1668 = vmatpush1.msra.mxu0 %v892
    %1669 = vmatprep.subr.mxu0 %v901
    %1670 = vmatpush1.msra.mxu0 %v900
    %1671 = vmatprep.subr.mxu0 %v909
    %1672 = vmatpush1.msra.mxu0 %v908
    %1673 = vmatprep.subr.mxu0 %v917
    %1674 = vmatpush1.msra.mxu0 %v916
    %1675 = vmatprep.subr.mxu0 %v925
    %1676 = vmatpush1.msra.mxu0 %v924
    %1677 = vmatprep.subr.mxu0 %v933
    %1678 = vmatpush1.msra.mxu0 %v932
    %1679 = vmatprep.subr.mxu0 %v941
    %1680 = vmatpush1.msra.mxu0 %v940
    %1681 = vmatprep.subr.mxu0 %v949
    %1682 = vmatpush1.msra.mxu0 %v948
    %1683 = vmatprep.subr.mxu0 %v957
    %1684 = vmatpush1.msra.mxu0 %v956
    %1685 = vmatprep.subr.mxu0 %v965
    %1686 = vmatpush1.msra.mxu0 %v964
    %1687 = vmatprep.subr.mxu0 %v973
    %1688 = vmatpush1.msra.mxu0 %v972
    %1689 = vmatprep.subr.mxu0 %v981
    %1690 = vmatpush1.msra.mxu0 %v980
    %1691 = vmatprep.subr.mxu0 %v989
    %1692 = vmatpush1.msra.mxu0 %v988
    %1693 = vmatprep.subr.mxu0 %v997
    %1694 = vmatpush1.msra.mxu0 %v996
    %1695 = vmatprep.subr.mxu0 %v1005
    %1696 = vmatpush1.msra.mxu0 %v1004
    %1697 = vmatprep.subr.mxu0 %v1013
    %1698 = vmatpush1.msra.mxu0 %v1012
    %1699 = vmatprep.subr.mxu0 %v1021
    %1700 = vmatpush1.msra.mxu0 %v1020
    %1701 = vmatprep.subr.mxu0 %v1029
    %1702 = vmatpush1.msra.mxu0 %v1028
    %1703 = vmatprep.subr.mxu0 %v1037
    %1704 = vmatpush1.msra.mxu0 %v1036
    %1705 = vmatprep.mubr.f32.mxu0 %v1424
    %1706 = vmatmul.mubr.f32.gmra.mrb[0].mxu0 %v1372
    %v1707 = vpop.f32.mrb[0].mxu0
    %v1708 = vadd.f32 0.0, %v1707
    %v1709 = vpop.f32.mrb[0].mxu0
    %v1710 = vadd.f32 0.0, %v1709
    %1711 = vdwg.mxu0
    %s1712 = scalar_lea.vmem [#allocation2], 8
    %v1713 = vld [vmem:[%s1712] sm:$0xff]
    %v1715 = vcombine.high %v1713, %v1713
    %v1717 = vunpack.c.l.s4 1983009808
    %v1718 = vunpack.c.0.s8 %v1717
    %v1719 = vlaneseq
    %v1720 = vshrl.u32 %v1719, 7
    %v1721 = vsub.s32 %v1718, %v1720
    %v1722 = vrot.slane %v1713, %v1721
    %v1724 = vunpack.c.l.s4 1983009808
    %v1725 = vunpack.c.0.s8 %v1724
    %v1726 = vlaneseq
    %v1727 = vshrl.u32 %v1726, 7
    %v1728 = vsub.s32 %v1725, %v1727
    %v1729 = vrot.slane %v1715, %v1728
    %v1730 = vcombine.high %v1722, %v1722
    %v1731 = vcombine.high %v1729, %v1729
    %v1736 = vadd.f32 %v1495, %v1722
    %v1737 = vadd.f32 %v1497, %v1730
    %v1738 = vadd.f32 %v1566, %v1729
    %v1739 = vadd.f32 %v1568, %v1731
    %v1740 = vxor.u32 %v1736, 2147483648
    %v1741 = vmul.f32 %v1740, 1.442695
    %v1742 = vpow.pop %v1741
    %v1743 = vadd.f32 %v1742, 1.0
    %v1744 = vrcp.pop %v1743
    %v1745 = vmul.f32 1.0, %v1744
    %v1746 = vxor.u32 %v1737, 2147483648
    %v1747 = vmul.f32 %v1746, 1.442695
    %v1748 = vpow.pop %v1747
    %v1749 = vadd.f32 %v1748, 1.0
    %v1750 = vrcp.pop %v1749
    %v1751 = vmul.f32 1.0, %v1750
    %v1752 = vtanh.pop %v1738
    %v1753 = vxor.u32 %v1739, 2147483648
    %v1754 = vmul.f32 %v1753, 1.442695
    %v1755 = vpow.pop %v1754
    %v1756 = vadd.f32 %v1755, 1.0
    %v1757 = vrcp.pop %v1756
    %v1758 = vmul.f32 1.0, %v1757
    %v1759 = vmul.f32 %v1751, %v1370
    %v1760 = vmul.f32 %v1745, %v1752
    %v1761 = vadd.f32 %v1759, %v1760
    %v1762 = vtanh.pop %v1761
    %v1763 = vmul.f32 %v1758, %v1762
    %s1764 = scalar_lea.vmem [#allocation3], 48
    %v1765 = vld [vmem:[%s1764] sm:$0xff]
    %v1767 = vcombine.high %v1765, %v1765
    %v1769 = vunpack.c.l.s4 1983009808
    %v1770 = vunpack.c.0.s8 %v1769
    %v1771 = vlaneseq
    %v1772 = vshrl.u32 %v1771, 7
    %v1773 = vsub.s32 %v1770, %v1772
    %v1774 = vrot.slane %v1765, %v1773
    %v1776 = vunpack.c.l.s4 1983009808
    %v1777 = vunpack.c.0.s8 %v1776
    %v1778 = vlaneseq
    %v1779 = vshrl.u32 %v1778, 7
    %v1780 = vsub.s32 %v1777, %v1779
    %v1781 = vrot.slane %v1767, %v1780
    %v1782 = vcombine.high %v1774, %v1774
    %v1783 = vcombine.high %v1781, %v1781
    %v1788 = vadd.f32 %v1637, %v1774
    %v1789 = vadd.f32 %v1639, %v1782
    %v1790 = vadd.f32 %v1708, %v1781
    %v1791 = vadd.f32 %v1710, %v1783
    %v1792 = vxor.u32 %v1788, 2147483648
    %v1793 = vmul.f32 %v1792, 1.442695
    %v1794 = vpow.pop %v1793
    %v1795 = vadd.f32 %v1794, 1.0
    %v1796 = vrcp.pop %v1795
    %v1797 = vmul.f32 1.0, %v1796
    %v1798 = vxor.u32 %v1789, 2147483648
    %v1799 = vmul.f32 %v1798, 1.442695
    %v1800 = vpow.pop %v1799
    %v1801 = vadd.f32 %v1800, 1.0
    %v1802 = vrcp.pop %v1801
    %v1803 = vmul.f32 1.0, %v1802
    %v1804 = vtanh.pop %v1790
    %v1805 = vxor.u32 %v1791, 2147483648
    %v1806 = vmul.f32 %v1805, 1.442695
    %v1807 = vpow.pop %v1806
    %v1808 = vadd.f32 %v1807, 1.0
    %v1809 = vrcp.pop %v1808
    %v1810 = vmul.f32 1.0, %v1809
    %v1811 = vmul.f32 %v1803, %v1422
    %v1812 = vmul.f32 %v1797, %v1804
    %v1813 = vadd.f32 %v1811, %v1812
    %v1814 = vtanh.pop %v1813
    %v1815 = vmul.f32 %v1810, %v1814
    %s1816 = scalar_lea.vmem [#allocation4], 2
    %1817 = vst [vmem:[%s1816] sm:$0x3] %v1763
    %s1818 = scalar_lea.vmem [#allocation5], 12
    %1819 = vst [vmem:[%s1818] sm:$0x3] %v1815
    %1820 = vmatprep.subr.mxu0 %v783
    %1821 = vmatpush1.msra.mxu0 %v782
    %1822 = vmatprep.subr.mxu0 %v791
    %1823 = vmatpush1.msra.mxu0 %v790
    %1824 = vmatprep.subr.mxu0 %v799
    %1825 = vmatpush1.msra.mxu0 %v798
    %1826 = vmatprep.subr.mxu0 %v807
    %1827 = vmatpush1.msra.mxu0 %v806
    %1828 = vmatprep.subr.mxu0 %v815
    %1829 = vmatpush1.msra.mxu0 %v814
    %1830 = vmatprep.subr.mxu0 %v823
    %1831 = vmatpush1.msra.mxu0 %v822
    %1832 = vmatprep.subr.mxu0 %v831
    %1833 = vmatpush1.msra.mxu0 %v830
    %1834 = vmatprep.subr.mxu0 %v839
    %1835 = vmatpush1.msra.mxu0 %v838
    %1836 = vmatprep.subr.mxu0 %v847
    %1837 = vmatpush1.msra.mxu0 %v846
    %1838 = vmatprep.subr.mxu0 %v855
    %1839 = vmatpush1.msra.mxu0 %v854
    %1840 = vmatprep.subr.mxu0 %v863
    %1841 = vmatpush1.msra.mxu0 %v862
    %1842 = vmatprep.subr.mxu0 %v871
    %1843 = vmatpush1.msra.mxu0 %v870
    %1844 = vmatprep.subr.mxu0 %v879
    %1845 = vmatpush1.msra.mxu0 %v878
    %1846 = vmatprep.subr.mxu0 %v887
    %1847 = vmatpush1.msra.mxu0 %v886
    %1848 = vmatprep.subr.mxu0 %v895
    %1849 = vmatpush1.msra.mxu0 %v894
    %1850 = vmatprep.subr.mxu0 %v903
    %1851 = vmatpush1.msra.mxu0 %v902
    %1852 = vmatprep.subr.mxu0 %v911
    %1853 = vmatpush1.msra.mxu0 %v910
    %1854 = vmatprep.subr.mxu0 %v919
    %1855 = vmatpush1.msra.mxu0 %v918
    %1856 = vmatprep.subr.mxu0 %v927
    %1857 = vmatpush1.msra.mxu0 %v926
    %1858 = vmatprep.subr.mxu0 %v935
    %1859 = vmatpush1.msra.mxu0 %v934
    %1860 = vmatprep.subr.mxu0 %v943
    %1861 = vmatpush1.msra.mxu0 %v942
    %1862 = vmatprep.subr.mxu0 %v951
    %1863 = vmatpush1.msra.mxu0 %v950
    %1864 = vmatprep.subr.mxu0 %v959
    %1865 = vmatpush1.msra.mxu0 %v958
    %1866 = vmatprep.subr.mxu0 %v967
    %1867 = vmatpush1.msra.mxu0 %v966
    %1868 = vmatprep.subr.mxu0 %v975
    %1869 = vmatpush1.msra.mxu0 %v974
    %1870 = vmatprep.subr.mxu0 %v983
    %1871 = vmatpush1.msra.mxu0 %v982
    %1872 = vmatprep.subr.mxu0 %v991
    %1873 = vmatpush1.msra.mxu0 %v990
    %1874 = vmatprep.subr.mxu0 %v999
    %1875 = vmatpush1.msra.mxu0 %v998
    %1876 = vmatprep.subr.mxu0 %v1007
    %1877 = vmatpush1.msra.mxu0 %v1006
    %1878 = vmatprep.subr.mxu0 %v1015
    %1879 = vmatpush1.msra.mxu0 %v1014
    %1880 = vmatprep.subr.mxu0 %v1023
    %1881 = vmatpush1.msra.mxu0 %v1022
    %1882 = vmatprep.subr.mxu0 %v1031
    %1883 = vmatpush1.msra.mxu0 %v1030
    %1884 = vmatprep.mubr.f32.mxu0 %v1815
    %1885 = vmatmul.mubr.f32.gmra.mrb[0].mxu0 %v1763
    %v1886 = vpop.f32.mrb[0].mxu0
    %v1887 = vadd.f32 0.0, %v1886
    %v1888 = vpop.f32.mrb[0].mxu0
    %v1889 = vadd.f32 0.0, %v1888
    %1890 = vdwg.mxu0
    %1891 = vmatprep.subr.mxu0 %v785
    %1892 = vmatpush1.msra.mxu0 %v784
    %1893 = vmatprep.subr.mxu0 %v793
    %1894 = vmatpush1.msra.mxu0 %v792
    %1895 = vmatprep.subr.mxu0 %v801
    %1896 = vmatpush1.msra.mxu0 %v800
    %1897 = vmatprep.subr.mxu0 %v809
    %1898 = vmatpush1.msra.mxu0 %v808
    %1899 = vmatprep.subr.mxu0 %v817
    %1900 = vmatpush1.msra.mxu0 %v816
    %1901 = vmatprep.subr.mxu0 %v825
    %1902 = vmatpush1.msra.mxu0 %v824
    %1903 = vmatprep.subr.mxu0 %v833
    %1904 = vmatpush1.msra.mxu0 %v832
    %1905 = vmatprep.subr.mxu0 %v841
    %1906 = vmatpush1.msra.mxu0 %v840
    %1907 = vmatprep.subr.mxu0 %v849
    %1908 = vmatpush1.msra.mxu0 %v848
    %1909 = vmatprep.subr.mxu0 %v857
    %1910 = vmatpush1.msra.mxu0 %v856
    %1911 = vmatprep.subr.mxu0 %v865
    %1912 = vmatpush1.msra.mxu0 %v864
    %1913 = vmatprep.subr.mxu0 %v873
    %1914 = vmatpush1.msra.mxu0 %v872
    %1915 = vmatprep.subr.mxu0 %v881
    %1916 = vmatpush1.msra.mxu0 %v880
    %1917 = vmatprep.subr.mxu0 %v889
    %1918 = vmatpush1.msra.mxu0 %v888
    %1919 = vmatprep.subr.mxu0 %v897
    %1920 = vmatpush1.msra.mxu0 %v896
    %1921 = vmatprep.subr.mxu0 %v905
    %1922 = vmatpush1.msra.mxu0 %v904
    %1923 = vmatprep.subr.mxu0 %v913
    %1924 = vmatpush1.msra.mxu0 %v912
    %1925 = vmatprep.subr.mxu0 %v921
    %1926 = vmatpush1.msra.mxu0 %v920
    %1927 = vmatprep.subr.mxu0 %v929
    %1928 = vmatpush1.msra.mxu0 %v928
    %1929 = vmatprep.subr.mxu0 %v937
    %1930 = vmatpush1.msra.mxu0 %v936
    %1931 = vmatprep.subr.mxu0 %v945
    %1932 = vmatpush1.msra.mxu0 %v944
    %1933 = vmatprep.subr.mxu0 %v953
    %1934 = vmatpush1.msra.mxu0 %v952
    %1935 = vmatprep.subr.mxu0 %v961
    %1936 = vmatpush1.msra.mxu0 %v960
    %1937 = vmatprep.subr.mxu0 %v969
    %1938 = vmatpush1.msra.mxu0 %v968
    %1939 = vmatprep.subr.mxu0 %v977
    %1940 = vmatpush1.msra.mxu0 %v976
    %1941 = vmatprep.subr.mxu0 %v985
    %1942 = vmatpush1.msra.mxu0 %v984
    %1943 = vmatprep.subr.mxu0 %v993
    %1944 = vmatpush1.msra.mxu0 %v992
    %1945 = vmatprep.subr.mxu0 %v1001
    %1946 = vmatpush1.msra.mxu0 %v1000
    %1947 = vmatprep.subr.mxu0 %v1009
    %1948 = vmatpush1.msra.mxu0 %v1008
    %1949 = vmatprep.subr.mxu0 %v1017
    %1950 = vmatpush1.msra.mxu0 %v1016
    %1951 = vmatprep.subr.mxu0 %v1025
    %1952 = vmatpush1.msra.mxu0 %v1024
    %1953 = vmatprep.subr.mxu0 %v1033
    %1954 = vmatpush1.msra.mxu0 %v1032
    %1955 = vmatprep.mubr.f32.mxu0 %v1815
    %1956 = vmatmul.mubr.f32.gmra.mrb[0].mxu0 %v1763
    %v1957 = vpop.f32.mrb[0].mxu0
    %v1958 = vadd.f32 0.0, %v1957
    %v1959 = vpop.f32.mrb[0].mxu0
    %v1960 = vadd.f32 0.0, %v1959
    %1961 = vdwg.mxu0
    %1962 = vmatprep.subr.mxu0 %v787
    %1963 = vmatpush1.msra.mxu0 %v786
    %1964 = vmatprep.subr.mxu0 %v795
    %1965 = vmatpush1.msra.mxu0 %v794
    %1966 = vmatprep.subr.mxu0 %v803
    %1967 = vmatpush1.msra.mxu0 %v802
    %1968 = vmatprep.subr.mxu0 %v811
    %1969 = vmatpush1.msra.mxu0 %v810
    %1970 = vmatprep.subr.mxu0 %v819
    %1971 = vmatpush1.msra.mxu0 %v818
    %1972 = vmatprep.subr.mxu0 %v827
    %1973 = vmatpush1.msra.mxu0 %v826
    %1974 = vmatprep.subr.mxu0 %v835
    %1975 = vmatpush1.msra.mxu0 %v834
    %1976 = vmatprep.subr.mxu0 %v843
    %1977 = vmatpush1.msra.mxu0 %v842
    %1978 = vmatprep.subr.mxu0 %v851
    %1979 = vmatpush1.msra.mxu0 %v850
    %1980 = vmatprep.subr.mxu0 %v859
    %1981 = vmatpush1.msra.mxu0 %v858
    %1982 = vmatprep.subr.mxu0 %v867
    %1983 = vmatpush1.msra.mxu0 %v866
    %1984 = vmatprep.subr.mxu0 %v875
    %1985 = vmatpush1.msra.mxu0 %v874
    %1986 = vmatprep.subr.mxu0 %v883
    %1987 = vmatpush1.msra.mxu0 %v882
    %1988 = vmatprep.subr.mxu0 %v891
    %1989 = vmatpush1.msra.mxu0 %v890
    %1990 = vmatprep.subr.mxu0 %v899
    %1991 = vmatpush1.msra.mxu0 %v898
    %1992 = vmatprep.subr.mxu0 %v907
    %1993 = vmatpush1.msra.mxu0 %v906
    %1994 = vmatprep.subr.mxu0 %v915
    %1995 = vmatpush1.msra.mxu0 %v914
    %1996 = vmatprep.subr.mxu0 %v923
    %1997 = vmatpush1.msra.mxu0 %v922
    %1998 = vmatprep.subr.mxu0 %v931
    %1999 = vmatpush1.msra.mxu0 %v930
    %2000 = vmatprep.subr.mxu0 %v939
    %2001 = vmatpush1.msra.mxu0 %v938
    %2002 = vmatprep.subr.mxu0 %v947
    %2003 = vmatpush1.msra.mxu0 %v946
    %2004 = vmatprep.subr.mxu0 %v955
    %2005 = vmatpush1.msra.mxu0 %v954
    %2006 = vmatprep.subr.mxu0 %v963
    %2007 = vmatpush1.msra.mxu0 %v962
    %2008 = vmatprep.subr.mxu0 %v971
    %2009 = vmatpush1.msra.mxu0 %v970
    %2010 = vmatprep.subr.mxu0 %v979
    %2011 = vmatpush1.msra.mxu0 %v978
    %2012 = vmatprep.subr.mxu0 %v987
    %2013 = vmatpush1.msra.mxu0 %v986
    %2014 = vmatprep.subr.mxu0 %v995
    %2015 = vmatpush1.msra.mxu0 %v994
    %2016 = vmatprep.subr.mxu0 %v1003
    %2017 = vmatpush1.msra.mxu0 %v1002
    %2018 = vmatprep.subr.mxu0 %v1011
    %2019 = vmatpush1.msra.mxu0 %v1010
    %2020 = vmatprep.subr.mxu0 %v1019
    %2021 = vmatpush1.msra.mxu0 %v1018
    %2022 = vmatprep.subr.mxu0 %v1027
    %2023 = vmatpush1.msra.mxu0 %v1026
    %2024 = vmatprep.subr.mxu0 %v1035
    %2025 = vmatpush1.msra.mxu0 %v1034
    %2026 = vmatprep.mubr.f32.mxu0 %v1815
    %2027 = vmatmul.mubr.f32.gmra.mrb[0].mxu0 %v1763
    %v2028 = vpop.f32.mrb[0].mxu0
    %v2029 = vadd.f32 0.0, %v2028
    %v2030 = vpop.f32.mrb[0].mxu0
    %v2031 = vadd.f32 0.0, %v2030
    %2032 = vdwg.mxu0
    %2033 = vmatprep.subr.mxu0 %v789
    %2034 = vmatpush1.msra.mxu0 %v788
    %2035 = vmatprep.subr.mxu0 %v797
    %2036 = vmatpush1.msra.mxu0 %v796
    %2037 = vmatprep.subr.mxu0 %v805
    %2038 = vmatpush1.msra.mxu0 %v804
    %2039 = vmatprep.subr.mxu0 %v813
    %2040 = vmatpush1.msra.mxu0 %v812
    %2041 = vmatprep.subr.mxu0 %v821
    %2042 = vmatpush1.msra.mxu0 %v820
    %2043 = vmatprep.subr.mxu0 %v829
    %2044 = vmatpush1.msra.mxu0 %v828
    %2045 = vmatprep.subr.mxu0 %v837
    %2046 = vmatpush1.msra.mxu0 %v836
    %2047 = vmatprep.subr.mxu0 %v845
    %2048 = vmatpush1.msra.mxu0 %v844
    %2049 = vmatprep.subr.mxu0 %v853
    %2050 = vmatpush1.msra.mxu0 %v852
    %2051 = vmatprep.subr.mxu0 %v861
    %2052 = vmatpush1.msra.mxu0 %v860
    %2053 = vmatprep.subr.mxu0 %v869
    %2054 = vmatpush1.msra.mxu0 %v868
    %2055 = vmatprep.subr.mxu0 %v877
    %2056 = vmatpush1.msra.mxu0 %v876
    %2057 = vmatprep.subr.mxu0 %v885
    %2058 = vmatpush1.msra.mxu0 %v884
    %2059 = vmatprep.subr.mxu0 %v893
    %2060 = vmatpush1.msra.mxu0 %v892
    %2061 = vmatprep.subr.mxu0 %v901
    %2062 = vmatpush1.msra.mxu0 %v900
    %2063 = vmatprep.subr.mxu0 %v909
    %2064 = vmatpush1.msra.mxu0 %v908
    %2065 = vmatprep.subr.mxu0 %v917
    %2066 = vmatpush1.msra.mxu0 %v916
    %2067 = vmatprep.subr.mxu0 %v925
    %2068 = vmatpush1.msra.mxu0 %v924
    %2069 = vmatprep.subr.mxu0 %v933
    %2070 = vmatpush1.msra.mxu0 %v932
    %2071 = vmatprep.subr.mxu0 %v941
    %2072 = vmatpush1.msra.mxu0 %v940
    %2073 = vmatprep.subr.mxu0 %v949
    %2074 = vmatpush1.msra.mxu0 %v948
    %2075 = vmatprep.subr.mxu0 %v957
    %2076 = vmatpush1.msra.mxu0 %v956
    %2077 = vmatprep.subr.mxu0 %v965
    %2078 = vmatpush1.msra.mxu0 %v964
    %2079 = vmatprep.subr.mxu0 %v973
    %2080 = vmatpush1.msra.mxu0 %v972
    %2081 = vmatprep.subr.mxu0 %v981
    %2082 = vmatpush1.msra.mxu0 %v980
    %2083 = vmatprep.subr.mxu0 %v989
    %2084 = vmatpush1.msra.mxu0 %v988
    %2085 = vmatprep.subr.mxu0 %v997
    %2086 = vmatpush1.msra.mxu0 %v996
    %2087 = vmatprep.subr.mxu0 %v1005
    %2088 = vmatpush1.msra.mxu0 %v1004
    %2089 = vmatprep.subr.mxu0 %v1013
    %2090 = vmatpush1.msra.mxu0 %v1012
    %2091 = vmatprep.subr.mxu0 %v1021
    %2092 = vmatpush1.msra.mxu0 %v1020
    %2093 = vmatprep.subr.mxu0 %v1029
    %2094 = vmatpush1.msra.mxu0 %v1028
    %2095 = vmatprep.subr.mxu0 %v1037
    %2096 = vmatpush1.msra.mxu0 %v1036
    %2097 = vmatprep.mubr.f32.mxu0 %v1815
    %2098 = vmatmul.mubr.f32.gmra.mrb[0].mxu0 %v1763
    %v2099 = vpop.f32.mrb[0].mxu0
    %v2100 = vadd.f32 0.0, %v2099
    %v2101 = vpop.f32.mrb[0].mxu0
    %v2102 = vadd.f32 0.0, %v2101
    %2103 = vdwg.mxu0
    %s2104 = scalar_lea.vmem [#allocation2], 16
    %v2105 = vld [vmem:[%s2104] sm:$0xff]
    %v2107 = vcombine.high %v2105, %v2105
    %v2109 = vunpack.c.l.s4 1983009808
    %v2110 = vunpack.c.0.s8 %v2109
    %v2111 = vlaneseq
    %v2112 = vshrl.u32 %v2111, 7
    %v2113 = vsub.s32 %v2110, %v2112
    %v2114 = vrot.slane %v2105, %v2113
    %v2116 = vunpack.c.l.s4 1983009808
    %v2117 = vunpack.c.0.s8 %v2116
    %v2118 = vlaneseq
    %v2119 = vshrl.u32 %v2118, 7
    %v2120 = vsub.s32 %v2117, %v2119
    %v2121 = vrot.slane %v2107, %v2120
    %v2122 = vcombine.high %v2114, %v2114
    %v2123 = vcombine.high %v2121, %v2121
    %v2128 = vadd.f32 %v1887, %v2114
    %v2129 = vadd.f32 %v1889, %v2122
    %v2130 = vadd.f32 %v1958, %v2121
    %v2131 = vadd.f32 %v1960, %v2123
    %v2132 = vxor.u32 %v2128, 2147483648
    %v2133 = vmul.f32 %v2132, 1.442695
    %v2134 = vpow.pop %v2133
    %v2135 = vadd.f32 %v2134, 1.0
    %v2136 = vrcp.pop %v2135
    %v2137 = vmul.f32 1.0, %v2136
    %v2138 = vxor.u32 %v2129, 2147483648
    %v2139 = vmul.f32 %v2138, 1.442695
    %v2140 = vpow.pop %v2139
    %v2141 = vadd.f32 %v2140, 1.0
    %v2142 = vrcp.pop %v2141
    %v2143 = vmul.f32 1.0, %v2142
    %v2144 = vtanh.pop %v2130
    %v2145 = vxor.u32 %v2131, 2147483648
    %v2146 = vmul.f32 %v2145, 1.442695
    %v2147 = vpow.pop %v2146
    %v2148 = vadd.f32 %v2147, 1.0
    %v2149 = vrcp.pop %v2148
    %v2150 = vmul.f32 1.0, %v2149
    %v2151 = vmul.f32 %v2143, %v1761
    %v2152 = vmul.f32 %v2137, %v2144
    %v2153 = vadd.f32 %v2151, %v2152
    %v2154 = vtanh.pop %v2153
    %v2155 = vmul.f32 %v2150, %v2154
    %s2156 = scalar_lea.vmem [#allocation3], 40
    %v2157 = vld [vmem:[%s2156] sm:$0xff]
    %v2159 = vcombine.high %v2157, %v2157
    %v2161 = vunpack.c.l.s4 1983009808
    %v2162 = vunpack.c.0.s8 %v2161
    %v2163 = vlaneseq
    %v2164 = vshrl.u32 %v2163, 7
    %v2165 = vsub.s32 %v2162, %v2164
    %v2166 = vrot.slane %v2157, %v2165
    %v2168 = vunpack.c.l.s4 1983009808
    %v2169 = vunpack.c.0.s8 %v2168
    %v2170 = vlaneseq
    %v2171 = vshrl.u32 %v2170, 7
    %v2172 = vsub.s32 %v2169, %v2171
    %v2173 = vrot.slane %v2159, %v2172
    %v2174 = vcombine.high %v2166, %v2166
    %v2175 = vcombine.high %v2173, %v2173
    %v2180 = vadd.f32 %v2029, %v2166
    %v2181 = vadd.f32 %v2031, %v2174
    %v2182 = vadd.f32 %v2100, %v2173
    %v2183 = vadd.f32 %v2102, %v2175
    %v2184 = vxor.u32 %v2180, 2147483648
    %v2185 = vmul.f32 %v2184, 1.442695
    %v2186 = vpow.pop %v2185
    %v2187 = vadd.f32 %v2186, 1.0
    %v2188 = vrcp.pop %v2187
    %v2189 = vmul.f32 1.0, %v2188
    %v2190 = vxor.u32 %v2181, 2147483648
    %v2191 = vmul.f32 %v2190, 1.442695
    %v2192 = vpow.pop %v2191
    %v2193 = vadd.f32 %v2192, 1.0
    %v2194 = vrcp.pop %v2193
    %v2195 = vmul.f32 1.0, %v2194
    %v2196 = vtanh.pop %v2182
    %v2197 = vxor.u32 %v2183, 2147483648
    %v2198 = vmul.f32 %v2197, 1.442695
    %v2199 = vpow.pop %v2198
    %v2200 = vadd.f32 %v2199, 1.0
    %v2201 = vrcp.pop %v2200
    %v2202 = vmul.f32 1.0, %v2201
    %v2203 = vmul.f32 %v2195, %v1813
    %v2204 = vmul.f32 %v2189, %v2196
    %v2205 = vadd.f32 %v2203, %v2204
    %v2206 = vtanh.pop %v2205
    %v2207 = vmul.f32 %v2202, %v2206
    %s2208 = scalar_lea.vmem [#allocation4], 4
    %2209 = vst [vmem:[%s2208] sm:$0x3] %v2155
    %s2210 = scalar_lea.vmem [#allocation5], 10
    %2211 = vst [vmem:[%s2210] sm:$0x3] %v2207
    %2212 = vmatprep.subr.mxu0 %v783
    %2213 = vmatpush1.msra.mxu0 %v782
    %2214 = vmatprep.subr.mxu0 %v791
    %2215 = vmatpush1.msra.mxu0 %v790
    %2216 = vmatprep.subr.mxu0 %v799
    %2217 = vmatpush1.msra.mxu0 %v798
    %2218 = vmatprep.subr.mxu0 %v807
    %2219 = vmatpush1.msra.mxu0 %v806
    %2220 = vmatprep.subr.mxu0 %v815
    %2221 = vmatpush1.msra.mxu0 %v814
    %2222 = vmatprep.subr.mxu0 %v823
    %2223 = vmatpush1.msra.mxu0 %v822
    %2224 = vmatprep.subr.mxu0 %v831
    %2225 = vmatpush1.msra.mxu0 %v830
    %2226 = vmatprep.subr.mxu0 %v839
    %2227 = vmatpush1.msra.mxu0 %v838
    %2228 = vmatprep.subr.mxu0 %v847
    %2229 = vmatpush1.msra.mxu0 %v846
    %2230 = vmatprep.subr.mxu0 %v855
    %2231 = vmatpush1.msra.mxu0 %v854
    %2232 = vmatprep.subr.mxu0 %v863
    %2233 = vmatpush1.msra.mxu0 %v862
    %2234 = vmatprep.subr.mxu0 %v871
    %2235 = vmatpush1.msra.mxu0 %v870
    %2236 = vmatprep.subr.mxu0 %v879
    %2237 = vmatpush1.msra.mxu0 %v878
    %2238 = vmatprep.subr.mxu0 %v887
    %2239 = vmatpush1.msra.mxu0 %v886
    %2240 = vmatprep.subr.mxu0 %v895
    %2241 = vmatpush1.msra.mxu0 %v894
    %2242 = vmatprep.subr.mxu0 %v903
    %2243 = vmatpush1.msra.mxu0 %v902
    %2244 = vmatprep.subr.mxu0 %v911
    %2245 = vmatpush1.msra.mxu0 %v910
    %2246 = vmatprep.subr.mxu0 %v919
    %2247 = vmatpush1.msra.mxu0 %v918
    %2248 = vmatprep.subr.mxu0 %v927
    %2249 = vmatpush1.msra.mxu0 %v926
    %2250 = vmatprep.subr.mxu0 %v935
    %2251 = vmatpush1.msra.mxu0 %v934
    %2252 = vmatprep.subr.mxu0 %v943
    %2253 = vmatpush1.msra.mxu0 %v942
    %2254 = vmatprep.subr.mxu0 %v951
    %2255 = vmatpush1.msra.mxu0 %v950
    %2256 = vmatprep.subr.mxu0 %v959
    %2257 = vmatpush1.msra.mxu0 %v958
    %2258 = vmatprep.subr.mxu0 %v967
    %2259 = vmatpush1.msra.mxu0 %v966
    %2260 = vmatprep.subr.mxu0 %v975
    %2261 = vmatpush1.msra.mxu0 %v974
    %2262 = vmatprep.subr.mxu0 %v983
    %2263 = vmatpush1.msra.mxu0 %v982
    %2264 = vmatprep.subr.mxu0 %v991
    %2265 = vmatpush1.msra.mxu0 %v990
    %2266 = vmatprep.subr.mxu0 %v999
    %2267 = vmatpush1.msra.mxu0 %v998
    %2268 = vmatprep.subr.mxu0 %v1007
    %2269 = vmatpush1.msra.mxu0 %v1006
    %2270 = vmatprep.subr.mxu0 %v1015
    %2271 = vmatpush1.msra.mxu0 %v1014
    %2272 = vmatprep.subr.mxu0 %v1023
    %2273 = vmatpush1.msra.mxu0 %v1022
    %2274 = vmatprep.subr.mxu0 %v1031
    %2275 = vmatpush1.msra.mxu0 %v1030
    %2276 = vmatprep.mubr.f32.mxu0 %v2207
    %2277 = vmatmul.mubr.f32.gmra.mrb[0].mxu0 %v2155
    %v2278 = vpop.f32.mrb[0].mxu0
    %v2279 = vadd.f32 0.0, %v2278
    %v2280 = vpop.f32.mrb[0].mxu0
    %v2281 = vadd.f32 0.0, %v2280
    %2282 = vdwg.mxu0
    %2283 = vmatprep.subr.mxu0 %v785
    %2284 = vmatpush1.msra.mxu0 %v784
    %2285 = vmatprep.subr.mxu0 %v793
    %2286 = vmatpush1.msra.mxu0 %v792
    %2287 = vmatprep.subr.mxu0 %v801
    %2288 = vmatpush1.msra.mxu0 %v800
    %2289 = vmatprep.subr.mxu0 %v809
    %2290 = vmatpush1.msra.mxu0 %v808
    %2291 = vmatprep.subr.mxu0 %v817
    %2292 = vmatpush1.msra.mxu0 %v816
    %2293 = vmatprep.subr.mxu0 %v825
    %2294 = vmatpush1.msra.mxu0 %v824
    %2295 = vmatprep.subr.mxu0 %v833
    %2296 = vmatpush1.msra.mxu0 %v832
    %2297 = vmatprep.subr.mxu0 %v841
    %2298 = vmatpush1.msra.mxu0 %v840
    %2299 = vmatprep.subr.mxu0 %v849
    %2300 = vmatpush1.msra.mxu0 %v848
    %2301 = vmatprep.subr.mxu0 %v857
    %2302 = vmatpush1.msra.mxu0 %v856
    %2303 = vmatprep.subr.mxu0 %v865
    %2304 = vmatpush1.msra.mxu0 %v864
    %2305 = vmatprep.subr.mxu0 %v873
    %2306 = vmatpush1.msra.mxu0 %v872
    %2307 = vmatprep.subr.mxu0 %v881
    %2308 = vmatpush1.msra.mxu0 %v880
    %2309 = vmatprep.subr.mxu0 %v889
    %2310 = vmatpush1.msra.mxu0 %v888
    %2311 = vmatprep.subr.mxu0 %v897
    %2312 = vmatpush1.msra.mxu0 %v896
    %2313 = vmatprep.subr.mxu0 %v905
    %2314 = vmatpush1.msra.mxu0 %v904
    %2315 = vmatprep.subr.mxu0 %v913
    %2316 = vmatpush1.msra.mxu0 %v912
    %2317 = vmatprep.subr.mxu0 %v921
    %2318 = vmatpush1.msra.mxu0 %v920
    %2319 = vmatprep.subr.mxu0 %v929
    %2320 = vmatpush1.msra.mxu0 %v928
    %2321 = vmatprep.subr.mxu0 %v937
    %2322 = vmatpush1.msra.mxu0 %v936
    %2323 = vmatprep.subr.mxu0 %v945
    %2324 = vmatpush1.msra.mxu0 %v944
    %2325 = vmatprep.subr.mxu0 %v953
    %2326 = vmatpush1.msra.mxu0 %v952
    %2327 = vmatprep.subr.mxu0 %v961
    %2328 = vmatpush1.msra.mxu0 %v960
    %2329 = vmatprep.subr.mxu0 %v969
    %2330 = vmatpush1.msra.mxu0 %v968
    %2331 = vmatprep.subr.mxu0 %v977
    %2332 = vmatpush1.msra.mxu0 %v976
    %2333 = vmatprep.subr.mxu0 %v985
    %2334 = vmatpush1.msra.mxu0 %v984
    %2335 = vmatprep.subr.mxu0 %v993
    %2336 = vmatpush1.msra.mxu0 %v992
    %2337 = vmatprep.subr.mxu0 %v1001
    %2338 = vmatpush1.msra.mxu0 %v1000
    %2339 = vmatprep.subr.mxu0 %v1009
    %2340 = vmatpush1.msra.mxu0 %v1008
    %2341 = vmatprep.subr.mxu0 %v1017
    %2342 = vmatpush1.msra.mxu0 %v1016
    %2343 = vmatprep.subr.mxu0 %v1025
    %2344 = vmatpush1.msra.mxu0 %v1024
    %2345 = vmatprep.subr.mxu0 %v1033
    %2346 = vmatpush1.msra.mxu0 %v1032
    %2347 = vmatprep.mubr.f32.mxu0 %v2207
    %2348 = vmatmul.mubr.f32.gmra.mrb[0].mxu0 %v2155
    %v2349 = vpop.f32.mrb[0].mxu0
    %v2350 = vadd.f32 0.0, %v2349
    %v2351 = vpop.f32.mrb[0].mxu0
    %v2352 = vadd.f32 0.0, %v2351
    %2353 = vdwg.mxu0
    %2354 = vmatprep.subr.mxu0 %v787
    %2355 = vmatpush1.msra.mxu0 %v786
    %2356 = vmatprep.subr.mxu0 %v795
    %2357 = vmatpush1.msra.mxu0 %v794
    %2358 = vmatprep.subr.mxu0 %v803
    %2359 = vmatpush1.msra.mxu0 %v802
    %2360 = vmatprep.subr.mxu0 %v811
    %2361 = vmatpush1.msra.mxu0 %v810
    %2362 = vmatprep.subr.mxu0 %v819
    %2363 = vmatpush1.msra.mxu0 %v818
    %2364 = vmatprep.subr.mxu0 %v827
    %2365 = vmatpush1.msra.mxu0 %v826
    %2366 = vmatprep.subr.mxu0 %v835
    %2367 = vmatpush1.msra.mxu0 %v834
    %2368 = vmatprep.subr.mxu0 %v843
    %2369 = vmatpush1.msra.mxu0 %v842
    %2370 = vmatprep.subr.mxu0 %v851
    %2371 = vmatpush1.msra.mxu0 %v850
    %2372 = vmatprep.subr.mxu0 %v859
    %2373 = vmatpush1.msra.mxu0 %v858
    %2374 = vmatprep.subr.mxu0 %v867
    %2375 = vmatpush1.msra.mxu0 %v866
    %2376 = vmatprep.subr.mxu0 %v875
    %2377 = vmatpush1.msra.mxu0 %v874
    %2378 = vmatprep.subr.mxu0 %v883
    %2379 = vmatpush1.msra.mxu0 %v882
    %2380 = vmatprep.subr.mxu0 %v891
    %2381 = vmatpush1.msra.mxu0 %v890
    %2382 = vmatprep.subr.mxu0 %v899
    %2383 = vmatpush1.msra.mxu0 %v898
    %2384 = vmatprep.subr.mxu0 %v907
    %2385 = vmatpush1.msra.mxu0 %v906
    %2386 = vmatprep.subr.mxu0 %v915
    %2387 = vmatpush1.msra.mxu0 %v914
    %2388 = vmatprep.subr.mxu0 %v923
    %2389 = vmatpush1.msra.mxu0 %v922
    %2390 = vmatprep.subr.mxu0 %v931
    %2391 = vmatpush1.msra.mxu0 %v930
    %2392 = vmatprep.subr.mxu0 %v939
    %2393 = vmatpush1.msra.mxu0 %v938
    %2394 = vmatprep.subr.mxu0 %v947
    %2395 = vmatpush1.msra.mxu0 %v946
    %2396 = vmatprep.subr.mxu0 %v955
    %2397 = vmatpush1.msra.mxu0 %v954
    %2398 = vmatprep.subr.mxu0 %v963
    %2399 = vmatpush1.msra.mxu0 %v962
    %2400 = vmatprep.subr.mxu0 %v971
    %2401 = vmatpush1.msra.mxu0 %v970
    %2402 = vmatprep.subr.mxu0 %v979
    %2403 = vmatpush1.msra.mxu0 %v978
    %2404 = vmatprep.subr.mxu0 %v987
    %2405 = vmatpush1.msra.mxu0 %v986
    %2406 = vmatprep.subr.mxu0 %v995
    %2407 = vmatpush1.msra.mxu0 %v994
    %2408 = vmatprep.subr.mxu0 %v1003
    %2409 = vmatpush1.msra.mxu0 %v1002
    %2410 = vmatprep.subr.mxu0 %v1011
    %2411 = vmatpush1.msra.mxu0 %v1010
    %2412 = vmatprep.subr.mxu0 %v1019
    %2413 = vmatpush1.msra.mxu0 %v1018
    %2414 = vmatprep.subr.mxu0 %v1027
    %2415 = vmatpush1.msra.mxu0 %v1026
    %2416 = vmatprep.subr.mxu0 %v1035
    %2417 = vmatpush1.msra.mxu0 %v1034
    %2418 = vmatprep.mubr.f32.mxu0 %v2207
    %2419 = vmatmul.mubr.f32.gmra.mrb[0].mxu0 %v2155
    %v2420 = vpop.f32.mrb[0].mxu0
    %v2421 = vadd.f32 0.0, %v2420
    %v2422 = vpop.f32.mrb[0].mxu0
    %v2423 = vadd.f32 0.0, %v2422
    %2424 = vdwg.mxu0
    %2425 = vmatprep.subr.mxu0 %v789
    %2426 = vmatpush1.msra.mxu0 %v788
    %2427 = vmatprep.subr.mxu0 %v797
    %2428 = vmatpush1.msra.mxu0 %v796
    %2429 = vmatprep.subr.mxu0 %v805
    %2430 = vmatpush1.msra.mxu0 %v804
    %2431 = vmatprep.subr.mxu0 %v813
    %2432 = vmatpush1.msra.mxu0 %v812
    %2433 = vmatprep.subr.mxu0 %v821
    %2434 = vmatpush1.msra.mxu0 %v820
    %2435 = vmatprep.subr.mxu0 %v829
    %2436 = vmatpush1.msra.mxu0 %v828
    %2437 = vmatprep.subr.mxu0 %v837
    %2438 = vmatpush1.msra.mxu0 %v836
    %2439 = vmatprep.subr.mxu0 %v845
    %2440 = vmatpush1.msra.mxu0 %v844
    %2441 = vmatprep.subr.mxu0 %v853
    %2442 = vmatpush1.msra.mxu0 %v852
    %2443 = vmatprep.subr.mxu0 %v861
    %2444 = vmatpush1.msra.mxu0 %v860
    %2445 = vmatprep.subr.mxu0 %v869
    %2446 = vmatpush1.msra.mxu0 %v868
    %2447 = vmatprep.subr.mxu0 %v877
    %2448 = vmatpush1.msra.mxu0 %v876
    %2449 = vmatprep.subr.mxu0 %v885
    %2450 = vmatpush1.msra.mxu0 %v884
    %2451 = vmatprep.subr.mxu0 %v893
    %2452 = vmatpush1.msra.mxu0 %v892
    %2453 = vmatprep.subr.mxu0 %v901
    %2454 = vmatpush1.msra.mxu0 %v900
    %2455 = vmatprep.subr.mxu0 %v909
    %2456 = vmatpush1.msra.mxu0 %v908
    %2457 = vmatprep.subr.mxu0 %v917
    %2458 = vmatpush1.msra.mxu0 %v916
    %2459 = vmatprep.subr.mxu0 %v925
    %2460 = vmatpush1.msra.mxu0 %v924
    %2461 = vmatprep.subr.mxu0 %v933
    %2462 = vmatpush1.msra.mxu0 %v932
    %2463 = vmatprep.subr.mxu0 %v941
    %2464 = vmatpush1.msra.mxu0 %v940
    %2465 = vmatprep.subr.mxu0 %v949
    %2466 = vmatpush1.msra.mxu0 %v948
    %2467 = vmatprep.subr.mxu0 %v957
    %2468 = vmatpush1.msra.mxu0 %v956
    %2469 = vmatprep.subr.mxu0 %v965
    %2470 = vmatpush1.msra.mxu0 %v964
    %2471 = vmatprep.subr.mxu0 %v973
    %2472 = vmatpush1.msra.mxu0 %v972
    %2473 = vmatprep.subr.mxu0 %v981
    %2474 = vmatpush1.msra.mxu0 %v980
    %2475 = vmatprep.subr.mxu0 %v989
    %2476 = vmatpush1.msra.mxu0 %v988
    %2477 = vmatprep.subr.mxu0 %v997
    %2478 = vmatpush1.msra.mxu0 %v996
    %2479 = vmatprep.subr.mxu0 %v1005
    %2480 = vmatpush1.msra.mxu0 %v1004
    %2481 = vmatprep.subr.mxu0 %v1013
    %2482 = vmatpush1.msra.mxu0 %v1012
    %2483 = vmatprep.subr.mxu0 %v1021
    %2484 = vmatpush1.msra.mxu0 %v1020
    %2485 = vmatprep.subr.mxu0 %v1029
    %2486 = vmatpush1.msra.mxu0 %v1028
    %2487 = vmatprep.subr.mxu0 %v1037
    %2488 = vmatpush1.msra.mxu0 %v1036
    %2489 = vmatprep.mubr.f32.mxu0 %v2207
    %2490 = vmatmul.mubr.f32.gmra.mrb[0].mxu0 %v2155
    %v2491 = vpop.f32.mrb[0].mxu0
    %v2492 = vadd.f32 0.0, %v2491
    %v2493 = vpop.f32.mrb[0].mxu0
    %v2494 = vadd.f32 0.0, %v2493
    %2495 = vdwg.mxu0
    %s2496 = scalar_lea.vmem [#allocation2], 24
    %v2497 = vld [vmem:[%s2496] sm:$0xff]
    %v2499 = vcombine.high %v2497, %v2497
    %v2501 = vunpack.c.l.s4 1983009808
    %v2502 = vunpack.c.0.s8 %v2501
    %v2503 = vlaneseq
    %v2504 = vshrl.u32 %v2503, 7
    %v2505 = vsub.s32 %v2502, %v2504
    %v2506 = vrot.slane %v2497, %v2505
    %v2508 = vunpack.c.l.s4 1983009808
    %v2509 = vunpack.c.0.s8 %v2508
    %v2510 = vlaneseq
    %v2511 = vshrl.u32 %v2510, 7
    %v2512 = vsub.s32 %v2509, %v2511
    %v2513 = vrot.slane %v2499, %v2512
    %v2514 = vcombine.high %v2506, %v2506
    %v2515 = vcombine.high %v2513, %v2513
    %v2520 = vadd.f32 %v2279, %v2506
    %v2521 = vadd.f32 %v2281, %v2514
    %v2522 = vadd.f32 %v2350, %v2513
    %v2523 = vadd.f32 %v2352, %v2515
    %v2524 = vxor.u32 %v2520, 2147483648
    %v2525 = vmul.f32 %v2524, 1.442695
    %v2526 = vpow.pop %v2525
    %v2527 = vadd.f32 %v2526, 1.0
    %v2528 = vrcp.pop %v2527
    %v2529 = vmul.f32 1.0, %v2528
    %v2530 = vxor.u32 %v2521, 2147483648
    %v2531 = vmul.f32 %v2530, 1.442695
    %v2532 = vpow.pop %v2531
    %v2533 = vadd.f32 %v2532, 1.0
    %v2534 = vrcp.pop %v2533
    %v2535 = vmul.f32 1.0, %v2534
    %v2536 = vtanh.pop %v2522
    %v2537 = vxor.u32 %v2523, 2147483648
    %v2538 = vmul.f32 %v2537, 1.442695
    %v2539 = vpow.pop %v2538
    %v2540 = vadd.f32 %v2539, 1.0
    %v2541 = vrcp.pop %v2540
    %v2542 = vmul.f32 1.0, %v2541
    %v2543 = vmul.f32 %v2535, %v2153
    %v2544 = vmul.f32 %v2529, %v2536
    %v2545 = vadd.f32 %v2543, %v2544
    %v2546 = vtanh.pop %v2545
    %v2547 = vmul.f32 %v2542, %v2546
    %s2548 = scalar_lea.vmem [#allocation3], 32
    %v2549 = vld [vmem:[%s2548] sm:$0xff]
    %v2551 = vcombine.high %v2549, %v2549
    %v2553 = vunpack.c.l.s4 1983009808
    %v2554 = vunpack.c.0.s8 %v2553
    %v2555 = vlaneseq
    %v2556 = vshrl.u32 %v2555, 7
    %v2557 = vsub.s32 %v2554, %v2556
    %v2558 = vrot.slane %v2549, %v2557
    %v2560 = vunpack.c.l.s4 1983009808
    %v2561 = vunpack.c.0.s8 %v2560
    %v2562 = vlaneseq
    %v2563 = vshrl.u32 %v2562, 7
    %v2564 = vsub.s32 %v2561, %v2563
    %v2565 = vrot.slane %v2551, %v2564
    %v2566 = vcombine.high %v2558, %v2558
    %v2567 = vcombine.high %v2565, %v2565
    %v2572 = vadd.f32 %v2421, %v2558
    %v2573 = vadd.f32 %v2423, %v2566
    %v2574 = vadd.f32 %v2492, %v2565
    %v2575 = vadd.f32 %v2494, %v2567
    %v2576 = vxor.u32 %v2572, 2147483648
    %v2577 = vmul.f32 %v2576, 1.442695
    %v2578 = vpow.pop %v2577
    %v2579 = vadd.f32 %v2578, 1.0
    %v2580 = vrcp.pop %v2579
    %v2581 = vmul.f32 1.0, %v2580
    %v2582 = vxor.u32 %v2573, 2147483648
    %v2583 = vmul.f32 %v2582, 1.442695
    %v2584 = vpow.pop %v2583
    %v2585 = vadd.f32 %v2584, 1.0
    %v2586 = vrcp.pop %v2585
    %v2587 = vmul.f32 1.0, %v2586
    %v2588 = vtanh.pop %v2574
    %v2589 = vxor.u32 %v2575, 2147483648
    %v2590 = vmul.f32 %v2589, 1.442695
    %v2591 = vpow.pop %v2590
    %v2592 = vadd.f32 %v2591, 1.0
    %v2593 = vrcp.pop %v2592
    %v2594 = vmul.f32 1.0, %v2593
    %v2595 = vmul.f32 %v2587, %v2205
    %v2596 = vmul.f32 %v2581, %v2588
    %v2597 = vadd.f32 %v2595, %v2596
    %v2598 = vtanh.pop %v2597
    %v2599 = vmul.f32 %v2594, %v2598
    %s2600 = scalar_lea.vmem [#allocation4], 6
    %2601 = vst [vmem:[%s2600] sm:$0x3] %v2547
    %s2602 = scalar_lea.vmem [#allocation5], 8
    %2603 = vst [vmem:[%s2602] sm:$0x3] %v2599
    %2604 = vmatprep.subr.mxu0 %v783
    %2605 = vmatpush1.msra.mxu0 %v782
    %2606 = vmatprep.subr.mxu0 %v791
    %2607 = vmatpush1.msra.mxu0 %v790
    %2608 = vmatprep.subr.mxu0 %v799
    %2609 = vmatpush1.msra.mxu0 %v798
    %2610 = vmatprep.subr.mxu0 %v807
    %2611 = vmatpush1.msra.mxu0 %v806
    %2612 = vmatprep.subr.mxu0 %v815
    %2613 = vmatpush1.msra.mxu0 %v814
    %2614 = vmatprep.subr.mxu0 %v823
    %2615 = vmatpush1.msra.mxu0 %v822
    %2616 = vmatprep.subr.mxu0 %v831
    %2617 = vmatpush1.msra.mxu0 %v830
    %2618 = vmatprep.subr.mxu0 %v839
    %2619 = vmatpush1.msra.mxu0 %v838
    %2620 = vmatprep.subr.mxu0 %v847
    %2621 = vmatpush1.msra.mxu0 %v846
    %2622 = vmatprep.subr.mxu0 %v855
    %2623 = vmatpush1.msra.mxu0 %v854
    %2624 = vmatprep.subr.mxu0 %v863
    %2625 = vmatpush1.msra.mxu0 %v862
    %2626 = vmatprep.subr.mxu0 %v871
    %2627 = vmatpush1.msra.mxu0 %v870
    %2628 = vmatprep.subr.mxu0 %v879
    %2629 = vmatpush1.msra.mxu0 %v878
    %2630 = vmatprep.subr.mxu0 %v887
    %2631 = vmatpush1.msra.mxu0 %v886
    %2632 = vmatprep.subr.mxu0 %v895
    %2633 = vmatpush1.msra.mxu0 %v894
    %2634 = vmatprep.subr.mxu0 %v903
    %2635 = vmatpush1.msra.mxu0 %v902
    %2636 = vmatprep.subr.mxu0 %v911
    %2637 = vmatpush1.msra.mxu0 %v910
    %2638 = vmatprep.subr.mxu0 %v919
    %2639 = vmatpush1.msra.mxu0 %v918
    %2640 = vmatprep.subr.mxu0 %v927
    %2641 = vmatpush1.msra.mxu0 %v926
    %2642 = vmatprep.subr.mxu0 %v935
    %2643 = vmatpush1.msra.mxu0 %v934
    %2644 = vmatprep.subr.mxu0 %v943
    %2645 = vmatpush1.msra.mxu0 %v942
    %2646 = vmatprep.subr.mxu0 %v951
    %2647 = vmatpush1.msra.mxu0 %v950
    %2648 = vmatprep.subr.mxu0 %v959
    %2649 = vmatpush1.msra.mxu0 %v958
    %2650 = vmatprep.subr.mxu0 %v967
    %2651 = vmatpush1.msra.mxu0 %v966
    %2652 = vmatprep.subr.mxu0 %v975
    %2653 = vmatpush1.msra.mxu0 %v974
    %2654 = vmatprep.subr.mxu0 %v983
    %2655 = vmatpush1.msra.mxu0 %v982
    %2656 = vmatprep.subr.mxu0 %v991
    %2657 = vmatpush1.msra.mxu0 %v990
    %2658 = vmatprep.subr.mxu0 %v999
    %2659 = vmatpush1.msra.mxu0 %v998
    %2660 = vmatprep.subr.mxu0 %v1007
    %2661 = vmatpush1.msra.mxu0 %v1006
    %2662 = vmatprep.subr.mxu0 %v1015
    %2663 = vmatpush1.msra.mxu0 %v1014
    %2664 = vmatprep.subr.mxu0 %v1023
    %2665 = vmatpush1.msra.mxu0 %v1022
    %2666 = vmatprep.subr.mxu0 %v1031
    %2667 = vmatpush1.msra.mxu0 %v1030
    %2668 = vmatprep.mubr.f32.mxu0 %v2599
    %2669 = vmatmul.mubr.f32.gmra.mrb[0].mxu0 %v2547
    %v2670 = vpop.f32.mrb[0].mxu0
    %v2671 = vadd.f32 0.0, %v2670
    %v2672 = vpop.f32.mrb[0].mxu0
    %v2673 = vadd.f32 0.0, %v2672
    %2674 = vdwg.mxu0
    %2675 = vmatprep.subr.mxu0 %v785
    %2676 = vmatpush1.msra.mxu0 %v784
    %2677 = vmatprep.subr.mxu0 %v793
    %2678 = vmatpush1.msra.mxu0 %v792
    %2679 = vmatprep.subr.mxu0 %v801
    %2680 = vmatpush1.msra.mxu0 %v800
    %2681 = vmatprep.subr.mxu0 %v809
    %2682 = vmatpush1.msra.mxu0 %v808
    %2683 = vmatprep.subr.mxu0 %v817
    %2684 = vmatpush1.msra.mxu0 %v816
    %2685 = vmatprep.subr.mxu0 %v825
    %2686 = vmatpush1.msra.mxu0 %v824
    %2687 = vmatprep.subr.mxu0 %v833
    %2688 = vmatpush1.msra.mxu0 %v832
    %2689 = vmatprep.subr.mxu0 %v841
    %2690 = vmatpush1.msra.mxu0 %v840
    %2691 = vmatprep.subr.mxu0 %v849
    %2692 = vmatpush1.msra.mxu0 %v848
    %2693 = vmatprep.subr.mxu0 %v857
    %2694 = vmatpush1.msra.mxu0 %v856
    %2695 = vmatprep.subr.mxu0 %v865
    %2696 = vmatpush1.msra.mxu0 %v864
    %2697 = vmatprep.subr.mxu0 %v873
    %2698 = vmatpush1.msra.mxu0 %v872
    %2699 = vmatprep.subr.mxu0 %v881
    %2700 = vmatpush1.msra.mxu0 %v880
    %2701 = vmatprep.subr.mxu0 %v889
    %2702 = vmatpush1.msra.mxu0 %v888
    %2703 = vmatprep.subr.mxu0 %v897
    %2704 = vmatpush1.msra.mxu0 %v896
    %2705 = vmatprep.subr.mxu0 %v905
    %2706 = vmatpush1.msra.mxu0 %v904
    %2707 = vmatprep.subr.mxu0 %v913
    %2708 = vmatpush1.msra.mxu0 %v912
    %2709 = vmatprep.subr.mxu0 %v921
    %2710 = vmatpush1.msra.mxu0 %v920
    %2711 = vmatprep.subr.mxu0 %v929
    %2712 = vmatpush1.msra.mxu0 %v928
    %2713 = vmatprep.subr.mxu0 %v937
    %2714 = vmatpush1.msra.mxu0 %v936
    %2715 = vmatprep.subr.mxu0 %v945
    %2716 = vmatpush1.msra.mxu0 %v944
    %2717 = vmatprep.subr.mxu0 %v953
    %2718 = vmatpush1.msra.mxu0 %v952
    %2719 = vmatprep.subr.mxu0 %v961
    %2720 = vmatpush1.msra.mxu0 %v960
    %2721 = vmatprep.subr.mxu0 %v969
    %2722 = vmatpush1.msra.mxu0 %v968
    %2723 = vmatprep.subr.mxu0 %v977
    %2724 = vmatpush1.msra.mxu0 %v976
    %2725 = vmatprep.subr.mxu0 %v985
    %2726 = vmatpush1.msra.mxu0 %v984
    %2727 = vmatprep.subr.mxu0 %v993
    %2728 = vmatpush1.msra.mxu0 %v992
    %2729 = vmatprep.subr.mxu0 %v1001
    %2730 = vmatpush1.msra.mxu0 %v1000
    %2731 = vmatprep.subr.mxu0 %v1009
    %2732 = vmatpush1.msra.mxu0 %v1008
    %2733 = vmatprep.subr.mxu0 %v1017
    %2734 = vmatpush1.msra.mxu0 %v1016
    %2735 = vmatprep.subr.mxu0 %v1025
    %2736 = vmatpush1.msra.mxu0 %v1024
    %2737 = vmatprep.subr.mxu0 %v1033
    %2738 = vmatpush1.msra.mxu0 %v1032
    %2739 = vmatprep.mubr.f32.mxu0 %v2599
    %2740 = vmatmul.mubr.f32.gmra.mrb[0].mxu0 %v2547
    %v2741 = vpop.f32.mrb[0].mxu0
    %v2742 = vadd.f32 0.0, %v2741
    %v2743 = vpop.f32.mrb[0].mxu0
    %v2744 = vadd.f32 0.0, %v2743
    %2745 = vdwg.mxu0
    %2746 = vmatprep.subr.mxu0 %v787
    %2747 = vmatpush1.msra.mxu0 %v786
    %2748 = vmatprep.subr.mxu0 %v795
    %2749 = vmatpush1.msra.mxu0 %v794
    %2750 = vmatprep.subr.mxu0 %v803
    %2751 = vmatpush1.msra.mxu0 %v802
    %2752 = vmatprep.subr.mxu0 %v811
    %2753 = vmatpush1.msra.mxu0 %v810
    %2754 = vmatprep.subr.mxu0 %v819
    %2755 = vmatpush1.msra.mxu0 %v818
    %2756 = vmatprep.subr.mxu0 %v827
    %2757 = vmatpush1.msra.mxu0 %v826
    %2758 = vmatprep.subr.mxu0 %v835
    %2759 = vmatpush1.msra.mxu0 %v834
    %2760 = vmatprep.subr.mxu0 %v843
    %2761 = vmatpush1.msra.mxu0 %v842
    %2762 = vmatprep.subr.mxu0 %v851
    %2763 = vmatpush1.msra.mxu0 %v850
    %2764 = vmatprep.subr.mxu0 %v859
    %2765 = vmatpush1.msra.mxu0 %v858
    %2766 = vmatprep.subr.mxu0 %v867
    %2767 = vmatpush1.msra.mxu0 %v866
    %2768 = vmatprep.subr.mxu0 %v875
    %2769 = vmatpush1.msra.mxu0 %v874
    %2770 = vmatprep.subr.mxu0 %v883
    %2771 = vmatpush1.msra.mxu0 %v882
    %2772 = vmatprep.subr.mxu0 %v891
    %2773 = vmatpush1.msra.mxu0 %v890
    %2774 = vmatprep.subr.mxu0 %v899
    %2775 = vmatpush1.msra.mxu0 %v898
    %2776 = vmatprep.subr.mxu0 %v907
    %2777 = vmatpush1.msra.mxu0 %v906
    %2778 = vmatprep.subr.mxu0 %v915
    %2779 = vmatpush1.msra.mxu0 %v914
    %2780 = vmatprep.subr.mxu0 %v923
    %2781 = vmatpush1.msra.mxu0 %v922
    %2782 = vmatprep.subr.mxu0 %v931
    %2783 = vmatpush1.msra.mxu0 %v930
    %2784 = vmatprep.subr.mxu0 %v939
    %2785 = vmatpush1.msra.mxu0 %v938
    %2786 = vmatprep.subr.mxu0 %v947
    %2787 = vmatpush1.msra.mxu0 %v946
    %2788 = vmatprep.subr.mxu0 %v955
    %2789 = vmatpush1.msra.mxu0 %v954
    %2790 = vmatprep.subr.mxu0 %v963
    %2791 = vmatpush1.msra.mxu0 %v962
    %2792 = vmatprep.subr.mxu0 %v971
    %2793 = vmatpush1.msra.mxu0 %v970
    %2794 = vmatprep.subr.mxu0 %v979
    %2795 = vmatpush1.msra.mxu0 %v978
    %2796 = vmatprep.subr.mxu0 %v987
    %2797 = vmatpush1.msra.mxu0 %v986
    %2798 = vmatprep.subr.mxu0 %v995
    %2799 = vmatpush1.msra.mxu0 %v994
    %2800 = vmatprep.subr.mxu0 %v1003
    %2801 = vmatpush1.msra.mxu0 %v1002
    %2802 = vmatprep.subr.mxu0 %v1011
    %2803 = vmatpush1.msra.mxu0 %v1010
    %2804 = vmatprep.subr.mxu0 %v1019
    %2805 = vmatpush1.msra.mxu0 %v1018
    %2806 = vmatprep.subr.mxu0 %v1027
    %2807 = vmatpush1.msra.mxu0 %v1026
    %2808 = vmatprep.subr.mxu0 %v1035
    %2809 = vmatpush1.msra.mxu0 %v1034
    %2810 = vmatprep.mubr.f32.mxu0 %v2599
    %2811 = vmatmul.mubr.f32.gmra.mrb[0].mxu0 %v2547
    %v2812 = vpop.f32.mrb[0].mxu0
    %v2813 = vadd.f32 0.0, %v2812
    %v2814 = vpop.f32.mrb[0].mxu0
    %v2815 = vadd.f32 0.0, %v2814
    %2816 = vdwg.mxu0
    %2817 = vmatprep.subr.mxu0 %v789
    %2818 = vmatpush1.msra.mxu0 %v788
    %2819 = vmatprep.subr.mxu0 %v797
    %2820 = vmatpush1.msra.mxu0 %v796
    %2821 = vmatprep.subr.mxu0 %v805
    %2822 = vmatpush1.msra.mxu0 %v804
    %2823 = vmatprep.subr.mxu0 %v813
    %2824 = vmatpush1.msra.mxu0 %v812
    %2825 = vmatprep.subr.mxu0 %v821
    %2826 = vmatpush1.msra.mxu0 %v820
    %2827 = vmatprep.subr.mxu0 %v829
    %2828 = vmatpush1.msra.mxu0 %v828
    %2829 = vmatprep.subr.mxu0 %v837
    %2830 = vmatpush1.msra.mxu0 %v836
    %2831 = vmatprep.subr.mxu0 %v845
    %2832 = vmatpush1.msra.mxu0 %v844
    %2833 = vmatprep.subr.mxu0 %v853
    %2834 = vmatpush1.msra.mxu0 %v852
    %2835 = vmatprep.subr.mxu0 %v861
    %2836 = vmatpush1.msra.mxu0 %v860
    %2837 = vmatprep.subr.mxu0 %v869
    %2838 = vmatpush1.msra.mxu0 %v868
    %2839 = vmatprep.subr.mxu0 %v877
    %2840 = vmatpush1.msra.mxu0 %v876
    %2841 = vmatprep.subr.mxu0 %v885
    %2842 = vmatpush1.msra.mxu0 %v884
    %2843 = vmatprep.subr.mxu0 %v893
    %2844 = vmatpush1.msra.mxu0 %v892
    %2845 = vmatprep.subr.mxu0 %v901
    %2846 = vmatpush1.msra.mxu0 %v900
    %2847 = vmatprep.subr.mxu0 %v909
    %2848 = vmatpush1.msra.mxu0 %v908
    %2849 = vmatprep.subr.mxu0 %v917
    %2850 = vmatpush1.msra.mxu0 %v916
    %2851 = vmatprep.subr.mxu0 %v925
    %2852 = vmatpush1.msra.mxu0 %v924
    %2853 = vmatprep.subr.mxu0 %v933
    %2854 = vmatpush1.msra.mxu0 %v932
    %2855 = vmatprep.subr.mxu0 %v941
    %2856 = vmatpush1.msra.mxu0 %v940
    %2857 = vmatprep.subr.mxu0 %v949
    %2858 = vmatpush1.msra.mxu0 %v948
    %2859 = vmatprep.subr.mxu0 %v957
    %2860 = vmatpush1.msra.mxu0 %v956
    %2861 = vmatprep.subr.mxu0 %v965
    %2862 = vmatpush1.msra.mxu0 %v964
    %2863 = vmatprep.subr.mxu0 %v973
    %2864 = vmatpush1.msra.mxu0 %v972
    %2865 = vmatprep.subr.mxu0 %v981
    %2866 = vmatpush1.msra.mxu0 %v980
    %2867 = vmatprep.subr.mxu0 %v989
    %2868 = vmatpush1.msra.mxu0 %v988
    %2869 = vmatprep.subr.mxu0 %v997
    %2870 = vmatpush1.msra.mxu0 %v996
    %2871 = vmatprep.subr.mxu0 %v1005
    %2872 = vmatpush1.msra.mxu0 %v1004
    %2873 = vmatprep.subr.mxu0 %v1013
    %2874 = vmatpush1.msra.mxu0 %v1012
    %2875 = vmatprep.subr.mxu0 %v1021
    %2876 = vmatpush1.msra.mxu0 %v1020
    %2877 = vmatprep.subr.mxu0 %v1029
    %2878 = vmatpush1.msra.mxu0 %v1028
    %2879 = vmatprep.subr.mxu0 %v1037
    %2880 = vmatpush1.msra.mxu0 %v1036
    %2881 = vmatprep.mubr.f32.mxu0 %v2599
    %2882 = vmatmul.mubr.f32.gmra.mrb[0].mxu0 %v2547
    %v2883 = vpop.f32.mrb[0].mxu0
    %v2884 = vadd.f32 0.0, %v2883
    %v2885 = vpop.f32.mrb[0].mxu0
    %v2886 = vadd.f32 0.0, %v2885
    %2887 = vdwg.mxu0
    %s2888 = scalar_lea.vmem [#allocation2], 32
    %v2889 = vld [vmem:[%s2888] sm:$0xff]
    %v2891 = vcombine.high %v2889, %v2889
    %v2893 = vunpack.c.l.s4 1983009808
    %v2894 = vunpack.c.0.s8 %v2893
    %v2895 = vlaneseq
    %v2896 = vshrl.u32 %v2895, 7
    %v2897 = vsub.s32 %v2894, %v2896
    %v2898 = vrot.slane %v2889, %v2897
    %v2900 = vunpack.c.l.s4 1983009808
    %v2901 = vunpack.c.0.s8 %v2900
    %v2902 = vlaneseq
    %v2903 = vshrl.u32 %v2902, 7
    %v2904 = vsub.s32 %v2901, %v2903
    %v2905 = vrot.slane %v2891, %v2904
    %v2906 = vcombine.high %v2898, %v2898
    %v2907 = vcombine.high %v2905, %v2905
    %v2912 = vadd.f32 %v2671, %v2898
    %v2913 = vadd.f32 %v2673, %v2906
    %v2914 = vadd.f32 %v2742, %v2905
    %v2915 = vadd.f32 %v2744, %v2907
    %v2916 = vxor.u32 %v2912, 2147483648
    %v2917 = vmul.f32 %v2916, 1.442695
    %v2918 = vpow.pop %v2917
    %v2919 = vadd.f32 %v2918, 1.0
    %v2920 = vrcp.pop %v2919
    %v2921 = vmul.f32 1.0, %v2920
    %v2922 = vxor.u32 %v2913, 2147483648
    %v2923 = vmul.f32 %v2922, 1.442695
    %v2924 = vpow.pop %v2923
    %v2925 = vadd.f32 %v2924, 1.0
    %v2926 = vrcp.pop %v2925
    %v2927 = vmul.f32 1.0, %v2926
    %v2928 = vtanh.pop %v2914
    %v2929 = vxor.u32 %v2915, 2147483648
    %v2930 = vmul.f32 %v2929, 1.442695
    %v2931 = vpow.pop %v2930
    %v2932 = vadd.f32 %v2931, 1.0
    %v2933 = vrcp.pop %v2932
    %v2934 = vmul.f32 1.0, %v2933
    %v2935 = vmul.f32 %v2927, %v2545
    %v2936 = vmul.f32 %v2921, %v2928
    %v2937 = vadd.f32 %v2935, %v2936
    %v2938 = vtanh.pop %v2937
    %v2939 = vmul.f32 %v2934, %v2938
    %s2940 = scalar_lea.vmem [#allocation3], 24
    %v2941 = vld [vmem:[%s2940] sm:$0xff]
    %v2943 = vcombine.high %v2941, %v2941
    %v2945 = vunpack.c.l.s4 1983009808
    %v2946 = vunpack.c.0.s8 %v2945
    %v2947 = vlaneseq
    %v2948 = vshrl.u32 %v2947, 7
    %v2949 = vsub.s32 %v2946, %v2948
    %v2950 = vrot.slane %v2941, %v2949
    %v2952 = vunpack.c.l.s4 1983009808
    %v2953 = vunpack.c.0.s8 %v2952
    %v2954 = vlaneseq
    %v2955 = vshrl.u32 %v2954, 7
    %v2956 = vsub.s32 %v2953, %v2955
    %v2957 = vrot.slane %v2943, %v2956
    %v2958 = vcombine.high %v2950, %v2950
    %v2959 = vcombine.high %v2957, %v2957
    %v2964 = vadd.f32 %v2813, %v2950
    %v2965 = vadd.f32 %v2815, %v2958
    %v2966 = vadd.f32 %v2884, %v2957
    %v2967 = vadd.f32 %v2886, %v2959
    %v2968 = vxor.u32 %v2964, 2147483648
    %v2969 = vmul.f32 %v2968, 1.442695
    %v2970 = vpow.pop %v2969
    %v2971 = vadd.f32 %v2970, 1.0
    %v2972 = vrcp.pop %v2971
    %v2973 = vmul.f32 1.0, %v2972
    %v2974 = vxor.u32 %v2965, 2147483648
    %v2975 = vmul.f32 %v2974, 1.442695
    %v2976 = vpow.pop %v2975
    %v2977 = vadd.f32 %v2976, 1.0
    %v2978 = vrcp.pop %v2977
    %v2979 = vmul.f32 1.0, %v2978
    %v2980 = vtanh.pop %v2966
    %v2981 = vxor.u32 %v2967, 2147483648
    %v2982 = vmul.f32 %v2981, 1.442695
    %v2983 = vpow.pop %v2982
    %v2984 = vadd.f32 %v2983, 1.0
    %v2985 = vrcp.pop %v2984
    %v2986 = vmul.f32 1.0, %v2985
    %v2987 = vmul.f32 %v2979, %v2597
    %v2988 = vmul.f32 %v2973, %v2980
    %v2989 = vadd.f32 %v2987, %v2988
    %v2990 = vtanh.pop %v2989
    %v2991 = vmul.f32 %v2986, %v2990
    %s2992 = scalar_lea.vmem [#allocation4], 8
    %2993 = vst [vmem:[%s2992] sm:$0x3] %v2939
    %s2994 = scalar_lea.vmem [#allocation5], 6
    %2995 = vst [vmem:[%s2994] sm:$0x3] %v2991
    %2996 = vmatprep.subr.mxu0 %v783
    %2997 = vmatpush1.msra.mxu0 %v782
    %2998 = vmatprep.subr.mxu0 %v791
    %2999 = vmatpush1.msra.mxu0 %v790
    %3000 = vmatprep.subr.mxu0 %v799
    %3001 = vmatpush1.msra.mxu0 %v798
    %3002 = vmatprep.subr.mxu0 %v807
    %3003 = vmatpush1.msra.mxu0 %v806
    %3004 = vmatprep.subr.mxu0 %v815
    %3005 = vmatpush1.msra.mxu0 %v814
    %3006 = vmatprep.subr.mxu0 %v823
    %3007 = vmatpush1.msra.mxu0 %v822
    %3008 = vmatprep.subr.mxu0 %v831
    %3009 = vmatpush1.msra.mxu0 %v830
    %3010 = vmatprep.subr.mxu0 %v839
    %3011 = vmatpush1.msra.mxu0 %v838
    %3012 = vmatprep.subr.mxu0 %v847
    %3013 = vmatpush1.msra.mxu0 %v846
    %3014 = vmatprep.subr.mxu0 %v855
    %3015 = vmatpush1.msra.mxu0 %v854
    %3016 = vmatprep.subr.mxu0 %v863
    %3017 = vmatpush1.msra.mxu0 %v862
    %3018 = vmatprep.subr.mxu0 %v871
    %3019 = vmatpush1.msra.mxu0 %v870
    %3020 = vmatprep.subr.mxu0 %v879
    %3021 = vmatpush1.msra.mxu0 %v878
    %3022 = vmatprep.subr.mxu0 %v887
    %3023 = vmatpush1.msra.mxu0 %v886
    %3024 = vmatprep.subr.mxu0 %v895
    %3025 = vmatpush1.msra.mxu0 %v894
    %3026 = vmatprep.subr.mxu0 %v903
    %3027 = vmatpush1.msra.mxu0 %v902
    %3028 = vmatprep.subr.mxu0 %v911
    %3029 = vmatpush1.msra.mxu0 %v910
    %3030 = vmatprep.subr.mxu0 %v919
    %3031 = vmatpush1.msra.mxu0 %v918
    %3032 = vmatprep.subr.mxu0 %v927
    %3033 = vmatpush1.msra.mxu0 %v926
    %3034 = vmatprep.subr.mxu0 %v935
    %3035 = vmatpush1.msra.mxu0 %v934
    %3036 = vmatprep.subr.mxu0 %v943
    %3037 = vmatpush1.msra.mxu0 %v942
    %3038 = vmatprep.subr.mxu0 %v951
    %3039 = vmatpush1.msra.mxu0 %v950
    %3040 = vmatprep.subr.mxu0 %v959
    %3041 = vmatpush1.msra.mxu0 %v958
    %3042 = vmatprep.subr.mxu0 %v967
    %3043 = vmatpush1.msra.mxu0 %v966
    %3044 = vmatprep.subr.mxu0 %v975
    %3045 = vmatpush1.msra.mxu0 %v974
    %3046 = vmatprep.subr.mxu0 %v983
    %3047 = vmatpush1.msra.mxu0 %v982
    %3048 = vmatprep.subr.mxu0 %v991
    %3049 = vmatpush1.msra.mxu0 %v990
    %3050 = vmatprep.subr.mxu0 %v999
    %3051 = vmatpush1.msra.mxu0 %v998
    %3052 = vmatprep.subr.mxu0 %v1007
    %3053 = vmatpush1.msra.mxu0 %v1006
    %3054 = vmatprep.subr.mxu0 %v1015
    %3055 = vmatpush1.msra.mxu0 %v1014
    %3056 = vmatprep.subr.mxu0 %v1023
    %3057 = vmatpush1.msra.mxu0 %v1022
    %3058 = vmatprep.subr.mxu0 %v1031
    %3059 = vmatpush1.msra.mxu0 %v1030
    %3060 = vmatprep.mubr.f32.mxu0 %v2991
    %3061 = vmatmul.mubr.f32.gmra.mrb[0].mxu0 %v2939
    %v3062 = vpop.f32.mrb[0].mxu0
    %v3063 = vadd.f32 0.0, %v3062
    %v3064 = vpop.f32.mrb[0].mxu0
    %v3065 = vadd.f32 0.0, %v3064
    %3066 = vdwg.mxu0
    %3067 = vmatprep.subr.mxu0 %v785
    %3068 = vmatpush1.msra.mxu0 %v784
    %3069 = vmatprep.subr.mxu0 %v793
    %3070 = vmatpush1.msra.mxu0 %v792
    %3071 = vmatprep.subr.mxu0 %v801
    %3072 = vmatpush1.msra.mxu0 %v800
    %3073 = vmatprep.subr.mxu0 %v809
    %3074 = vmatpush1.msra.mxu0 %v808
    %3075 = vmatprep.subr.mxu0 %v817
    %3076 = vmatpush1.msra.mxu0 %v816
    %3077 = vmatprep.subr.mxu0 %v825
    %3078 = vmatpush1.msra.mxu0 %v824
    %3079 = vmatprep.subr.mxu0 %v833
    %3080 = vmatpush1.msra.mxu0 %v832
    %3081 = vmatprep.subr.mxu0 %v841
    %3082 = vmatpush1.msra.mxu0 %v840
    %3083 = vmatprep.subr.mxu0 %v849
    %3084 = vmatpush1.msra.mxu0 %v848
    %3085 = vmatprep.subr.mxu0 %v857
    %3086 = vmatpush1.msra.mxu0 %v856
    %3087 = vmatprep.subr.mxu0 %v865
    %3088 = vmatpush1.msra.mxu0 %v864
    %3089 = vmatprep.subr.mxu0 %v873
    %3090 = vmatpush1.msra.mxu0 %v872
    %3091 = vmatprep.subr.mxu0 %v881
    %3092 = vmatpush1.msra.mxu0 %v880
    %3093 = vmatprep.subr.mxu0 %v889
    %3094 = vmatpush1.msra.mxu0 %v888
    %3095 = vmatprep.subr.mxu0 %v897
    %3096 = vmatpush1.msra.mxu0 %v896
    %3097 = vmatprep.subr.mxu0 %v905
    %3098 = vmatpush1.msra.mxu0 %v904
    %3099 = vmatprep.subr.mxu0 %v913
    %3100 = vmatpush1.msra.mxu0 %v912
    %3101 = vmatprep.subr.mxu0 %v921
    %3102 = vmatpush1.msra.mxu0 %v920
    %3103 = vmatprep.subr.mxu0 %v929
    %3104 = vmatpush1.msra.mxu0 %v928
    %3105 = vmatprep.subr.mxu0 %v937
    %3106 = vmatpush1.msra.mxu0 %v936
    %3107 = vmatprep.subr.mxu0 %v945
    %3108 = vmatpush1.msra.mxu0 %v944
    %3109 = vmatprep.subr.mxu0 %v953
    %3110 = vmatpush1.msra.mxu0 %v952
    %3111 = vmatprep.subr.mxu0 %v961
    %3112 = vmatpush1.msra.mxu0 %v960
    %3113 = vmatprep.subr.mxu0 %v969
    %3114 = vmatpush1.msra.mxu0 %v968
    %3115 = vmatprep.subr.mxu0 %v977
    %3116 = vmatpush1.msra.mxu0 %v976
    %3117 = vmatprep.subr.mxu0 %v985
    %3118 = vmatpush1.msra.mxu0 %v984
    %3119 = vmatprep.subr.mxu0 %v993
    %3120 = vmatpush1.msra.mxu0 %v992
    %3121 = vmatprep.subr.mxu0 %v1001
    %3122 = vmatpush1.msra.mxu0 %v1000
    %3123 = vmatprep.subr.mxu0 %v1009
    %3124 = vmatpush1.msra.mxu0 %v1008
    %3125 = vmatprep.subr.mxu0 %v1017
    %3126 = vmatpush1.msra.mxu0 %v1016
    %3127 = vmatprep.subr.mxu0 %v1025
    %3128 = vmatpush1.msra.mxu0 %v1024
    %3129 = vmatprep.subr.mxu0 %v1033
    %3130 = vmatpush1.msra.mxu0 %v1032
    %3131 = vmatprep.mubr.f32.mxu0 %v2991
    %3132 = vmatmul.mubr.f32.gmra.mrb[0].mxu0 %v2939
    %v3133 = vpop.f32.mrb[0].mxu0
    %v3134 = vadd.f32 0.0, %v3133
    %v3135 = vpop.f32.mrb[0].mxu0
    %v3136 = vadd.f32 0.0, %v3135
    %3137 = vdwg.mxu0
    %3138 = vmatprep.subr.mxu0 %v787
    %3139 = vmatpush1.msra.mxu0 %v786
    %3140 = vmatprep.subr.mxu0 %v795
    %3141 = vmatpush1.msra.mxu0 %v794
    %3142 = vmatprep.subr.mxu0 %v803
    %3143 = vmatpush1.msra.mxu0 %v802
    %3144 = vmatprep.subr.mxu0 %v811
    %3145 = vmatpush1.msra.mxu0 %v810
    %3146 = vmatprep.subr.mxu0 %v819
    %3147 = vmatpush1.msra.mxu0 %v818
    %3148 = vmatprep.subr.mxu0 %v827
    %3149 = vmatpush1.msra.mxu0 %v826
    %3150 = vmatprep.subr.mxu0 %v835
    %3151 = vmatpush1.msra.mxu0 %v834
    %3152 = vmatprep.subr.mxu0 %v843
    %3153 = vmatpush1.msra.mxu0 %v842
    %3154 = vmatprep.subr.mxu0 %v851
    %3155 = vmatpush1.msra.mxu0 %v850
    %3156 = vmatprep.subr.mxu0 %v859
    %3157 = vmatpush1.msra.mxu0 %v858
    %3158 = vmatprep.subr.mxu0 %v867
    %3159 = vmatpush1.msra.mxu0 %v866
    %3160 = vmatprep.subr.mxu0 %v875
    %3161 = vmatpush1.msra.mxu0 %v874
    %3162 = vmatprep.subr.mxu0 %v883
    %3163 = vmatpush1.msra.mxu0 %v882
    %3164 = vmatprep.subr.mxu0 %v891
    %3165 = vmatpush1.msra.mxu0 %v890
    %3166 = vmatprep.subr.mxu0 %v899
    %3167 = vmatpush1.msra.mxu0 %v898
    %3168 = vmatprep.subr.mxu0 %v907
    %3169 = vmatpush1.msra.mxu0 %v906
    %3170 = vmatprep.subr.mxu0 %v915
    %3171 = vmatpush1.msra.mxu0 %v914
    %3172 = vmatprep.subr.mxu0 %v923
    %3173 = vmatpush1.msra.mxu0 %v922
    %3174 = vmatprep.subr.mxu0 %v931
    %3175 = vmatpush1.msra.mxu0 %v930
    %3176 = vmatprep.subr.mxu0 %v939
    %3177 = vmatpush1.msra.mxu0 %v938
    %3178 = vmatprep.subr.mxu0 %v947
    %3179 = vmatpush1.msra.mxu0 %v946
    %3180 = vmatprep.subr.mxu0 %v955
    %3181 = vmatpush1.msra.mxu0 %v954
    %3182 = vmatprep.subr.mxu0 %v963
    %3183 = vmatpush1.msra.mxu0 %v962
    %3184 = vmatprep.subr.mxu0 %v971
    %3185 = vmatpush1.msra.mxu0 %v970
    %3186 = vmatprep.subr.mxu0 %v979
    %3187 = vmatpush1.msra.mxu0 %v978
    %3188 = vmatprep.subr.mxu0 %v987
    %3189 = vmatpush1.msra.mxu0 %v986
    %3190 = vmatprep.subr.mxu0 %v995
    %3191 = vmatpush1.msra.mxu0 %v994
    %3192 = vmatprep.subr.mxu0 %v1003
    %3193 = vmatpush1.msra.mxu0 %v1002
    %3194 = vmatprep.subr.mxu0 %v1011
    %3195 = vmatpush1.msra.mxu0 %v1010
    %3196 = vmatprep.subr.mxu0 %v1019
    %3197 = vmatpush1.msra.mxu0 %v1018
    %3198 = vmatprep.subr.mxu0 %v1027
    %3199 = vmatpush1.msra.mxu0 %v1026
    %3200 = vmatprep.subr.mxu0 %v1035
    %3201 = vmatpush1.msra.mxu0 %v1034
    %3202 = vmatprep.mubr.f32.mxu0 %v2991
    %3203 = vmatmul.mubr.f32.gmra.mrb[0].mxu0 %v2939
    %v3204 = vpop.f32.mrb[0].mxu0
    %v3205 = vadd.f32 0.0, %v3204
    %v3206 = vpop.f32.mrb[0].mxu0
    %v3207 = vadd.f32 0.0, %v3206
    %3208 = vdwg.mxu0
    %3209 = vmatprep.subr.mxu0 %v789
    %3210 = vmatpush1.msra.mxu0 %v788
    %3211 = vmatprep.subr.mxu0 %v797
    %3212 = vmatpush1.msra.mxu0 %v796
    %3213 = vmatprep.subr.mxu0 %v805
    %3214 = vmatpush1.msra.mxu0 %v804
    %3215 = vmatprep.subr.mxu0 %v813
    %3216 = vmatpush1.msra.mxu0 %v812
    %3217 = vmatprep.subr.mxu0 %v821
    %3218 = vmatpush1.msra.mxu0 %v820
    %3219 = vmatprep.subr.mxu0 %v829
    %3220 = vmatpush1.msra.mxu0 %v828
    %3221 = vmatprep.subr.mxu0 %v837
    %3222 = vmatpush1.msra.mxu0 %v836
    %3223 = vmatprep.subr.mxu0 %v845
    %3224 = vmatpush1.msra.mxu0 %v844
    %3225 = vmatprep.subr.mxu0 %v853
    %3226 = vmatpush1.msra.mxu0 %v852
    %3227 = vmatprep.subr.mxu0 %v861
    %3228 = vmatpush1.msra.mxu0 %v860
    %3229 = vmatprep.subr.mxu0 %v869
    %3230 = vmatpush1.msra.mxu0 %v868
    %3231 = vmatprep.subr.mxu0 %v877
    %3232 = vmatpush1.msra.mxu0 %v876
    %3233 = vmatprep.subr.mxu0 %v885
    %3234 = vmatpush1.msra.mxu0 %v884
    %3235 = vmatprep.subr.mxu0 %v893
    %3236 = vmatpush1.msra.mxu0 %v892
    %3237 = vmatprep.subr.mxu0 %v901
    %3238 = vmatpush1.msra.mxu0 %v900
    %3239 = vmatprep.subr.mxu0 %v909
    %3240 = vmatpush1.msra.mxu0 %v908
    %3241 = vmatprep.subr.mxu0 %v917
    %3242 = vmatpush1.msra.mxu0 %v916
    %3243 = vmatprep.subr.mxu0 %v925
    %3244 = vmatpush1.msra.mxu0 %v924
    %3245 = vmatprep.subr.mxu0 %v933
    %3246 = vmatpush1.msra.mxu0 %v932
    %3247 = vmatprep.subr.mxu0 %v941
    %3248 = vmatpush1.msra.mxu0 %v940
    %3249 = vmatprep.subr.mxu0 %v949
    %3250 = vmatpush1.msra.mxu0 %v948
    %3251 = vmatprep.subr.mxu0 %v957
    %3252 = vmatpush1.msra.mxu0 %v956
    %3253 = vmatprep.subr.mxu0 %v965
    %3254 = vmatpush1.msra.mxu0 %v964
    %3255 = vmatprep.subr.mxu0 %v973
    %3256 = vmatpush1.msra.mxu0 %v972
    %3257 = vmatprep.subr.mxu0 %v981
    %3258 = vmatpush1.msra.mxu0 %v980
    %3259 = vmatprep.subr.mxu0 %v989
    %3260 = vmatpush1.msra.mxu0 %v988
    %3261 = vmatprep.subr.mxu0 %v997
    %3262 = vmatpush1.msra.mxu0 %v996
    %3263 = vmatprep.subr.mxu0 %v1005
    %3264 = vmatpush1.msra.mxu0 %v1004
    %3265 = vmatprep.subr.mxu0 %v1013
    %3266 = vmatpush1.msra.mxu0 %v1012
    %3267 = vmatprep.subr.mxu0 %v1021
    %3268 = vmatpush1.msra.mxu0 %v1020
    %3269 = vmatprep.subr.mxu0 %v1029
    %3270 = vmatpush1.msra.mxu0 %v1028
    %3271 = vmatprep.subr.mxu0 %v1037
    %3272 = vmatpush1.msra.mxu0 %v1036
    %3273 = vmatprep.mubr.f32.mxu0 %v2991
    %3274 = vmatmul.mubr.f32.gmra.mrb[0].mxu0 %v2939
    %v3275 = vpop.f32.mrb[0].mxu0
    %v3276 = vadd.f32 0.0, %v3275
    %v3277 = vpop.f32.mrb[0].mxu0
    %v3278 = vadd.f32 0.0, %v3277
    %3279 = vdwg.mxu0
    %s3280 = scalar_lea.vmem [#allocation2], 40
    %v3281 = vld [vmem:[%s3280] sm:$0xff]
    %v3283 = vcombine.high %v3281, %v3281
    %v3285 = vunpack.c.l.s4 1983009808
    %v3286 = vunpack.c.0.s8 %v3285
    %v3287 = vlaneseq
    %v3288 = vshrl.u32 %v3287, 7
    %v3289 = vsub.s32 %v3286, %v3288
    %v3290 = vrot.slane %v3281, %v3289
    %v3292 = vunpack.c.l.s4 1983009808
    %v3293 = vunpack.c.0.s8 %v3292
    %v3294 = vlaneseq
    %v3295 = vshrl.u32 %v3294, 7
    %v3296 = vsub.s32 %v3293, %v3295
    %v3297 = vrot.slane %v3283, %v3296
    %v3298 = vcombine.high %v3290, %v3290
    %v3299 = vcombine.high %v3297, %v3297
    %v3304 = vadd.f32 %v3063, %v3290
    %v3305 = vadd.f32 %v3065, %v3298
    %v3306 = vadd.f32 %v3134, %v3297
    %v3307 = vadd.f32 %v3136, %v3299
    %v3308 = vxor.u32 %v3304, 2147483648
    %v3309 = vmul.f32 %v3308, 1.442695
    %v3310 = vpow.pop %v3309
    %v3311 = vadd.f32 %v3310, 1.0
    %v3312 = vrcp.pop %v3311
    %v3313 = vmul.f32 1.0, %v3312
    %v3314 = vxor.u32 %v3305, 2147483648
    %v3315 = vmul.f32 %v3314, 1.442695
    %v3316 = vpow.pop %v3315
    %v3317 = vadd.f32 %v3316, 1.0
    %v3318 = vrcp.pop %v3317
    %v3319 = vmul.f32 1.0, %v3318
    %v3320 = vtanh.pop %v3306
    %v3321 = vxor.u32 %v3307, 2147483648
    %v3322 = vmul.f32 %v3321, 1.442695
    %v3323 = vpow.pop %v3322
    %v3324 = vadd.f32 %v3323, 1.0
    %v3325 = vrcp.pop %v3324
    %v3326 = vmul.f32 1.0, %v3325
    %v3327 = vmul.f32 %v3319, %v2937
    %v3328 = vmul.f32 %v3313, %v3320
    %v3329 = vadd.f32 %v3327, %v3328
    %v3330 = vtanh.pop %v3329
    %v3331 = vmul.f32 %v3326, %v3330
    %s3332 = scalar_lea.vmem [#allocation3], 16
    %v3333 = vld [vmem:[%s3332] sm:$0xff]
    %v3335 = vcombine.high %v3333, %v3333
    %v3337 = vunpack.c.l.s4 1983009808
    %v3338 = vunpack.c.0.s8 %v3337
    %v3339 = vlaneseq
    %v3340 = vshrl.u32 %v3339, 7
    %v3341 = vsub.s32 %v3338, %v3340
    %v3342 = vrot.slane %v3333, %v3341
    %v3344 = vunpack.c.l.s4 1983009808
    %v3345 = vunpack.c.0.s8 %v3344
    %v3346 = vlaneseq
    %v3347 = vshrl.u32 %v3346, 7
    %v3348 = vsub.s32 %v3345, %v3347
    %v3349 = vrot.slane %v3335, %v3348
    %v3350 = vcombine.high %v3342, %v3342
    %v3351 = vcombine.high %v3349, %v3349
    %v3356 = vadd.f32 %v3205, %v3342
    %v3357 = vadd.f32 %v3207, %v3350
    %v3358 = vadd.f32 %v3276, %v3349
    %v3359 = vadd.f32 %v3278, %v3351
    %v3360 = vxor.u32 %v3356, 2147483648
    %v3361 = vmul.f32 %v3360, 1.442695
    %v3362 = vpow.pop %v3361
    %v3363 = vadd.f32 %v3362, 1.0
    %v3364 = vrcp.pop %v3363
    %v3365 = vmul.f32 1.0, %v3364
    %v3366 = vxor.u32 %v3357, 2147483648
    %v3367 = vmul.f32 %v3366, 1.442695
    %v3368 = vpow.pop %v3367
    %v3369 = vadd.f32 %v3368, 1.0
    %v3370 = vrcp.pop %v3369
    %v3371 = vmul.f32 1.0, %v3370
    %v3372 = vtanh.pop %v3358
    %v3373 = vxor.u32 %v3359, 2147483648
    %v3374 = vmul.f32 %v3373, 1.442695
    %v3375 = vpow.pop %v3374
    %v3376 = vadd.f32 %v3375, 1.0
    %v3377 = vrcp.pop %v3376
    %v3378 = vmul.f32 1.0, %v3377
    %v3379 = vmul.f32 %v3371, %v2989
    %v3380 = vmul.f32 %v3365, %v3372
    %v3381 = vadd.f32 %v3379, %v3380
    %v3382 = vtanh.pop %v3381
    %v3383 = vmul.f32 %v3378, %v3382
    %s3384 = scalar_lea.vmem [#allocation4], 10
    %3385 = vst [vmem:[%s3384] sm:$0x3] %v3331
    %s3386 = scalar_lea.vmem [#allocation5], 4
    %3387 = vst [vmem:[%s3386] sm:$0x3] %v3383
    %3388 = vmatprep.subr.mxu0 %v783
    %3389 = vmatpush1.msra.mxu0 %v782
    %3390 = vmatprep.subr.mxu0 %v791
    %3391 = vmatpush1.msra.mxu0 %v790
    %3392 = vmatprep.subr.mxu0 %v799
    %3393 = vmatpush1.msra.mxu0 %v798
    %3394 = vmatprep.subr.mxu0 %v807
    %3395 = vmatpush1.msra.mxu0 %v806
    %3396 = vmatprep.subr.mxu0 %v815
    %3397 = vmatpush1.msra.mxu0 %v814
    %3398 = vmatprep.subr.mxu0 %v823
    %3399 = vmatpush1.msra.mxu0 %v822
    %3400 = vmatprep.subr.mxu0 %v831
    %3401 = vmatpush1.msra.mxu0 %v830
    %3402 = vmatprep.subr.mxu0 %v839
    %3403 = vmatpush1.msra.mxu0 %v838
    %3404 = vmatprep.subr.mxu0 %v847
    %3405 = vmatpush1.msra.mxu0 %v846
    %3406 = vmatprep.subr.mxu0 %v855
    %3407 = vmatpush1.msra.mxu0 %v854
    %3408 = vmatprep.subr.mxu0 %v863
    %3409 = vmatpush1.msra.mxu0 %v862
    %3410 = vmatprep.subr.mxu0 %v871
    %3411 = vmatpush1.msra.mxu0 %v870
    %3412 = vmatprep.subr.mxu0 %v879
    %3413 = vmatpush1.msra.mxu0 %v878
    %3414 = vmatprep.subr.mxu0 %v887
    %3415 = vmatpush1.msra.mxu0 %v886
    %3416 = vmatprep.subr.mxu0 %v895
    %3417 = vmatpush1.msra.mxu0 %v894
    %3418 = vmatprep.subr.mxu0 %v903
    %3419 = vmatpush1.msra.mxu0 %v902
    %3420 = vmatprep.subr.mxu0 %v911
    %3421 = vmatpush1.msra.mxu0 %v910
    %3422 = vmatprep.subr.mxu0 %v919
    %3423 = vmatpush1.msra.mxu0 %v918
    %3424 = vmatprep.subr.mxu0 %v927
    %3425 = vmatpush1.msra.mxu0 %v926
    %3426 = vmatprep.subr.mxu0 %v935
    %3427 = vmatpush1.msra.mxu0 %v934
    %3428 = vmatprep.subr.mxu0 %v943
    %3429 = vmatpush1.msra.mxu0 %v942
    %3430 = vmatprep.subr.mxu0 %v951
    %3431 = vmatpush1.msra.mxu0 %v950
    %3432 = vmatprep.subr.mxu0 %v959
    %3433 = vmatpush1.msra.mxu0 %v958
    %3434 = vmatprep.subr.mxu0 %v967
    %3435 = vmatpush1.msra.mxu0 %v966
    %3436 = vmatprep.subr.mxu0 %v975
    %3437 = vmatpush1.msra.mxu0 %v974
    %3438 = vmatprep.subr.mxu0 %v983
    %3439 = vmatpush1.msra.mxu0 %v982
    %3440 = vmatprep.subr.mxu0 %v991
    %3441 = vmatpush1.msra.mxu0 %v990
    %3442 = vmatprep.subr.mxu0 %v999
    %3443 = vmatpush1.msra.mxu0 %v998
    %3444 = vmatprep.subr.mxu0 %v1007
    %3445 = vmatpush1.msra.mxu0 %v1006
    %3446 = vmatprep.subr.mxu0 %v1015
    %3447 = vmatpush1.msra.mxu0 %v1014
    %3448 = vmatprep.subr.mxu0 %v1023
    %3449 = vmatpush1.msra.mxu0 %v1022
    %3450 = vmatprep.subr.mxu0 %v1031
    %3451 = vmatpush1.msra.mxu0 %v1030
    %3452 = vmatprep.mubr.f32.mxu0 %v3383
    %3453 = vmatmul.mubr.f32.gmra.mrb[0].mxu0 %v3331
    %v3454 = vpop.f32.mrb[0].mxu0
    %v3455 = vadd.f32 0.0, %v3454
    %v3456 = vpop.f32.mrb[0].mxu0
    %v3457 = vadd.f32 0.0, %v3456
    %3458 = vdwg.mxu0
    %3459 = vmatprep.subr.mxu0 %v785
    %3460 = vmatpush1.msra.mxu0 %v784
    %3461 = vmatprep.subr.mxu0 %v793
    %3462 = vmatpush1.msra.mxu0 %v792
    %3463 = vmatprep.subr.mxu0 %v801
    %3464 = vmatpush1.msra.mxu0 %v800
    %3465 = vmatprep.subr.mxu0 %v809
    %3466 = vmatpush1.msra.mxu0 %v808
    %3467 = vmatprep.subr.mxu0 %v817
    %3468 = vmatpush1.msra.mxu0 %v816
    %3469 = vmatprep.subr.mxu0 %v825
    %3470 = vmatpush1.msra.mxu0 %v824
    %3471 = vmatprep.subr.mxu0 %v833
    %3472 = vmatpush1.msra.mxu0 %v832
    %3473 = vmatprep.subr.mxu0 %v841
    %3474 = vmatpush1.msra.mxu0 %v840
    %3475 = vmatprep.subr.mxu0 %v849
    %3476 = vmatpush1.msra.mxu0 %v848
    %3477 = vmatprep.subr.mxu0 %v857
    %3478 = vmatpush1.msra.mxu0 %v856
    %3479 = vmatprep.subr.mxu0 %v865
    %3480 = vmatpush1.msra.mxu0 %v864
    %3481 = vmatprep.subr.mxu0 %v873
    %3482 = vmatpush1.msra.mxu0 %v872
    %3483 = vmatprep.subr.mxu0 %v881
    %3484 = vmatpush1.msra.mxu0 %v880
    %3485 = vmatprep.subr.mxu0 %v889
    %3486 = vmatpush1.msra.mxu0 %v888
    %3487 = vmatprep.subr.mxu0 %v897
    %3488 = vmatpush1.msra.mxu0 %v896
    %3489 = vmatprep.subr.mxu0 %v905
    %3490 = vmatpush1.msra.mxu0 %v904
    %3491 = vmatprep.subr.mxu0 %v913
    %3492 = vmatpush1.msra.mxu0 %v912
    %3493 = vmatprep.subr.mxu0 %v921
    %3494 = vmatpush1.msra.mxu0 %v920
    %3495 = vmatprep.subr.mxu0 %v929
    %3496 = vmatpush1.msra.mxu0 %v928
    %3497 = vmatprep.subr.mxu0 %v937
    %3498 = vmatpush1.msra.mxu0 %v936
    %3499 = vmatprep.subr.mxu0 %v945
    %3500 = vmatpush1.msra.mxu0 %v944
    %3501 = vmatprep.subr.mxu0 %v953
    %3502 = vmatpush1.msra.mxu0 %v952
    %3503 = vmatprep.subr.mxu0 %v961
    %3504 = vmatpush1.msra.mxu0 %v960
    %3505 = vmatprep.subr.mxu0 %v969
    %3506 = vmatpush1.msra.mxu0 %v968
    %3507 = vmatprep.subr.mxu0 %v977
    %3508 = vmatpush1.msra.mxu0 %v976
    %3509 = vmatprep.subr.mxu0 %v985
    %3510 = vmatpush1.msra.mxu0 %v984
    %3511 = vmatprep.subr.mxu0 %v993
    %3512 = vmatpush1.msra.mxu0 %v992
    %3513 = vmatprep.subr.mxu0 %v1001
    %3514 = vmatpush1.msra.mxu0 %v1000
    %3515 = vmatprep.subr.mxu0 %v1009
    %3516 = vmatpush1.msra.mxu0 %v1008
    %3517 = vmatprep.subr.mxu0 %v1017
    %3518 = vmatpush1.msra.mxu0 %v1016
    %3519 = vmatprep.subr.mxu0 %v1025
    %3520 = vmatpush1.msra.mxu0 %v1024
    %3521 = vmatprep.subr.mxu0 %v1033
    %3522 = vmatpush1.msra.mxu0 %v1032
    %3523 = vmatprep.mubr.f32.mxu0 %v3383
    %3524 = vmatmul.mubr.f32.gmra.mrb[0].mxu0 %v3331
    %v3525 = vpop.f32.mrb[0].mxu0
    %v3526 = vadd.f32 0.0, %v3525
    %v3527 = vpop.f32.mrb[0].mxu0
    %v3528 = vadd.f32 0.0, %v3527
    %3529 = vdwg.mxu0
    %3530 = vmatprep.subr.mxu0 %v787
    %3531 = vmatpush1.msra.mxu0 %v786
    %3532 = vmatprep.subr.mxu0 %v795
    %3533 = vmatpush1.msra.mxu0 %v794
    %3534 = vmatprep.subr.mxu0 %v803
    %3535 = vmatpush1.msra.mxu0 %v802
    %3536 = vmatprep.subr.mxu0 %v811
    %3537 = vmatpush1.msra.mxu0 %v810
    %3538 = vmatprep.subr.mxu0 %v819
    %3539 = vmatpush1.msra.mxu0 %v818
    %3540 = vmatprep.subr.mxu0 %v827
    %3541 = vmatpush1.msra.mxu0 %v826
    %3542 = vmatprep.subr.mxu0 %v835
    %3543 = vmatpush1.msra.mxu0 %v834
    %3544 = vmatprep.subr.mxu0 %v843
    %3545 = vmatpush1.msra.mxu0 %v842
    %3546 = vmatprep.subr.mxu0 %v851
    %3547 = vmatpush1.msra.mxu0 %v850
    %3548 = vmatprep.subr.mxu0 %v859
    %3549 = vmatpush1.msra.mxu0 %v858
    %3550 = vmatprep.subr.mxu0 %v867
    %3551 = vmatpush1.msra.mxu0 %v866
    %3552 = vmatprep.subr.mxu0 %v875
    %3553 = vmatpush1.msra.mxu0 %v874
    %3554 = vmatprep.subr.mxu0 %v883
    %3555 = vmatpush1.msra.mxu0 %v882
    %3556 = vmatprep.subr.mxu0 %v891
    %3557 = vmatpush1.msra.mxu0 %v890
    %3558 = vmatprep.subr.mxu0 %v899
    %3559 = vmatpush1.msra.mxu0 %v898
    %3560 = vmatprep.subr.mxu0 %v907
    %3561 = vmatpush1.msra.mxu0 %v906
    %3562 = vmatprep.subr.mxu0 %v915
    %3563 = vmatpush1.msra.mxu0 %v914
    %3564 = vmatprep.subr.mxu0 %v923
    %3565 = vmatpush1.msra.mxu0 %v922
    %3566 = vmatprep.subr.mxu0 %v931
    %3567 = vmatpush1.msra.mxu0 %v930
    %3568 = vmatprep.subr.mxu0 %v939
    %3569 = vmatpush1.msra.mxu0 %v938
    %3570 = vmatprep.subr.mxu0 %v947
    %3571 = vmatpush1.msra.mxu0 %v946
    %3572 = vmatprep.subr.mxu0 %v955
    %3573 = vmatpush1.msra.mxu0 %v954
    %3574 = vmatprep.subr.mxu0 %v963
    %3575 = vmatpush1.msra.mxu0 %v962
    %3576 = vmatprep.subr.mxu0 %v971
    %3577 = vmatpush1.msra.mxu0 %v970
    %3578 = vmatprep.subr.mxu0 %v979
    %3579 = vmatpush1.msra.mxu0 %v978
    %3580 = vmatprep.subr.mxu0 %v987
    %3581 = vmatpush1.msra.mxu0 %v986
    %3582 = vmatprep.subr.mxu0 %v995
    %3583 = vmatpush1.msra.mxu0 %v994
    %3584 = vmatprep.subr.mxu0 %v1003
    %3585 = vmatpush1.msra.mxu0 %v1002
    %3586 = vmatprep.subr.mxu0 %v1011
    %3587 = vmatpush1.msra.mxu0 %v1010
    %3588 = vmatprep.subr.mxu0 %v1019
    %3589 = vmatpush1.msra.mxu0 %v1018
    %3590 = vmatprep.subr.mxu0 %v1027
    %3591 = vmatpush1.msra.mxu0 %v1026
    %3592 = vmatprep.subr.mxu0 %v1035
    %3593 = vmatpush1.msra.mxu0 %v1034
    %3594 = vmatprep.mubr.f32.mxu0 %v3383
    %3595 = vmatmul.mubr.f32.gmra.mrb[0].mxu0 %v3331
    %v3596 = vpop.f32.mrb[0].mxu0
    %v3597 = vadd.f32 0.0, %v3596
    %v3598 = vpop.f32.mrb[0].mxu0
    %v3599 = vadd.f32 0.0, %v3598
    %3600 = vdwg.mxu0
    %3601 = vmatprep.subr.mxu0 %v789
    %3602 = vmatpush1.msra.mxu0 %v788
    %3603 = vmatprep.subr.mxu0 %v797
    %3604 = vmatpush1.msra.mxu0 %v796
    %3605 = vmatprep.subr.mxu0 %v805
    %3606 = vmatpush1.msra.mxu0 %v804
    %3607 = vmatprep.subr.mxu0 %v813
    %3608 = vmatpush1.msra.mxu0 %v812
    %3609 = vmatprep.subr.mxu0 %v821
    %3610 = vmatpush1.msra.mxu0 %v820
    %3611 = vmatprep.subr.mxu0 %v829
    %3612 = vmatpush1.msra.mxu0 %v828
    %3613 = vmatprep.subr.mxu0 %v837
    %3614 = vmatpush1.msra.mxu0 %v836
    %3615 = vmatprep.subr.mxu0 %v845
    %3616 = vmatpush1.msra.mxu0 %v844
    %3617 = vmatprep.subr.mxu0 %v853
    %3618 = vmatpush1.msra.mxu0 %v852
    %3619 = vmatprep.subr.mxu0 %v861
    %3620 = vmatpush1.msra.mxu0 %v860
    %3621 = vmatprep.subr.mxu0 %v869
    %3622 = vmatpush1.msra.mxu0 %v868
    %3623 = vmatprep.subr.mxu0 %v877
    %3624 = vmatpush1.msra.mxu0 %v876
    %3625 = vmatprep.subr.mxu0 %v885
    %3626 = vmatpush1.msra.mxu0 %v884
    %3627 = vmatprep.subr.mxu0 %v893
    %3628 = vmatpush1.msra.mxu0 %v892
    %3629 = vmatprep.subr.mxu0 %v901
    %3630 = vmatpush1.msra.mxu0 %v900
    %3631 = vmatprep.subr.mxu0 %v909
    %3632 = vmatpush1.msra.mxu0 %v908
    %3633 = vmatprep.subr.mxu0 %v917
    %3634 = vmatpush1.msra.mxu0 %v916
    %3635 = vmatprep.subr.mxu0 %v925
    %3636 = vmatpush1.msra.mxu0 %v924
    %3637 = vmatprep.subr.mxu0 %v933
    %3638 = vmatpush1.msra.mxu0 %v932
    %3639 = vmatprep.subr.mxu0 %v941
    %3640 = vmatpush1.msra.mxu0 %v940
    %3641 = vmatprep.subr.mxu0 %v949
    %3642 = vmatpush1.msra.mxu0 %v948
    %3643 = vmatprep.subr.mxu0 %v957
    %3644 = vmatpush1.msra.mxu0 %v956
    %3645 = vmatprep.subr.mxu0 %v965
    %3646 = vmatpush1.msra.mxu0 %v964
    %3647 = vmatprep.subr.mxu0 %v973
    %3648 = vmatpush1.msra.mxu0 %v972
    %3649 = vmatprep.subr.mxu0 %v981
    %3650 = vmatpush1.msra.mxu0 %v980
    %3651 = vmatprep.subr.mxu0 %v989
    %3652 = vmatpush1.msra.mxu0 %v988
    %3653 = vmatprep.subr.mxu0 %v997
    %3654 = vmatpush1.msra.mxu0 %v996
    %3655 = vmatprep.subr.mxu0 %v1005
    %3656 = vmatpush1.msra.mxu0 %v1004
    %3657 = vmatprep.subr.mxu0 %v1013
    %3658 = vmatpush1.msra.mxu0 %v1012
    %3659 = vmatprep.subr.mxu0 %v1021
    %3660 = vmatpush1.msra.mxu0 %v1020
    %3661 = vmatprep.subr.mxu0 %v1029
    %3662 = vmatpush1.msra.mxu0 %v1028
    %3663 = vmatprep.subr.mxu0 %v1037
    %3664 = vmatpush1.msra.mxu0 %v1036
    %3665 = vmatprep.mubr.f32.mxu0 %v3383
    %3666 = vmatmul.mubr.f32.gmra.mrb[0].mxu0 %v3331
    %v3667 = vpop.f32.mrb[0].mxu0
    %v3668 = vadd.f32 0.0, %v3667
    %v3669 = vpop.f32.mrb[0].mxu0
    %v3670 = vadd.f32 0.0, %v3669
    %3671 = vdwg.mxu0
    %s3672 = scalar_lea.vmem [#allocation2], 48
    %v3673 = vld [vmem:[%s3672] sm:$0xff]
    %v3675 = vcombine.high %v3673, %v3673
    %v3677 = vunpack.c.l.s4 1983009808
    %v3678 = vunpack.c.0.s8 %v3677
    %v3679 = vlaneseq
    %v3680 = vshrl.u32 %v3679, 7
    %v3681 = vsub.s32 %v3678, %v3680
    %v3682 = vrot.slane %v3673, %v3681
    %v3684 = vunpack.c.l.s4 1983009808
    %v3685 = vunpack.c.0.s8 %v3684
    %v3686 = vlaneseq
    %v3687 = vshrl.u32 %v3686, 7
    %v3688 = vsub.s32 %v3685, %v3687
    %v3689 = vrot.slane %v3675, %v3688
    %v3690 = vcombine.high %v3682, %v3682
    %v3691 = vcombine.high %v3689, %v3689
    %v3696 = vadd.f32 %v3455, %v3682
    %v3697 = vadd.f32 %v3457, %v3690
    %v3698 = vadd.f32 %v3526, %v3689
    %v3699 = vadd.f32 %v3528, %v3691
    %v3700 = vxor.u32 %v3696, 2147483648
    %v3701 = vmul.f32 %v3700, 1.442695
    %v3702 = vpow.pop %v3701
    %v3703 = vadd.f32 %v3702, 1.0
    %v3704 = vrcp.pop %v3703
    %v3705 = vmul.f32 1.0, %v3704
    %v3706 = vxor.u32 %v3697, 2147483648
    %v3707 = vmul.f32 %v3706, 1.442695
    %v3708 = vpow.pop %v3707
    %v3709 = vadd.f32 %v3708, 1.0
    %v3710 = vrcp.pop %v3709
    %v3711 = vmul.f32 1.0, %v3710
    %v3712 = vtanh.pop %v3698
    %v3713 = vxor.u32 %v3699, 2147483648
    %v3714 = vmul.f32 %v3713, 1.442695
    %v3715 = vpow.pop %v3714
    %v3716 = vadd.f32 %v3715, 1.0
    %v3717 = vrcp.pop %v3716
    %v3718 = vmul.f32 1.0, %v3717
    %v3719 = vmul.f32 %v3711, %v3329
    %v3720 = vmul.f32 %v3705, %v3712
    %v3721 = vadd.f32 %v3719, %v3720
    %v3722 = vtanh.pop %v3721
    %v3723 = vmul.f32 %v3718, %v3722
    %s3724 = scalar_lea.vmem [#allocation3], 8
    %v3725 = vld [vmem:[%s3724] sm:$0xff]
    %v3727 = vcombine.high %v3725, %v3725
    %v3729 = vunpack.c.l.s4 1983009808
    %v3730 = vunpack.c.0.s8 %v3729
    %v3731 = vlaneseq
    %v3732 = vshrl.u32 %v3731, 7
    %v3733 = vsub.s32 %v3730, %v3732
    %v3734 = vrot.slane %v3725, %v3733
    %v3736 = vunpack.c.l.s4 1983009808
    %v3737 = vunpack.c.0.s8 %v3736
    %v3738 = vlaneseq
    %v3739 = vshrl.u32 %v3738, 7
    %v3740 = vsub.s32 %v3737, %v3739
    %v3741 = vrot.slane %v3727, %v3740
    %v3742 = vcombine.high %v3734, %v3734
    %v3743 = vcombine.high %v3741, %v3741
    %v3748 = vadd.f32 %v3597, %v3734
    %v3749 = vadd.f32 %v3599, %v3742
    %v3750 = vadd.f32 %v3668, %v3741
    %v3751 = vadd.f32 %v3670, %v3743
    %v3752 = vxor.u32 %v3748, 2147483648
    %v3753 = vmul.f32 %v3752, 1.442695
    %v3754 = vpow.pop %v3753
    %v3755 = vadd.f32 %v3754, 1.0
    %v3756 = vrcp.pop %v3755
    %v3757 = vmul.f32 1.0, %v3756
    %v3758 = vxor.u32 %v3749, 2147483648
    %v3759 = vmul.f32 %v3758, 1.442695
    %v3760 = vpow.pop %v3759
    %v3761 = vadd.f32 %v3760, 1.0
    %v3762 = vrcp.pop %v3761
    %v3763 = vmul.f32 1.0, %v3762
    %v3764 = vtanh.pop %v3750
    %v3765 = vxor.u32 %v3751, 2147483648
    %v3766 = vmul.f32 %v3765, 1.442695
    %v3767 = vpow.pop %v3766
    %v3768 = vadd.f32 %v3767, 1.0
    %v3769 = vrcp.pop %v3768
    %v3770 = vmul.f32 1.0, %v3769
    %v3771 = vmul.f32 %v3763, %v3381
    %v3772 = vmul.f32 %v3757, %v3764
    %v3773 = vadd.f32 %v3771, %v3772
    %v3774 = vtanh.pop %v3773
    %v3775 = vmul.f32 %v3770, %v3774
    %s3776 = scalar_lea.vmem [#allocation4], 12
    %3777 = vst [vmem:[%s3776] sm:$0x3] %v3723
    %s3778 = scalar_lea.vmem [#allocation5], 2
    %3779 = vst [vmem:[%s3778] sm:$0x3] %v3775
    %3780 = vmatprep.subr.mxu0 %v783
    %3781 = vmatpush1.msra.mxu0 %v782
    %3782 = vmatprep.subr.mxu0 %v791
    %3783 = vmatpush1.msra.mxu0 %v790
    %3784 = vmatprep.subr.mxu0 %v799
    %3785 = vmatpush1.msra.mxu0 %v798
    %3786 = vmatprep.subr.mxu0 %v807
    %3787 = vmatpush1.msra.mxu0 %v806
    %3788 = vmatprep.subr.mxu0 %v815
    %3789 = vmatpush1.msra.mxu0 %v814
    %3790 = vmatprep.subr.mxu0 %v823
    %3791 = vmatpush1.msra.mxu0 %v822
    %3792 = vmatprep.subr.mxu0 %v831
    %3793 = vmatpush1.msra.mxu0 %v830
    %3794 = vmatprep.subr.mxu0 %v839
    %3795 = vmatpush1.msra.mxu0 %v838
    %3796 = vmatprep.subr.mxu0 %v847
    %3797 = vmatpush1.msra.mxu0 %v846
    %3798 = vmatprep.subr.mxu0 %v855
    %3799 = vmatpush1.msra.mxu0 %v854
    %3800 = vmatprep.subr.mxu0 %v863
    %3801 = vmatpush1.msra.mxu0 %v862
    %3802 = vmatprep.subr.mxu0 %v871
    %3803 = vmatpush1.msra.mxu0 %v870
    %3804 = vmatprep.subr.mxu0 %v879
    %3805 = vmatpush1.msra.mxu0 %v878
    %3806 = vmatprep.subr.mxu0 %v887
    %3807 = vmatpush1.msra.mxu0 %v886
    %3808 = vmatprep.subr.mxu0 %v895
    %3809 = vmatpush1.msra.mxu0 %v894
    %3810 = vmatprep.subr.mxu0 %v903
    %3811 = vmatpush1.msra.mxu0 %v902
    %3812 = vmatprep.subr.mxu0 %v911
    %3813 = vmatpush1.msra.mxu0 %v910
    %3814 = vmatprep.subr.mxu0 %v919
    %3815 = vmatpush1.msra.mxu0 %v918
    %3816 = vmatprep.subr.mxu0 %v927
    %3817 = vmatpush1.msra.mxu0 %v926
    %3818 = vmatprep.subr.mxu0 %v935
    %3819 = vmatpush1.msra.mxu0 %v934
    %3820 = vmatprep.subr.mxu0 %v943
    %3821 = vmatpush1.msra.mxu0 %v942
    %3822 = vmatprep.subr.mxu0 %v951
    %3823 = vmatpush1.msra.mxu0 %v950
    %3824 = vmatprep.subr.mxu0 %v959
    %3825 = vmatpush1.msra.mxu0 %v958
    %3826 = vmatprep.subr.mxu0 %v967
    %3827 = vmatpush1.msra.mxu0 %v966
    %3828 = vmatprep.subr.mxu0 %v975
    %3829 = vmatpush1.msra.mxu0 %v974
    %3830 = vmatprep.subr.mxu0 %v983
    %3831 = vmatpush1.msra.mxu0 %v982
    %3832 = vmatprep.subr.mxu0 %v991
    %3833 = vmatpush1.msra.mxu0 %v990
    %3834 = vmatprep.subr.mxu0 %v999
    %3835 = vmatpush1.msra.mxu0 %v998
    %3836 = vmatprep.subr.mxu0 %v1007
    %3837 = vmatpush1.msra.mxu0 %v1006
    %3838 = vmatprep.subr.mxu0 %v1015
    %3839 = vmatpush1.msra.mxu0 %v1014
    %3840 = vmatprep.subr.mxu0 %v1023
    %3841 = vmatpush1.msra.mxu0 %v1022
    %3842 = vmatprep.subr.mxu0 %v1031
    %3843 = vmatpush1.msra.mxu0 %v1030
    %3844 = vmatprep.mubr.f32.mxu0 %v3775
    %3845 = vmatmul.mubr.f32.gmra.mrb[0].mxu0 %v3723
    %v3846 = vpop.f32.mrb[0].mxu0
    %v3847 = vadd.f32 0.0, %v3846
    %v3848 = vpop.f32.mrb[0].mxu0
    %v3849 = vadd.f32 0.0, %v3848
    %3850 = vdwg.mxu0
    %3851 = vmatprep.subr.mxu0 %v785
    %3852 = vmatpush1.msra.mxu0 %v784
    %3853 = vmatprep.subr.mxu0 %v793
    %3854 = vmatpush1.msra.mxu0 %v792
    %3855 = vmatprep.subr.mxu0 %v801
    %3856 = vmatpush1.msra.mxu0 %v800
    %3857 = vmatprep.subr.mxu0 %v809
    %3858 = vmatpush1.msra.mxu0 %v808
    %3859 = vmatprep.subr.mxu0 %v817
    %3860 = vmatpush1.msra.mxu0 %v816
    %3861 = vmatprep.subr.mxu0 %v825
    %3862 = vmatpush1.msra.mxu0 %v824
    %3863 = vmatprep.subr.mxu0 %v833
    %3864 = vmatpush1.msra.mxu0 %v832
    %3865 = vmatprep.subr.mxu0 %v841
    %3866 = vmatpush1.msra.mxu0 %v840
    %3867 = vmatprep.subr.mxu0 %v849
    %3868 = vmatpush1.msra.mxu0 %v848
    %3869 = vmatprep.subr.mxu0 %v857
    %3870 = vmatpush1.msra.mxu0 %v856
    %3871 = vmatprep.subr.mxu0 %v865
    %3872 = vmatpush1.msra.mxu0 %v864
    %3873 = vmatprep.subr.mxu0 %v873
    %3874 = vmatpush1.msra.mxu0 %v872
    %3875 = vmatprep.subr.mxu0 %v881
    %3876 = vmatpush1.msra.mxu0 %v880
    %3877 = vmatprep.subr.mxu0 %v889
    %3878 = vmatpush1.msra.mxu0 %v888
    %3879 = vmatprep.subr.mxu0 %v897
    %3880 = vmatpush1.msra.mxu0 %v896
    %3881 = vmatprep.subr.mxu0 %v905
    %3882 = vmatpush1.msra.mxu0 %v904
    %3883 = vmatprep.subr.mxu0 %v913
    %3884 = vmatpush1.msra.mxu0 %v912
    %3885 = vmatprep.subr.mxu0 %v921
    %3886 = vmatpush1.msra.mxu0 %v920
    %3887 = vmatprep.subr.mxu0 %v929
    %3888 = vmatpush1.msra.mxu0 %v928
    %3889 = vmatprep.subr.mxu0 %v937
    %3890 = vmatpush1.msra.mxu0 %v936
    %3891 = vmatprep.subr.mxu0 %v945
    %3892 = vmatpush1.msra.mxu0 %v944
    %3893 = vmatprep.subr.mxu0 %v953
    %3894 = vmatpush1.msra.mxu0 %v952
    %3895 = vmatprep.subr.mxu0 %v961
    %3896 = vmatpush1.msra.mxu0 %v960
    %3897 = vmatprep.subr.mxu0 %v969
    %3898 = vmatpush1.msra.mxu0 %v968
    %3899 = vmatprep.subr.mxu0 %v977
    %3900 = vmatpush1.msra.mxu0 %v976
    %3901 = vmatprep.subr.mxu0 %v985
    %3902 = vmatpush1.msra.mxu0 %v984
    %3903 = vmatprep.subr.mxu0 %v993
    %3904 = vmatpush1.msra.mxu0 %v992
    %3905 = vmatprep.subr.mxu0 %v1001
    %3906 = vmatpush1.msra.mxu0 %v1000
    %3907 = vmatprep.subr.mxu0 %v1009
    %3908 = vmatpush1.msra.mxu0 %v1008
    %3909 = vmatprep.subr.mxu0 %v1017
    %3910 = vmatpush1.msra.mxu0 %v1016
    %3911 = vmatprep.subr.mxu0 %v1025
    %3912 = vmatpush1.msra.mxu0 %v1024
    %3913 = vmatprep.subr.mxu0 %v1033
    %3914 = vmatpush1.msra.mxu0 %v1032
    %3915 = vmatprep.mubr.f32.mxu0 %v3775
    %3916 = vmatmul.mubr.f32.gmra.mrb[0].mxu0 %v3723
    %v3917 = vpop.f32.mrb[0].mxu0
    %v3918 = vadd.f32 0.0, %v3917
    %v3919 = vpop.f32.mrb[0].mxu0
    %v3920 = vadd.f32 0.0, %v3919
    %3921 = vdwg.mxu0
    %3922 = vmatprep.subr.mxu0 %v787
    %3923 = vmatpush1.msra.mxu0 %v786
    %3924 = vmatprep.subr.mxu0 %v795
    %3925 = vmatpush1.msra.mxu0 %v794
    %3926 = vmatprep.subr.mxu0 %v803
    %3927 = vmatpush1.msra.mxu0 %v802
    %3928 = vmatprep.subr.mxu0 %v811
    %3929 = vmatpush1.msra.mxu0 %v810
    %3930 = vmatprep.subr.mxu0 %v819
    %3931 = vmatpush1.msra.mxu0 %v818
    %3932 = vmatprep.subr.mxu0 %v827
    %3933 = vmatpush1.msra.mxu0 %v826
    %3934 = vmatprep.subr.mxu0 %v835
    %3935 = vmatpush1.msra.mxu0 %v834
    %3936 = vmatprep.subr.mxu0 %v843
    %3937 = vmatpush1.msra.mxu0 %v842
    %3938 = vmatprep.subr.mxu0 %v851
    %3939 = vmatpush1.msra.mxu0 %v850
    %3940 = vmatprep.subr.mxu0 %v859
    %3941 = vmatpush1.msra.mxu0 %v858
    %3942 = vmatprep.subr.mxu0 %v867
    %3943 = vmatpush1.msra.mxu0 %v866
    %3944 = vmatprep.subr.mxu0 %v875
    %3945 = vmatpush1.msra.mxu0 %v874
    %3946 = vmatprep.subr.mxu0 %v883
    %3947 = vmatpush1.msra.mxu0 %v882
    %3948 = vmatprep.subr.mxu0 %v891
    %3949 = vmatpush1.msra.mxu0 %v890
    %3950 = vmatprep.subr.mxu0 %v899
    %3951 = vmatpush1.msra.mxu0 %v898
    %3952 = vmatprep.subr.mxu0 %v907
    %3953 = vmatpush1.msra.mxu0 %v906
    %3954 = vmatprep.subr.mxu0 %v915
    %3955 = vmatpush1.msra.mxu0 %v914
    %3956 = vmatprep.subr.mxu0 %v923
    %3957 = vmatpush1.msra.mxu0 %v922
    %3958 = vmatprep.subr.mxu0 %v931
    %3959 = vmatpush1.msra.mxu0 %v930
    %3960 = vmatprep.subr.mxu0 %v939
    %3961 = vmatpush1.msra.mxu0 %v938
    %3962 = vmatprep.subr.mxu0 %v947
    %3963 = vmatpush1.msra.mxu0 %v946
    %3964 = vmatprep.subr.mxu0 %v955
    %3965 = vmatpush1.msra.mxu0 %v954
    %3966 = vmatprep.subr.mxu0 %v963
    %3967 = vmatpush1.msra.mxu0 %v962
    %3968 = vmatprep.subr.mxu0 %v971
    %3969 = vmatpush1.msra.mxu0 %v970
    %3970 = vmatprep.subr.mxu0 %v979
    %3971 = vmatpush1.msra.mxu0 %v978
    %3972 = vmatprep.subr.mxu0 %v987
    %3973 = vmatpush1.msra.mxu0 %v986
    %3974 = vmatprep.subr.mxu0 %v995
    %3975 = vmatpush1.msra.mxu0 %v994
    %3976 = vmatprep.subr.mxu0 %v1003
    %3977 = vmatpush1.msra.mxu0 %v1002
    %3978 = vmatprep.subr.mxu0 %v1011
    %3979 = vmatpush1.msra.mxu0 %v1010
    %3980 = vmatprep.subr.mxu0 %v1019
    %3981 = vmatpush1.msra.mxu0 %v1018
    %3982 = vmatprep.subr.mxu0 %v1027
    %3983 = vmatpush1.msra.mxu0 %v1026
    %3984 = vmatprep.subr.mxu0 %v1035
    %3985 = vmatpush1.msra.mxu0 %v1034
    %3986 = vmatprep.mubr.f32.mxu0 %v3775
    %3987 = vmatmul.mubr.f32.gmra.mrb[0].mxu0 %v3723
    %v3988 = vpop.f32.mrb[0].mxu0
    %v3989 = vadd.f32 0.0, %v3988
    %v3990 = vpop.f32.mrb[0].mxu0
    %v3991 = vadd.f32 0.0, %v3990
    %3992 = vdwg.mxu0
    %3993 = vmatprep.subr.mxu0 %v789
    %3994 = vmatpush1.msra.mxu0 %v788
    %3995 = vmatprep.subr.mxu0 %v797
    %3996 = vmatpush1.msra.mxu0 %v796
    %3997 = vmatprep.subr.mxu0 %v805
    %3998 = vmatpush1.msra.mxu0 %v804
    %3999 = vmatprep.subr.mxu0 %v813
    %4000 = vmatpush1.msra.mxu0 %v812
    %4001 = vmatprep.subr.mxu0 %v821
    %4002 = vmatpush1.msra.mxu0 %v820
    %4003 = vmatprep.subr.mxu0 %v829
    %4004 = vmatpush1.msra.mxu0 %v828
    %4005 = vmatprep.subr.mxu0 %v837
    %4006 = vmatpush1.msra.mxu0 %v836
    %4007 = vmatprep.subr.mxu0 %v845
    %4008 = vmatpush1.msra.mxu0 %v844
    %4009 = vmatprep.subr.mxu0 %v853
    %4010 = vmatpush1.msra.mxu0 %v852
    %4011 = vmatprep.subr.mxu0 %v861
    %4012 = vmatpush1.msra.mxu0 %v860
    %4013 = vmatprep.subr.mxu0 %v869
    %4014 = vmatpush1.msra.mxu0 %v868
    %4015 = vmatprep.subr.mxu0 %v877
    %4016 = vmatpush1.msra.mxu0 %v876
    %4017 = vmatprep.subr.mxu0 %v885
    %4018 = vmatpush1.msra.mxu0 %v884
    %4019 = vmatprep.subr.mxu0 %v893
    %4020 = vmatpush1.msra.mxu0 %v892
    %4021 = vmatprep.subr.mxu0 %v901
    %4022 = vmatpush1.msra.mxu0 %v900
    %4023 = vmatprep.subr.mxu0 %v909
    %4024 = vmatpush1.msra.mxu0 %v908
    %4025 = vmatprep.subr.mxu0 %v917
    %4026 = vmatpush1.msra.mxu0 %v916
    %4027 = vmatprep.subr.mxu0 %v925
    %4028 = vmatpush1.msra.mxu0 %v924
    %4029 = vmatprep.subr.mxu0 %v933
    %4030 = vmatpush1.msra.mxu0 %v932
    %4031 = vmatprep.subr.mxu0 %v941
    %4032 = vmatpush1.msra.mxu0 %v940
    %4033 = vmatprep.subr.mxu0 %v949
    %4034 = vmatpush1.msra.mxu0 %v948
    %4035 = vmatprep.subr.mxu0 %v957
    %4036 = vmatpush1.msra.mxu0 %v956
    %4037 = vmatprep.subr.mxu0 %v965
    %4038 = vmatpush1.msra.mxu0 %v964
    %4039 = vmatprep.subr.mxu0 %v973
    %4040 = vmatpush1.msra.mxu0 %v972
    %4041 = vmatprep.subr.mxu0 %v981
    %4042 = vmatpush1.msra.mxu0 %v980
    %4043 = vmatprep.subr.mxu0 %v989
    %4044 = vmatpush1.msra.mxu0 %v988
    %4045 = vmatprep.subr.mxu0 %v997
    %4046 = vmatpush1.msra.mxu0 %v996
    %4047 = vmatprep.subr.mxu0 %v1005
    %4048 = vmatpush1.msra.mxu0 %v1004
    %4049 = vmatprep.subr.mxu0 %v1013
    %4050 = vmatpush1.msra.mxu0 %v1012
    %4051 = vmatprep.subr.mxu0 %v1021
    %4052 = vmatpush1.msra.mxu0 %v1020
    %4053 = vmatprep.subr.mxu0 %v1029
    %4054 = vmatpush1.msra.mxu0 %v1028
    %4055 = vmatprep.subr.mxu0 %v1037
    %4056 = vmatpush1.msra.mxu0 %v1036
    %4057 = vmatprep.mubr.f32.mxu0 %v3775
    %4058 = vmatmul.mubr.f32.gmra.mrb[0].mxu0 %v3723
    %v4059 = vpop.f32.mrb[0].mxu0
    %v4060 = vadd.f32 0.0, %v4059
    %v4061 = vpop.f32.mrb[0].mxu0
    %v4062 = vadd.f32 0.0, %v4061
    %4063 = vdwg.mxu0
    %s4064 = scalar_lea.vmem [#allocation2], 56
    %v4065 = vld [vmem:[%s4064] sm:$0xff]
    %v4067 = vcombine.high %v4065, %v4065
    %v4069 = vunpack.c.l.s4 1983009808
    %v4070 = vunpack.c.0.s8 %v4069
    %v4071 = vlaneseq
    %v4072 = vshrl.u32 %v4071, 7
    %v4073 = vsub.s32 %v4070, %v4072
    %v4074 = vrot.slane %v4065, %v4073
    %v4076 = vunpack.c.l.s4 1983009808
    %v4077 = vunpack.c.0.s8 %v4076
    %v4078 = vlaneseq
    %v4079 = vshrl.u32 %v4078, 7
    %v4080 = vsub.s32 %v4077, %v4079
    %v4081 = vrot.slane %v4067, %v4080
    %v4082 = vcombine.high %v4074, %v4074
    %v4083 = vcombine.high %v4081, %v4081
    %v4088 = vadd.f32 %v3847, %v4074
    %v4089 = vadd.f32 %v3849, %v4082
    %v4090 = vadd.f32 %v3918, %v4081
    %v4091 = vadd.f32 %v3920, %v4083
    %v4092 = vxor.u32 %v4088, 2147483648
    %v4093 = vmul.f32 %v4092, 1.442695
    %v4094 = vpow.pop %v4093
    %v4095 = vadd.f32 %v4094, 1.0
    %v4096 = vrcp.pop %v4095
    %v4097 = vmul.f32 1.0, %v4096
    %v4098 = vxor.u32 %v4089, 2147483648
    %v4099 = vmul.f32 %v4098, 1.442695
    %v4100 = vpow.pop %v4099
    %v4101 = vadd.f32 %v4100, 1.0
    %v4102 = vrcp.pop %v4101
    %v4103 = vmul.f32 1.0, %v4102
    %v4104 = vtanh.pop %v4090
    %v4105 = vxor.u32 %v4091, 2147483648
    %v4106 = vmul.f32 %v4105, 1.442695
    %v4107 = vpow.pop %v4106
    %v4108 = vadd.f32 %v4107, 1.0
    %v4109 = vrcp.pop %v4108
    %v4110 = vmul.f32 1.0, %v4109
    %v4111 = vmul.f32 %v4103, %v3721
    %v4112 = vmul.f32 %v4097, %v4104
    %v4113 = vadd.f32 %v4111, %v4112
    %v4114 = vtanh.pop %v4113
    %v4115 = vmul.f32 %v4110, %v4114
    %v4116 = vld [vmem:[#allocation3] sm:$0xff]
    %v4118 = vcombine.high %v4116, %v4116
    %v4120 = vunpack.c.l.s4 1983009808
    %v4121 = vunpack.c.0.s8 %v4120
    %v4122 = vlaneseq
    %v4123 = vshrl.u32 %v4122, 7
    %v4124 = vsub.s32 %v4121, %v4123
    %v4125 = vrot.slane %v4116, %v4124
    %v4127 = vunpack.c.l.s4 1983009808
    %v4128 = vunpack.c.0.s8 %v4127
    %v4129 = vlaneseq
    %v4130 = vshrl.u32 %v4129, 7
    %v4131 = vsub.s32 %v4128, %v4130
    %v4132 = vrot.slane %v4118, %v4131
    %v4133 = vcombine.high %v4125, %v4125
    %v4134 = vcombine.high %v4132, %v4132
    %v4139 = vadd.f32 %v3989, %v4125
    %v4140 = vadd.f32 %v3991, %v4133
    %v4141 = vadd.f32 %v4060, %v4132
    %v4142 = vadd.f32 %v4062, %v4134
    %v4143 = vxor.u32 %v4139, 2147483648
    %v4144 = vmul.f32 %v4143, 1.442695
    %v4145 = vpow.pop %v4144
    %v4146 = vadd.f32 %v4145, 1.0
    %v4147 = vrcp.pop %v4146
    %v4148 = vmul.f32 1.0, %v4147
    %v4149 = vxor.u32 %v4140, 2147483648
    %v4150 = vmul.f32 %v4149, 1.442695
    %v4151 = vpow.pop %v4150
    %v4152 = vadd.f32 %v4151, 1.0
    %v4153 = vrcp.pop %v4152
    %v4154 = vmul.f32 1.0, %v4153
    %v4155 = vtanh.pop %v4141
    %v4156 = vxor.u32 %v4142, 2147483648
    %v4157 = vmul.f32 %v4156, 1.442695
    %v4158 = vpow.pop %v4157
    %v4159 = vadd.f32 %v4158, 1.0
    %v4160 = vrcp.pop %v4159
    %v4161 = vmul.f32 1.0, %v4160
    %v4162 = vmul.f32 %v4154, %v3773
    %v4163 = vmul.f32 %v4148, %v4155
    %v4164 = vadd.f32 %v4162, %v4163
    %v4165 = vtanh.pop %v4164
    %v4166 = vmul.f32 %v4161, %v4165
    %s4167 = scalar_lea.vmem [#allocation4], 14
    %4168 = vst [vmem:[%s4167] sm:$0x3] %v4115
    %4169 = vst [vmem:[#allocation5] sm:$0x3] %v4166
    %v4170 = vld [vmem:[%s8] sm:$0x1]
    %v4171 = vld [vmem:[%s9] sm:$0x1]
    %v4172 = vld [vmem:[#allocation4] sm:$0x3]
    %v4173 = vld [vmem:[#allocation4 + $0x2] sm:$0x3]
    %v4174 = vld [vmem:[#allocation4 + $0x4] sm:$0x3]
    %v4175 = vld [vmem:[#allocation4 + $0x6] sm:$0x3]
    %v4176 = vld [vmem:[#allocation4 + $0x8] sm:$0x3]
    %v4177 = vld [vmem:[#allocation4 + $0xa] sm:$0x3]
    %v4178 = vld [vmem:[#allocation4 + $0xc] sm:$0x3]
    %v4179 = vld [vmem:[#allocation4 + $0xe] sm:$0x3]
    %v4181 = vlaneseq
    %v4182 = vshrl.u32 %v4181, 7
    %v4183 = vsub.s32 0, %v4182
    %v4184 = vrot.slane %v4170, %v4183
    %v4186 = vmul.f32 %v4172, %v4184
    %v4187 = vmul.f32 %v4173, %v4184
    %v4188 = vmul.f32 %v4174, %v4184
    %v4189 = vmul.f32 %v4175, %v4184
    %v4190 = vmul.f32 %v4176, %v4184
    %v4191 = vmul.f32 %v4177, %v4184
    %v4192 = vmul.f32 %v4178, %v4184
    %v4193 = vmul.f32 %v4179, %v4184
    %vm4194 = vcmask 1041408
    %v4195 = vsel %vm4194, %v4186, 0.0
    %4196 = vadd.xlane.f32.xlu0 %v4195
    %v4197 = vpop.xlane.xlu0 %4196
    %v4198 = vsel %vm4194, %v4187, 0.0
    %4199 = vadd.xlane.f32.xlu0 %v4198
    %v4200 = vpop.xlane.xlu0 %4199
    %v4201 = vsel %vm4194, %v4188, 0.0
    %4202 = vadd.xlane.f32.xlu0 %v4201
    %v4203 = vpop.xlane.xlu0 %4202
    %v4204 = vsel %vm4194, %v4189, 0.0
    %4205 = vadd.xlane.f32.xlu0 %v4204
    %v4206 = vpop.xlane.xlu0 %4205
    %v4207 = vsel %vm4194, %v4190, 0.0
    %4208 = vadd.xlane.f32.xlu0 %v4207
    %v4209 = vpop.xlane.xlu0 %4208
    %v4210 = vsel %vm4194, %v4191, 0.0
    %4211 = vadd.xlane.f32.xlu0 %v4210
    %v4212 = vpop.xlane.xlu0 %4211
    %v4213 = vsel %vm4194, %v4192, 0.0
    %4214 = vadd.xlane.f32.xlu0 %v4213
    %v4215 = vpop.xlane.xlu0 %4214
    %v4216 = vsel %vm4194, %v4193, 0.0
    %4217 = vadd.xlane.f32.xlu0 %v4216
    %v4218 = vpop.xlane.xlu0 %4217
    %v4219 = vld [vmem:[#allocation5] sm:$0x3]
    %v4220 = vld [vmem:[#allocation5 + $0x2] sm:$0x3]
    %v4221 = vld [vmem:[#allocation5 + $0x4] sm:$0x3]
    %v4222 = vld [vmem:[#allocation5 + $0x6] sm:$0x3]
    %v4223 = vld [vmem:[#allocation5 + $0x8] sm:$0x3]
    %v4224 = vld [vmem:[#allocation5 + $0xa] sm:$0x3]
    %v4225 = vld [vmem:[#allocation5 + $0xc] sm:$0x3]
    %v4226 = vld [vmem:[#allocation5 + $0xe] sm:$0x3]
    %v4228 = vlaneseq
    %v4229 = vshrl.u32 %v4228, 7
    %v4230 = vsub.s32 0, %v4229
    %v4231 = vrot.slane %v4171, %v4230
    %v4233 = vmul.f32 %v4219, %v4231
    %v4234 = vmul.f32 %v4220, %v4231
    %v4235 = vmul.f32 %v4221, %v4231
    %v4236 = vmul.f32 %v4222, %v4231
    %v4237 = vmul.f32 %v4223, %v4231
    %v4238 = vmul.f32 %v4224, %v4231
    %v4239 = vmul.f32 %v4225, %v4231
    %v4240 = vmul.f32 %v4226, %v4231
    %v4241 = vsel %vm4194, %v4233, 0.0
    %4242 = vadd.xlane.f32.xlu0 %v4241
    %v4243 = vpop.xlane.xlu0 %4242
    %v4244 = vsel %vm4194, %v4234, 0.0
    %4245 = vadd.xlane.f32.xlu0 %v4244
    %v4246 = vpop.xlane.xlu0 %4245
    %v4247 = vsel %vm4194, %v4235, 0.0
    %4248 = vadd.xlane.f32.xlu0 %v4247
    %v4249 = vpop.xlane.xlu0 %4248
    %v4250 = vsel %vm4194, %v4236, 0.0
    %4251 = vadd.xlane.f32.xlu0 %v4250
    %v4252 = vpop.xlane.xlu0 %4251
    %v4253 = vsel %vm4194, %v4237, 0.0
    %4254 = vadd.xlane.f32.xlu0 %v4253
    %v4255 = vpop.xlane.xlu0 %4254
    %v4256 = vsel %vm4194, %v4238, 0.0
    %4257 = vadd.xlane.f32.xlu0 %v4256
    %v4258 = vpop.xlane.xlu0 %4257
    %v4259 = vsel %vm4194, %v4239, 0.0
    %4260 = vadd.xlane.f32.xlu0 %v4259
    %v4261 = vpop.xlane.xlu0 %4260
    %v4262 = vsel %vm4194, %v4240, 0.0
    %4263 = vadd.xlane.f32.xlu0 %v4262
    %v4264 = vpop.xlane.xlu0 %4263
    %v4265 = vadd.f32 %v4197, %v4243
    %v4266 = vadd.f32 %v4200, %v4246
    %v4267 = vadd.f32 %v4203, %v4249
    %v4268 = vadd.f32 %v4206, %v4252
    %v4269 = vadd.f32 %v4209, %v4255
    %v4270 = vadd.f32 %v4212, %v4258
    %v4271 = vadd.f32 %v4215, %v4261
    %v4272 = vadd.f32 %v4218, %v4264
    %v4273 = vld [vmem:[#allocation6] sm:$0x1]
    %v4275 = vlaneseq
    %v4276 = vshrl.u32 %v4275, 7
    %v4277 = vsub.s32 0, %v4276
    %v4278 = vrot.slane %v4273, %v4277
    %4279 = vset.pattern.permute.xlu0 0
    %4280 = vperm.xlu0 %4279, %v4278
    %v4281 = vpop.permute.xlu0 %4280
    %v4283 = vadd.f32 %v4265, %v4281
    %v4284 = vadd.f32 %v4266, %v4281
    %v4285 = vadd.f32 %v4267, %v4281
    %v4286 = vadd.f32 %v4268, %v4281
    %v4287 = vadd.f32 %v4269, %v4281
    %v4288 = vadd.f32 %v4270, %v4281
    %v4289 = vadd.f32 %v4271, %v4281
    %v4290 = vadd.f32 %v4272, %v4281
    %v4291 = vld [vmem:[%s1] sm:$0xff]
    %vm4292 = vcmp.eq.f32.partialorder %v4291, 0.0
    %v4301 = vlaneseq
    %v4302 = vand.u32 %v4301, 127
    %v4303 = vlaneseq
    %v4304 = vshrl.u32 %v4303, 7
    %v4305 = vsub.s32 %v4302, %v4304
    %v4306 = vrot.slane %v4283, %v4305
    %v4307 = vlaneseq
    %v4308 = vshrl.u32 %v4307, 7
    %v4309 = vsub.s32 %v4302, %v4308
    %v4310 = vrot.slane %v4284, %v4309
    %v4311 = vlaneseq
    %v4312 = vshrl.u32 %v4311, 7
    %v4313 = vsub.s32 %v4302, %v4312
    %v4314 = vrot.slane %v4285, %v4313
    %v4315 = vlaneseq
    %v4316 = vshrl.u32 %v4315, 7
    %v4317 = vsub.s32 %v4302, %v4316
    %v4318 = vrot.slane %v4286, %v4317
    %v4319 = vlaneseq
    %v4320 = vshrl.u32 %v4319, 7
    %v4321 = vsub.s32 %v4302, %v4320
    %v4322 = vrot.slane %v4287, %v4321
    %v4323 = vlaneseq
    %v4324 = vshrl.u32 %v4323, 7
    %v4325 = vsub.s32 %v4302, %v4324
    %v4326 = vrot.slane %v4288, %v4325
    %v4327 = vlaneseq
    %v4328 = vshrl.u32 %v4327, 7
    %v4329 = vsub.s32 %v4302, %v4328
    %v4330 = vrot.slane %v4289, %v4329
    %v4331 = vlaneseq
    %v4332 = vshrl.u32 %v4331, 7
    %v4333 = vsub.s32 %v4302, %v4332
    %v4334 = vrot.slane %v4290, %v4333
    %vm4335 = vcmask 1041409
    %v4336 = vsel %vm4335, %v4310, %v4306
    %vm4337 = vcmask 1042434
    %v4338 = vsel %vm4337, %v4314, %v4336
    %vm4339 = vcmask 1043459
    %v4340 = vsel %vm4339, %v4318, %v4338
    %vm4341 = vcmask 1044484
    %v4342 = vsel %vm4341, %v4322, %v4340
    %vm4343 = vcmask 1045509
    %v4344 = vsel %vm4343, %v4326, %v4342
    %vm4345 = vcmask 1046534
    %v4346 = vsel %vm4345, %v4330, %v4344
    %vm4347 = vcmask 1047559
    %v4348 = vsel %vm4347, %v4334, %v4346
    %v4350 = vsel %vm4292, -1e+09, %v4348
    %v4351 = vld [vmem:[%s2] sm:$0xff]
    %v4352 = vmul.f32 %v4350, %v4351
    %vm4353 = vcmask 15360
    %v4354 = vsel %vm4353, %v4352, -inf
    %v4355 = vrot.slane %v4354, 4
    %v4356 = vmax.f32 %v4354, %v4355
    %v4357 = vrot.slane %v4356, 2
    %v4358 = vmax.f32 %v4356, %v4357
    %v4359 = vrot.slane %v4358, 1
    %v4360 = vmax.f32 %v4358, %v4359
    %v4361 = vsub.f32 %v4352, %v4360
    %v4362 = vmul.f32 %v4361, 1.442695
    %v4363 = vpow.pop %v4362
    %v4364 = vsel %vm4353, %v4363, 0.0
    %v4365 = vrot.slane %v4364, 4
    %v4366 = vadd.f32 %v4364, %v4365
    %v4367 = vrot.slane %v4366, 2
    %v4368 = vadd.f32 %v4366, %v4367
    %v4369 = vrot.slane %v4368, 1
    %v4370 = vadd.f32 %v4368, %v4369
    %v4371 = vrcp.pop %v4370
    %v4372 = vmul.f32 %v4363, %v4371
    %v4373 = vlaneseq
    %v4374 = vshrl.u32 %v4373, 7
    %v4375 = vsub.s32 0, %v4374
    %v4376 = vrot.slane %v4372, %v4375
    %4378 = vbcast.lane.b32.xlu0 %v4376, 256
    %v4379 = vpop.permute.xlu0 %4378
    %v4380 = vlaneseq
    %v4381 = vshrl.u32 %v4380, 7
    %v4382 = vsub.s32 1, %v4381
    %v4383 = vrot.slane %v4372, %v4382
    %4385 = vbcast.lane.b32.xlu0 %v4383, 256
    %v4386 = vpop.permute.xlu0 %4385
    %v4387 = vlaneseq
    %v4388 = vshrl.u32 %v4387, 7
    %v4389 = vsub.s32 2, %v4388
    %v4390 = vrot.slane %v4372, %v4389
    %4392 = vbcast.lane.b32.xlu0 %v4390, 256
    %v4393 = vpop.permute.xlu0 %4392
    %v4394 = vlaneseq
    %v4395 = vshrl.u32 %v4394, 7
    %v4396 = vsub.s32 3, %v4395
    %v4397 = vrot.slane %v4372, %v4396
    %4399 = vbcast.lane.b32.xlu0 %v4397, 256
    %v4400 = vpop.permute.xlu0 %4399
    %v4401 = vlaneseq
    %v4402 = vshrl.u32 %v4401, 7
    %v4403 = vsub.s32 4, %v4402
    %v4404 = vrot.slane %v4372, %v4403
    %4406 = vbcast.lane.b32.xlu0 %v4404, 256
    %v4407 = vpop.permute.xlu0 %4406
    %v4408 = vlaneseq
    %v4409 = vshrl.u32 %v4408, 7
    %v4410 = vsub.s32 5, %v4409
    %v4411 = vrot.slane %v4372, %v4410
    %4413 = vbcast.lane.b32.xlu0 %v4411, 256
    %v4414 = vpop.permute.xlu0 %4413
    %v4415 = vlaneseq
    %v4416 = vshrl.u32 %v4415, 7
    %v4417 = vsub.s32 6, %v4416
    %v4418 = vrot.slane %v4372, %v4417
    %4420 = vbcast.lane.b32.xlu0 %v4418, 256
    %v4421 = vpop.permute.xlu0 %4420
    %v4422 = vlaneseq
    %v4423 = vshrl.u32 %v4422, 7
    %v4424 = vsub.s32 7, %v4423
    %v4425 = vrot.slane %v4372, %v4424
    %4427 = vbcast.lane.b32.xlu0 %v4425, 256
    %v4428 = vpop.permute.xlu0 %4427
    %v4429 = vmul.f32 %v4172, %v4379
    %v4430 = vmul.f32 %v4173, %v4386
    %v4431 = vmul.f32 %v4174, %v4393
    %v4432 = vmul.f32 %v4175, %v4400
    %v4433 = vmul.f32 %v4176, %v4407
    %v4434 = vmul.f32 %v4177, %v4414
    %v4435 = vmul.f32 %v4178, %v4421
    %v4436 = vmul.f32 %v4179, %v4428
    %v4437 = vsel %vm4194, %v4429, 0.0
    %v4438 = vsel %vm4194, %v4430, 0.0
    %v4439 = vadd.f32 %v4437, %v4438
    %v4440 = vsel %vm4194, %v4431, 0.0
    %v4441 = vadd.f32 %v4439, %v4440
    %v4442 = vsel %vm4194, %v4432, 0.0
    %v4443 = vadd.f32 %v4441, %v4442
    %v4444 = vsel %vm4194, %v4433, 0.0
    %v4445 = vadd.f32 %v4443, %v4444
    %v4446 = vsel %vm4194, %v4434, 0.0
    %v4447 = vadd.f32 %v4445, %v4446
    %v4448 = vsel %vm4194, %v4435, 0.0
    %v4449 = vadd.f32 %v4447, %v4448
    %v4450 = vsel %vm4194, %v4436, 0.0
    %v4451 = vadd.f32 %v4449, %v4450
    %v4452 = vadd.f32 %v4451, 0.0
    %v4453 = vmul.f32 %v4219, %v4379
    %v4454 = vmul.f32 %v4220, %v4386
    %v4455 = vmul.f32 %v4221, %v4393
    %v4456 = vmul.f32 %v4222, %v4400
    %v4457 = vmul.f32 %v4223, %v4407
    %v4458 = vmul.f32 %v4224, %v4414
    %v4459 = vmul.f32 %v4225, %v4421
    %v4460 = vmul.f32 %v4226, %v4428
    %v4461 = vsel %vm4194, %v4453, 0.0
    %v4462 = vsel %vm4194, %v4454, 0.0
    %v4463 = vadd.f32 %v4461, %v4462
    %v4464 = vsel %vm4194, %v4455, 0.0
    %v4465 = vadd.f32 %v4463, %v4464
    %v4466 = vsel %vm4194, %v4456, 0.0
    %v4467 = vadd.f32 %v4465, %v4466
    %v4468 = vsel %vm4194, %v4457, 0.0
    %v4469 = vadd.f32 %v4467, %v4468
    %v4470 = vsel %vm4194, %v4458, 0.0
    %v4471 = vadd.f32 %v4469, %v4470
    %v4472 = vsel %vm4194, %v4459, 0.0
    %v4473 = vadd.f32 %v4471, %v4472
    %v4474 = vsel %vm4194, %v4460, 0.0
    %v4475 = vadd.f32 %v4473, %v4474
    %v4476 = vadd.f32 %v4475, 0.0
    %v4477 = vld [vmem:[#allocation13] sm:$0xff]
    %v4478 = vld [vmem:[#allocation13 + $0x8] sm:$0xff]
    %v4479 = vld [vmem:[#allocation13 + $0x10] sm:$0xff]
    %v4480 = vld [vmem:[#allocation13 + $0x18] sm:$0xff]
    %v4481 = vld [vmem:[#allocation13 + $0x20] sm:$0xff]
    %v4482 = vld [vmem:[#allocation13 + $0x28] sm:$0xff]
    %v4483 = vld [vmem:[#allocation13 + $0x30] sm:$0xff]
    %v4484 = vld [vmem:[#allocation13 + $0x38] sm:$0xff]
    %v4485 = vld [vmem:[#allocation13 + $0x40] sm:$0xff]
    %v4486 = vld [vmem:[#allocation13 + $0x48] sm:$0xff]
    %v4487 = vld [vmem:[#allocation13 + $0x50] sm:$0xff]
    %v4488 = vld [vmem:[#allocation13 + $0x58] sm:$0xff]
    %v4489 = vld [vmem:[#allocation13 + $0x60] sm:$0xff]
    %v4490 = vld [vmem:[#allocation13 + $0x68] sm:$0xff]
    %v4491 = vld [vmem:[#allocation13 + $0x70] sm:$0xff]
    %v4492 = vld [vmem:[#allocation13 + $0x78] sm:$0xff]
    %v4493 = vld [vmem:[#allocation13 + $0x80] sm:$0xff]
    %v4494 = vld [vmem:[#allocation13 + $0x88] sm:$0xff]
    %v4495 = vld [vmem:[#allocation13 + $0x90] sm:$0xff]
    %v4496 = vld [vmem:[#allocation13 + $0x98] sm:$0xff]
    %v4497 = vld [vmem:[#allocation13 + $0xa0] sm:$0xff]
    %v4498 = vld [vmem:[#allocation13 + $0xa8] sm:$0xff]
    %v4499 = vld [vmem:[#allocation13 + $0xb0] sm:$0xff]
    %v4500 = vld [vmem:[#allocation13 + $0xb8] sm:$0xff]
    %v4501 = vld [vmem:[#allocation13 + $0xc0] sm:$0xff]
    %v4502 = vld [vmem:[#allocation13 + $0xc8] sm:$0xff]
    %v4503 = vld [vmem:[#allocation13 + $0xd0] sm:$0xff]
    %v4504 = vld [vmem:[#allocation13 + $0xd8] sm:$0xff]
    %v4505 = vld [vmem:[#allocation13 + $0xe0] sm:$0xff]
    %v4506 = vld [vmem:[#allocation13 + $0xe8] sm:$0xff]
    %v4507 = vld [vmem:[#allocation13 + $0xf0] sm:$0xff]
    %v4508 = vld [vmem:[#allocation13 + $0xf8] sm:$0xff]
    %v4509 = vld [vmem:[%s12] sm:$0x1]
    %v4511 = vlaneseq
    %v4512 = vshrl.u32 %v4511, 7
    %v4513 = vsub.s32 0, %v4512
    %v4514 = vrot.slane %v4509, %v4513
    %4516 = vmatprep.subr.mxu0 0.0
    %4517 = vmatpush1.msra.mxu0 %v4477
    %4518 = vmatprep.subr.mxu0 0.0
    %4519 = vmatpush1.msra.mxu0 %v4478
    %4520 = vmatprep.subr.mxu0 0.0
    %4521 = vmatpush1.msra.mxu0 %v4479
    %4522 = vmatprep.subr.mxu0 0.0
    %4523 = vmatpush1.msra.mxu0 %v4480
    %4524 = vmatprep.subr.mxu0 0.0
    %4525 = vmatpush1.msra.mxu0 %v4481
    %4526 = vmatprep.subr.mxu0 0.0
    %4527 = vmatpush1.msra.mxu0 %v4482
    %4528 = vmatprep.subr.mxu0 0.0
    %4529 = vmatpush1.msra.mxu0 %v4483
    %4530 = vmatprep.subr.mxu0 0.0
    %4531 = vmatpush1.msra.mxu0 %v4484
    %4532 = vmatprep.subr.mxu0 0.0
    %4533 = vmatpush1.msra.mxu0 %v4485
    %4534 = vmatprep.subr.mxu0 0.0
    %4535 = vmatpush1.msra.mxu0 %v4486
    %4536 = vmatprep.subr.mxu0 0.0
    %4537 = vmatpush1.msra.mxu0 %v4487
    %4538 = vmatprep.subr.mxu0 0.0
    %4539 = vmatpush1.msra.mxu0 %v4488
    %4540 = vmatprep.subr.mxu0 0.0
    %4541 = vmatpush1.msra.mxu0 %v4489
    %4542 = vmatprep.subr.mxu0 0.0
    %4543 = vmatpush1.msra.mxu0 %v4490
    %4544 = vmatprep.subr.mxu0 0.0
    %4545 = vmatpush1.msra.mxu0 %v4491
    %4546 = vmatprep.subr.mxu0 0.0
    %4547 = vmatpush1.msra.mxu0 %v4492
    %4548 = vmatprep.subr.mxu0 0.0
    %4549 = vmatpush1.msra.mxu0 %v4493
    %4550 = vmatprep.subr.mxu0 0.0
    %4551 = vmatpush1.msra.mxu0 %v4494
    %4552 = vmatprep.subr.mxu0 0.0
    %4553 = vmatpush1.msra.mxu0 %v4495
    %4554 = vmatprep.subr.mxu0 0.0
    %4555 = vmatpush1.msra.mxu0 %v4496
    %4556 = vmatprep.subr.mxu0 0.0
    %4557 = vmatpush1.msra.mxu0 %v4497
    %4558 = vmatprep.subr.mxu0 0.0
    %4559 = vmatpush1.msra.mxu0 %v4498
    %4560 = vmatprep.subr.mxu0 0.0
    %4561 = vmatpush1.msra.mxu0 %v4499
    %4562 = vmatprep.subr.mxu0 0.0
    %4563 = vmatpush1.msra.mxu0 %v4500
    %4564 = vmatprep.subr.mxu0 0.0
    %4565 = vmatpush1.msra.mxu0 %v4501
    %4566 = vmatprep.subr.mxu0 0.0
    %4567 = vmatpush1.msra.mxu0 %v4502
    %4568 = vmatprep.subr.mxu0 0.0
    %4569 = vmatpush1.msra.mxu0 %v4503
    %4570 = vmatprep.subr.mxu0 0.0
    %4571 = vmatpush1.msra.mxu0 %v4504
    %4572 = vmatprep.subr.mxu0 0.0
    %4573 = vmatpush1.msra.mxu0 %v4505
    %4574 = vmatprep.subr.mxu0 0.0
    %4575 = vmatpush1.msra.mxu0 %v4506
    %4576 = vmatprep.subr.mxu0 0.0
    %4577 = vmatpush1.msra.mxu0 %v4507
    %4578 = vmatprep.subr.mxu0 0.0
    %4579 = vmatpush1.msra.mxu0 %v4508
    %4580 = vmatprep.mubr.f32.mxu0 %v4476
    %4581 = vmatmul.mubr.f32.gmra.mrb[0].mxu0 %v4452
    %v4582 = vpop.f32.mrb[0].mxu0
    %v4583 = vadd.f32 %v4514, %v4582
    %v4584 = vpop.f32.mrb[0].mxu0
    %4585 = vdwg.mxu0
    %4586 = vst [vmem:[#allocation15] sm:$0x3] %v4583
    // Predicated region
    $region70: #{tpu_custom_call.1} parent=1 // pred_check
      _
    $region71: #{tpu_custom_call.1} parent=1 // pred_check_branch
      %4588 = sbr.rel (0) target = $region73
    $region72: #{tpu_custom_call.1} parent=1 // pred_region
      %s4590 = ssub.s32 32, 32
      %4591 = vsyncadd [#allocation9], %s4590
      %s4593 = sshll.u32 [#allocation15], 4
      %s4594 = int_to_ptr.vmem [resolvable:$true] %s4593
      %4596 = dma.vmem_to_hbm [thread:$0]  %s4594, 32, %s13, [#allocation9]
    $region73: #{tpu_custom_call.1} parent=1 // pred_fallthru
      _
    // Predicated region
    $region74: #{tpu_custom_call.1} parent=1 // pred_check
      _
    $region75: #{tpu_custom_call.1} parent=1 // pred_check_branch
      %4598 = sbr.rel (0) target = $region77
    $region76: #{tpu_custom_call.1} parent=1 // pred_region
      %4599 = dma.done [#allocation9], 32
    $region77: #{tpu_custom_call.1} parent=1 // pred_fallthru
      _
    %4600 = vsyncpa [#allocation8], 1
    %4601 = vsyncpa [#allocation11], 1
    %4602 = vsyncpa [#allocation14], 1
    %4603 = vsyncpa [#allocation9], 1

</llo_original>
